<compile_context>
chip_gen: v5e
topology: v5e:2x2
jax: 0.10.0
libtpu: 0.0.40
codegen_flags: <defaults>
</compile_context>

<pallas_src>
import functools

import jax
import jax.numpy as jnp
from jax.experimental import pallas as pl
from jax.experimental.pallas import tpu as pltpu


def _round_up(x, m):
    return (x + m - 1) // m * m


def resblock_kernel(x_ref, w1_ref, b1_ref, w2_ref, b2_ref, o_ref,
                    pad_ref, col_ref, *, ksize, res_scale, w_left):
    """One batch element per grid step.

    x_ref  : (1, H, W, Cp)        input tile (NHWC, channels zero-padded to Cp)
    w*_ref : (K*K*Cp, Cp)         conv weights laid out (kh, kw, cin) x cout
    b*_ref : (1, Cp)              conv bias (zero-padded)
    o_ref  : (1, H, W, Cp)        output tile
    pad_ref: (H+2P, Wbuf, Cp)     persistent zero-halo padded image (scratch)
    col_ref: (H*W, K*K*Cp)        im2col buffer (scratch)
    """
    _, H, W, Cp = x_ref.shape
    K = ksize
    P = K // 2
    HW = H * W
    h_buf, w_buf, _ = pad_ref.shape

    # Zero only the halo (interior is fully overwritten by each conv below).
    zero_rows = jnp.zeros((P, w_buf, Cp), pad_ref.dtype)
    zero_cols = jnp.zeros((h_buf, P, Cp), pad_ref.dtype)
    pad_ref[0:P, :, :] = zero_rows                              # top halo rows
    pad_ref[h_buf - P:h_buf, :, :] = zero_rows                  # bottom halo rows
    pad_ref[:, w_left - P:w_left, :] = zero_cols                # left halo cols
    pad_ref[:, w_left + W:w_left + W + P, :] = zero_cols        # right halo cols

    x3 = x_ref[0]                                               # (H, W, Cp)

    def conv(inp3, w_ref, b_ref):
        # interior write: sublane start w_left is a multiple of 8 -> aligned
        pad_ref[P:P + H, w_left:w_left + W, :] = inp3.astype(pad_ref.dtype)
        # im2col: each tap lands in a lane-aligned 128-wide column block
        for kh in range(K):
            for kw in range(K):
                tap = kh * K + kw
                c0 = w_left - P + kw
                patch = pad_ref[kh:kh + H, c0:c0 + W, :]        # (H, W, Cp)
                col_ref[:, tap * Cp:(tap + 1) * Cp] = patch.reshape(HW, Cp)
        # one fat matmul: contraction depth K*K*Cp keeps the MXU full
        acc = jnp.dot(col_ref[...], w_ref[...],
                      preferred_element_type=jnp.float32)       # (HW, Cp) f32
        return acc + b_ref[...].astype(jnp.float32)

    h = jnp.maximum(conv(x3, w1_ref, b1_ref), 0.0)              # conv1 + ReLU
    r = conv(h.reshape(H, W, Cp), w2_ref, b2_ref)               # conv2
    y = x3.astype(jnp.float32) + res_scale * r.reshape(H, W, Cp)
    o_ref[0] = y.astype(o_ref.dtype)                            # residual add


def resblock_pallas(x_nchw, w1, b1, w2, b2, res_scale=1.0):
    """x_nchw: (N, C, H, W); w*: (Cout, Cin, K, K); b*: (Cout,) (PyTorch)."""
    N, C, H, W = x_nchw.shape
    K = w1.shape[-1]
    # symmetric padding below only matches 'SAME' / the PyTorch module for odd K
    assert K % 2 == 1, "ResBlock kernel assumes an odd kernel size"
    P = K // 2

    # lane-dense channel padding: Cp is a multiple of 128
    Cp = _round_up(max(C, 128), 128)

    # NCHW -> NHWC, zero-pad channels
    x = jnp.transpose(x_nchw, (0, 2, 3, 1))
    x = jnp.pad(x, ((0, 0), (0, 0), (0, 0), (0, Cp - C)))

    def pack_w(w):
        # (Cout, Cin, K, K) -> (K, K, Cin, Cout) -> zero-pad -> (K*K*Cp, Cp)
        wt = jnp.transpose(w, (2, 3, 1, 0))
        wt = jnp.pad(wt, ((0, 0), (0, 0), (0, Cp - C), (0, Cp - C)))
        return wt.reshape(K * K * Cp, Cp)

    def pack_b(b):
        return jnp.pad(b, (0, Cp - C)).reshape(1, Cp)

    w1m, w2m = pack_w(w1), pack_w(w2)
    b1m, b2m = pack_b(b1), pack_b(b2)

    # padded-image scratch geometry: interior starts at a sublane multiple of 8
    w_left = _round_up(max(P, 1), 8)
    w_buf = _round_up(w_left + W + P, 8)
    h_buf = H + 2 * P

    dtype = x.dtype
    esize = jnp.dtype(dtype).itemsize

    kernel = functools.partial(resblock_kernel, ksize=K,
                               res_scale=float(res_scale), w_left=w_left)

    # rough VMEM budget: scratch + weights + double-buffered in/out blocks
    vmem_bytes = (
        h_buf * w_buf * Cp * esize            # pad scratch
        + (H * W) * (K * K * Cp) * esize      # im2col scratch
        + 2 * (K * K * Cp) * Cp * esize       # two weight matrices
        + 4 * H * W * Cp * esize              # in/out blocks, double buffered
    )
    vmem_limit = int(min(4 * vmem_bytes + (16 << 20), 48 << 20))

    out = pl.pallas_call(
        kernel,
        out_shape=jax.ShapeDtypeStruct((N, H, W, Cp), dtype),
        grid=(N,),
        in_specs=[
            pl.BlockSpec((1, H, W, Cp), lambda n: (n, 0, 0, 0)),
            pl.BlockSpec((K * K * Cp, Cp), lambda n: (0, 0)),
            pl.BlockSpec((1, Cp), lambda n: (0, 0)),
            pl.BlockSpec((K * K * Cp, Cp), lambda n: (0, 0)),
            pl.BlockSpec((1, Cp), lambda n: (0, 0)),
        ],
        out_specs=pl.BlockSpec((1, H, W, Cp), lambda n: (n, 0, 0, 0)),
        scratch_shapes=[
            pltpu.VMEM((h_buf, w_buf, Cp), dtype),       # padded image
            pltpu.VMEM((H * W, K * K * Cp), dtype),      # im2col
        ],
        compiler_params=pltpu.CompilerParams(
            dimension_semantics=("parallel",),
            vmem_limit_bytes=vmem_limit),
    )(x, w1m, b1m, w2m, b2m)

    # drop channel padding, back to NCHW
    return jnp.transpose(out[..., :C], (0, 3, 1, 2))


def resblock_ref(x_nchw, w1, b1, w2, b2, res_scale=1.0):
    """Pure-JAX reference mirroring the PyTorch module (NCHW, OIHW)."""
    def conv(x, w, b):
        y = jax.lax.conv_general_dilated(
            x, w, window_strides=(1, 1), padding="SAME",
            dimension_numbers=("NCHW", "OIHW", "NCHW"))
        return y + b[None, :, None, None]
    h = jax.nn.relu(conv(x_nchw, w1, b1))
    r = conv(h, w2, b2)
    return r * res_scale + x_nchw


if __name__ == "__main__":
    # Small shapes implied by the module: n_feat channels, 2D spatial input.
    N, C, H, W, K = 2, 4, 16, 16, 3
    res_scale = 1.0

    key = jax.random.PRNGKey(0)
    kx, kw1, kb1, kw2, kb2 = jax.random.split(key, 5)
    x = jax.random.normal(kx, (N, C, H, W), jnp.float32)
    w1 = jax.random.normal(kw1, (C, C, K, K), jnp.float32) * 0.1
    b1 = jax.random.normal(kb1, (C,), jnp.float32) * 0.1
    w2 = jax.random.normal(kw2, (C, C, K, K), jnp.float32) * 0.1
    b2 = jax.random.normal(kb2, (C,), jnp.float32) * 0.1

    out = resblock_pallas(x, w1, b1, w2, b2, res_scale)
    out = jax.block_until_ready(out)

    ref = resblock_ref(x, w1, b1, w2, b2, res_scale)
    assert out.shape == (N, C, H, W) and out.dtype == jnp.float32
    assert jnp.allclose(out, ref, rtol=5e-2, atol=5e-2), (
        float(jnp.max(jnp.abs(out - ref))))

    print("KERNEL_OK")
</pallas_src>

<mosaic_0001>
module attributes {stable_mosaic.version = 11 : i64} {
  func.func @resblock_kernel(%arg0: i32, %arg1: memref<1x16x16x128xf32, #tpu.memory_space<vmem>>, %arg2: memref<1152x128xf32, #tpu.memory_space<vmem>>, %arg3: memref<1x128xf32, #tpu.memory_space<vmem>>, %arg4: memref<1152x128xf32, #tpu.memory_space<vmem>>, %arg5: memref<1x128xf32, #tpu.memory_space<vmem>>, %arg6: memref<1x16x16x128xf32, #tpu.memory_space<vmem>>, %arg7: memref<18x32x128xf32, #tpu.memory_space<vmem>>, %arg8: memref<256x1152xf32, #tpu.memory_space<vmem>>) attributes {dimension_semantics = [#tpu.dimension_semantics<parallel>], iteration_bounds = array<i64: 2>, scalar_prefetch = 0 : i64, scratch_operands = 2 : i64, tpu.core_type = #tpu.core_type<tc>, window_params = [{transform_indices = @transform_0, window_bounds = array<i64: 1, 16, 16, 128>}, {pipeline_mode = #tpu.pipeline_mode<synchronous>, transform_indices = @transform_1, window_bounds = array<i64: 1152, 128>}, {pipeline_mode = #tpu.pipeline_mode<synchronous>, transform_indices = @transform_2, window_bounds = array<i64: 1, 128>}, {pipeline_mode = #tpu.pipeline_mode<synchronous>, transform_indices = @transform_3, window_bounds = array<i64: 1152, 128>}, {pipeline_mode = #tpu.pipeline_mode<synchronous>, transform_indices = @transform_4, window_bounds = array<i64: 1, 128>}, {transform_indices = @transform_5, window_bounds = array<i64: 1, 16, 16, 128>}]} {
    %cst = arith.constant 0.000000e+00 : f32
    %0 = vector.broadcast %cst : f32 to vector<1x32x128xf32>
    %cst_0 = arith.constant 0.000000e+00 : f32
    %1 = vector.broadcast %cst_0 : f32 to vector<18x1x128xf32>
    %c0 = arith.constant 0 : index
    %c0_1 = arith.constant 0 : index
    %c0_2 = arith.constant 0 : index
    %2 = vector.load %arg7[%c0, %c0_1, %c0_2] : memref<18x32x128xf32, #tpu.memory_space<vmem>>, vector<1x32x128xf32>
    tpu.vector_store %arg7[%c0, %c0_1, %c0_2], %0 {strides = array<i32>} : memref<18x32x128xf32, #tpu.memory_space<vmem>>, vector<1x32x128xf32>,
    %c17 = arith.constant 17 : index
    %c0_3 = arith.constant 0 : index
    %c0_4 = arith.constant 0 : index
    %3 = vector.load %arg7[%c17, %c0_3, %c0_4] : memref<18x32x128xf32, #tpu.memory_space<vmem>>, vector<1x32x128xf32>
    tpu.vector_store %arg7[%c17, %c0_3, %c0_4], %0 {strides = array<i32>} : memref<18x32x128xf32, #tpu.memory_space<vmem>>, vector<1x32x128xf32>,
    %c0_5 = arith.constant 0 : index
    %c7 = arith.constant 7 : index
    %c0_6 = arith.constant 0 : index
    %4 = vector.load %arg7[%c0_5, %c7, %c0_6] : memref<18x32x128xf32, #tpu.memory_space<vmem>>, vector<18x1x128xf32>
    tpu.vector_store %arg7[%c0_5, %c7, %c0_6], %1 {strides = array<i32>} : memref<18x32x128xf32, #tpu.memory_space<vmem>>, vector<18x1x128xf32>,
    %c0_7 = arith.constant 0 : index
    %c24 = arith.constant 24 : index
    %c0_8 = arith.constant 0 : index
    %5 = vector.load %arg7[%c0_7, %c24, %c0_8] : memref<18x32x128xf32, #tpu.memory_space<vmem>>, vector<18x1x128xf32>
    tpu.vector_store %arg7[%c0_7, %c24, %c0_8], %1 {strides = array<i32>} : memref<18x32x128xf32, #tpu.memory_space<vmem>>, vector<18x1x128xf32>,
    %c0_9 = arith.constant 0 : index
    %c0_10 = arith.constant 0 : index
    %c0_11 = arith.constant 0 : index
    %c0_12 = arith.constant 0 : index
    %6 = vector.load %arg1[%c0_9, %c0_10, %c0_11, %c0_12] : memref<1x16x16x128xf32, #tpu.memory_space<vmem>>, vector<1x16x16x128xf32>
    %7 = vector.shape_cast %6 : vector<1x16x16x128xf32> to vector<16x16x128xf32>
    %c1 = arith.constant 1 : index
    %c8 = arith.constant 8 : index
    %c0_13 = arith.constant 0 : index
    %8 = vector.load %arg7[%c1, %c8, %c0_13] : memref<18x32x128xf32, #tpu.memory_space<vmem>>, vector<16x16x128xf32>
    tpu.vector_store %arg7[%c1, %c8, %c0_13], %7 {strides = array<i32>} : memref<18x32x128xf32, #tpu.memory_space<vmem>>, vector<16x16x128xf32>,
    %c0_14 = arith.constant 0 : index
    %c7_15 = arith.constant 7 : index
    %c0_16 = arith.constant 0 : index
    %9 = vector.load %arg7[%c0_14, %c7_15, %c0_16] : memref<18x32x128xf32, #tpu.memory_space<vmem>>, vector<16x16x128xf32>
    %10 = vector.shape_cast %9 : vector<16x16x128xf32> to vector<256x128xf32>
    %c0_17 = arith.constant 0 : index
    %c0_18 = arith.constant 0 : index
    %11 = vector.load %arg8[%c0_17, %c0_18] : memref<256x1152xf32, #tpu.memory_space<vmem>>, vector<256x128xf32>
    tpu.vector_store %arg8[%c0_17, %c0_18], %10 {strides = array<i32>} : memref<256x1152xf32, #tpu.memory_space<vmem>>, vector<256x128xf32>,
    %c0_19 = arith.constant 0 : index
    %c8_20 = arith.constant 8 : index
    %c0_21 = arith.constant 0 : index
    %12 = vector.load %arg7[%c0_19, %c8_20, %c0_21] : memref<18x32x128xf32, #tpu.memory_space<vmem>>, vector<16x16x128xf32>
    %13 = vector.shape_cast %12 : vector<16x16x128xf32> to vector<256x128xf32>
    %c0_22 = arith.constant 0 : index
    %c128 = arith.constant 128 : index
    %14 = vector.load %arg8[%c0_22, %c128] : memref<256x1152xf32, #tpu.memory_space<vmem>>, vector<256x128xf32>
    tpu.vector_store %arg8[%c0_22, %c128], %13 {strides = array<i32>} : memref<256x1152xf32, #tpu.memory_space<vmem>>, vector<256x128xf32>,
    %c0_23 = arith.constant 0 : index
    %c9 = arith.constant 9 : index
    %c0_24 = arith.constant 0 : index
    %15 = vector.load %arg7[%c0_23, %c9, %c0_24] : memref<18x32x128xf32, #tpu.memory_space<vmem>>, vector<16x16x128xf32>
    %16 = vector.shape_cast %15 : vector<16x16x128xf32> to vector<256x128xf32>
    %c0_25 = arith.constant 0 : index
    %c256 = arith.constant 256 : index
    %17 = vector.load %arg8[%c0_25, %c256] : memref<256x1152xf32, #tpu.memory_space<vmem>>, vector<256x128xf32>
    tpu.vector_store %arg8[%c0_25, %c256], %16 {strides = array<i32>} : memref<256x1152xf32, #tpu.memory_space<vmem>>, vector<256x128xf32>,
    %c1_26 = arith.constant 1 : index
    %c7_27 = arith.constant 7 : index
    %c0_28 = arith.constant 0 : index
    %18 = vector.load %arg7[%c1_26, %c7_27, %c0_28] : memref<18x32x128xf32, #tpu.memory_space<vmem>>, vector<16x16x128xf32>
    %19 = vector.shape_cast %18 : vector<16x16x128xf32> to vector<256x128xf32>
    %c0_29 = arith.constant 0 : index
    %c384 = arith.constant 384 : index
    %20 = vector.load %arg8[%c0_29, %c384] : memref<256x1152xf32, #tpu.memory_space<vmem>>, vector<256x128xf32>
    tpu.vector_store %arg8[%c0_29, %c384], %19 {strides = array<i32>} : memref<256x1152xf32, #tpu.memory_space<vmem>>, vector<256x128xf32>,
    %c1_30 = arith.constant 1 : index
    %c8_31 = arith.constant 8 : index
    %c0_32 = arith.constant 0 : index
    %21 = vector.load %arg7[%c1_30, %c8_31, %c0_32] : memref<18x32x128xf32, #tpu.memory_space<vmem>>, vector<16x16x128xf32>
    %22 = vector.shape_cast %21 : vector<16x16x128xf32> to vector<256x128xf32>
    %c0_33 = arith.constant 0 : index
    %c512 = arith.constant 512 : index
    %23 = vector.load %arg8[%c0_33, %c512] : memref<256x1152xf32, #tpu.memory_space<vmem>>, vector<256x128xf32>
    tpu.vector_store %arg8[%c0_33, %c512], %22 {strides = array<i32>} : memref<256x1152xf32, #tpu.memory_space<vmem>>, vector<256x128xf32>,
    %c1_34 = arith.constant 1 : index
    %c9_35 = arith.constant 9 : index
    %c0_36 = arith.constant 0 : index
    %24 = vector.load %arg7[%c1_34, %c9_35, %c0_36] : memref<18x32x128xf32, #tpu.memory_space<vmem>>, vector<16x16x128xf32>
    %25 = vector.shape_cast %24 : vector<16x16x128xf32> to vector<256x128xf32>
    %c0_37 = arith.constant 0 : index
    %c640 = arith.constant 640 : index
    %26 = vector.load %arg8[%c0_37, %c640] : memref<256x1152xf32, #tpu.memory_space<vmem>>, vector<256x128xf32>
    tpu.vector_store %arg8[%c0_37, %c640], %25 {strides = array<i32>} : memref<256x1152xf32, #tpu.memory_space<vmem>>, vector<256x128xf32>,
    %c2 = arith.constant 2 : index
    %c7_38 = arith.constant 7 : index
    %c0_39 = arith.constant 0 : index
    %27 = vector.load %arg7[%c2, %c7_38, %c0_39] : memref<18x32x128xf32, #tpu.memory_space<vmem>>, vector<16x16x128xf32>
    %28 = vector.shape_cast %27 : vector<16x16x128xf32> to vector<256x128xf32>
    %c0_40 = arith.constant 0 : index
    %c768 = arith.constant 768 : index
    %29 = vector.load %arg8[%c0_40, %c768] : memref<256x1152xf32, #tpu.memory_space<vmem>>, vector<256x128xf32>
    tpu.vector_store %arg8[%c0_40, %c768], %28 {strides = array<i32>} : memref<256x1152xf32, #tpu.memory_space<vmem>>, vector<256x128xf32>,
    %c2_41 = arith.constant 2 : index
    %c8_42 = arith.constant 8 : index
    %c0_43 = arith.constant 0 : index
    %30 = vector.load %arg7[%c2_41, %c8_42, %c0_43] : memref<18x32x128xf32, #tpu.memory_space<vmem>>, vector<16x16x128xf32>
    %31 = vector.shape_cast %30 : vector<16x16x128xf32> to vector<256x128xf32>
    %c0_44 = arith.constant 0 : index
    %c896 = arith.constant 896 : index
    %32 = vector.load %arg8[%c0_44, %c896] : memref<256x1152xf32, #tpu.memory_space<vmem>>, vector<256x128xf32>
    tpu.vector_store %arg8[%c0_44, %c896], %31 {strides = array<i32>} : memref<256x1152xf32, #tpu.memory_space<vmem>>, vector<256x128xf32>,
    %c2_45 = arith.constant 2 : index
    %c9_46 = arith.constant 9 : index
    %c0_47 = arith.constant 0 : index
    %33 = vector.load %arg7[%c2_45, %c9_46, %c0_47] : memref<18x32x128xf32, #tpu.memory_space<vmem>>, vector<16x16x128xf32>
    %34 = vector.shape_cast %33 : vector<16x16x128xf32> to vector<256x128xf32>
    %c0_48 = arith.constant 0 : index
    %c1024 = arith.constant 1024 : index
    %35 = vector.load %arg8[%c0_48, %c1024] : memref<256x1152xf32, #tpu.memory_space<vmem>>, vector<256x128xf32>
    tpu.vector_store %arg8[%c0_48, %c1024], %34 {strides = array<i32>} : memref<256x1152xf32, #tpu.memory_space<vmem>>, vector<256x128xf32>,
    %c0_49 = arith.constant 0 : index
    %c0_50 = arith.constant 0 : index
    %36 = vector.load %arg8[%c0_49, %c0_50] : memref<256x1152xf32, #tpu.memory_space<vmem>>, vector<256x1152xf32>
    %c0_51 = arith.constant 0 : index
    %c0_52 = arith.constant 0 : index
    %37 = vector.load %arg2[%c0_51, %c0_52] : memref<1152x128xf32, #tpu.memory_space<vmem>>, vector<1152x128xf32>
    %cst_53 = arith.constant dense<0.000000e+00> : vector<256x128xf32>
    %38 = tpu.matmul %36, %37, %cst_53 {dimension_numbers = #tpu.dot_dimension_numbers<[1], [0], [0], [1], [0, 0, 1, 1], [], []>} : vector<256x1152xf32>, vector<1152x128xf32>, vector<256x128xf32> -> vector<256x128xf32>
    %c0_54 = arith.constant 0 : index
    %c0_55 = arith.constant 0 : index
    %39 = vector.load %arg3[%c0_54, %c0_55] : memref<1x128xf32, #tpu.memory_space<vmem>>, vector<1x128xf32>
    %40 = vector.broadcast %39 : vector<1x128xf32> to vector<256x128xf32>
    %41 = arith.addf %38, %40 : vector<256x128xf32>
    %cst_56 = arith.constant 0.000000e+00 : f32
    %42 = vector.broadcast %cst_56 : f32 to vector<256x128xf32>
    %43 = arith.maximumf %41, %42 : vector<256x128xf32>
    %44 = vector.shape_cast %43 : vector<256x128xf32> to vector<16x16x128xf32>
    %c1_57 = arith.constant 1 : index
    %c8_58 = arith.constant 8 : index
    %c0_59 = arith.constant 0 : index
    %45 = vector.load %arg7[%c1_57, %c8_58, %c0_59] : memref<18x32x128xf32, #tpu.memory_space<vmem>>, vector<16x16x128xf32>
    tpu.vector_store %arg7[%c1_57, %c8_58, %c0_59], %44 {strides = array<i32>} : memref<18x32x128xf32, #tpu.memory_space<vmem>>, vector<16x16x128xf32>,
    %c0_60 = arith.constant 0 : index
    %c7_61 = arith.constant 7 : index
    %c0_62 = arith.constant 0 : index
    %46 = vector.load %arg7[%c0_60, %c7_61, %c0_62] : memref<18x32x128xf32, #tpu.memory_space<vmem>>, vector<16x16x128xf32>
    %47 = vector.shape_cast %46 : vector<16x16x128xf32> to vector<256x128xf32>
    %c0_63 = arith.constant 0 : index
    %c0_64 = arith.constant 0 : index
    %48 = vector.load %arg8[%c0_63, %c0_64] : memref<256x1152xf32, #tpu.memory_space<vmem>>, vector<256x128xf32>
    tpu.vector_store %arg8[%c0_63, %c0_64], %47 {strides = array<i32>} : memref<256x1152xf32, #tpu.memory_space<vmem>>, vector<256x128xf32>,
    %c0_65 = arith.constant 0 : index
    %c8_66 = arith.constant 8 : index
    %c0_67 = arith.constant 0 : index
    %49 = vector.load %arg7[%c0_65, %c8_66, %c0_67] : memref<18x32x128xf32, #tpu.memory_space<vmem>>, vector<16x16x128xf32>
    %50 = vector.shape_cast %49 : vector<16x16x128xf32> to vector<256x128xf32>
    %c0_68 = arith.constant 0 : index
    %c128_69 = arith.constant 128 : index
    %51 = vector.load %arg8[%c0_68, %c128_69] : memref<256x1152xf32, #tpu.memory_space<vmem>>, vector<256x128xf32>
    tpu.vector_store %arg8[%c0_68, %c128_69], %50 {strides = array<i32>} : memref<256x1152xf32, #tpu.memory_space<vmem>>, vector<256x128xf32>,
    %c0_70 = arith.constant 0 : index
    %c9_71 = arith.constant 9 : index
    %c0_72 = arith.constant 0 : index
    %52 = vector.load %arg7[%c0_70, %c9_71, %c0_72] : memref<18x32x128xf32, #tpu.memory_space<vmem>>, vector<16x16x128xf32>
    %53 = vector.shape_cast %52 : vector<16x16x128xf32> to vector<256x128xf32>
    %c0_73 = arith.constant 0 : index
    %c256_74 = arith.constant 256 : index
    %54 = vector.load %arg8[%c0_73, %c256_74] : memref<256x1152xf32, #tpu.memory_space<vmem>>, vector<256x128xf32>
    tpu.vector_store %arg8[%c0_73, %c256_74], %53 {strides = array<i32>} : memref<256x1152xf32, #tpu.memory_space<vmem>>, vector<256x128xf32>,
    %c1_75 = arith.constant 1 : index
    %c7_76 = arith.constant 7 : index
    %c0_77 = arith.constant 0 : index
    %55 = vector.load %arg7[%c1_75, %c7_76, %c0_77] : memref<18x32x128xf32, #tpu.memory_space<vmem>>, vector<16x16x128xf32>
    %56 = vector.shape_cast %55 : vector<16x16x128xf32> to vector<256x128xf32>
    %c0_78 = arith.constant 0 : index
    %c384_79 = arith.constant 384 : index
    %57 = vector.load %arg8[%c0_78, %c384_79] : memref<256x1152xf32, #tpu.memory_space<vmem>>, vector<256x128xf32>
    tpu.vector_store %arg8[%c0_78, %c384_79], %56 {strides = array<i32>} : memref<256x1152xf32, #tpu.memory_space<vmem>>, vector<256x128xf32>,
    %c1_80 = arith.constant 1 : index
    %c8_81 = arith.constant 8 : index
    %c0_82 = arith.constant 0 : index
    %58 = vector.load %arg7[%c1_80, %c8_81, %c0_82] : memref<18x32x128xf32, #tpu.memory_space<vmem>>, vector<16x16x128xf32>
    %59 = vector.shape_cast %58 : vector<16x16x128xf32> to vector<256x128xf32>
    %c0_83 = arith.constant 0 : index
    %c512_84 = arith.constant 512 : index
    %60 = vector.load %arg8[%c0_83, %c512_84] : memref<256x1152xf32, #tpu.memory_space<vmem>>, vector<256x128xf32>
    tpu.vector_store %arg8[%c0_83, %c512_84], %59 {strides = array<i32>} : memref<256x1152xf32, #tpu.memory_space<vmem>>, vector<256x128xf32>,
    %c1_85 = arith.constant 1 : index
    %c9_86 = arith.constant 9 : index
    %c0_87 = arith.constant 0 : index
    %61 = vector.load %arg7[%c1_85, %c9_86, %c0_87] : memref<18x32x128xf32, #tpu.memory_space<vmem>>, vector<16x16x128xf32>
    %62 = vector.shape_cast %61 : vector<16x16x128xf32> to vector<256x128xf32>
    %c0_88 = arith.constant 0 : index
    %c640_89 = arith.constant 640 : index
    %63 = vector.load %arg8[%c0_88, %c640_89] : memref<256x1152xf32, #tpu.memory_space<vmem>>, vector<256x128xf32>
    tpu.vector_store %arg8[%c0_88, %c640_89], %62 {strides = array<i32>} : memref<256x1152xf32, #tpu.memory_space<vmem>>, vector<256x128xf32>,
    %c2_90 = arith.constant 2 : index
    %c7_91 = arith.constant 7 : index
    %c0_92 = arith.constant 0 : index
    %64 = vector.load %arg7[%c2_90, %c7_91, %c0_92] : memref<18x32x128xf32, #tpu.memory_space<vmem>>, vector<16x16x128xf32>
    %65 = vector.shape_cast %64 : vector<16x16x128xf32> to vector<256x128xf32>
    %c0_93 = arith.constant 0 : index
    %c768_94 = arith.constant 768 : index
    %66 = vector.load %arg8[%c0_93, %c768_94] : memref<256x1152xf32, #tpu.memory_space<vmem>>, vector<256x128xf32>
    tpu.vector_store %arg8[%c0_93, %c768_94], %65 {strides = array<i32>} : memref<256x1152xf32, #tpu.memory_space<vmem>>, vector<256x128xf32>,
    %c2_95 = arith.constant 2 : index
    %c8_96 = arith.constant 8 : index
    %c0_97 = arith.constant 0 : index
    %67 = vector.load %arg7[%c2_95, %c8_96, %c0_97] : memref<18x32x128xf32, #tpu.memory_space<vmem>>, vector<16x16x128xf32>
    %68 = vector.shape_cast %67 : vector<16x16x128xf32> to vector<256x128xf32>
    %c0_98 = arith.constant 0 : index
    %c896_99 = arith.constant 896 : index
    %69 = vector.load %arg8[%c0_98, %c896_99] : memref<256x1152xf32, #tpu.memory_space<vmem>>, vector<256x128xf32>
    tpu.vector_store %arg8[%c0_98, %c896_99], %68 {strides = array<i32>} : memref<256x1152xf32, #tpu.memory_space<vmem>>, vector<256x128xf32>,
    %c2_100 = arith.constant 2 : index
    %c9_101 = arith.constant 9 : index
    %c0_102 = arith.constant 0 : index
    %70 = vector.load %arg7[%c2_100, %c9_101, %c0_102] : memref<18x32x128xf32, #tpu.memory_space<vmem>>, vector<16x16x128xf32>
    %71 = vector.shape_cast %70 : vector<16x16x128xf32> to vector<256x128xf32>
    %c0_103 = arith.constant 0 : index
    %c1024_104 = arith.constant 1024 : index
    %72 = vector.load %arg8[%c0_103, %c1024_104] : memref<256x1152xf32, #tpu.memory_space<vmem>>, vector<256x128xf32>
    tpu.vector_store %arg8[%c0_103, %c1024_104], %71 {strides = array<i32>} : memref<256x1152xf32, #tpu.memory_space<vmem>>, vector<256x128xf32>,
    %c0_105 = arith.constant 0 : index
    %c0_106 = arith.constant 0 : index
    %73 = vector.load %arg8[%c0_105, %c0_106] : memref<256x1152xf32, #tpu.memory_space<vmem>>, vector<256x1152xf32>
    %c0_107 = arith.constant 0 : index
    %c0_108 = arith.constant 0 : index
    %74 = vector.load %arg4[%c0_107, %c0_108] : memref<1152x128xf32, #tpu.memory_space<vmem>>, vector<1152x128xf32>
    %cst_109 = arith.constant dense<0.000000e+00> : vector<256x128xf32>
    %75 = tpu.matmul %73, %74, %cst_109 {dimension_numbers = #tpu.dot_dimension_numbers<[1], [0], [0], [1], [0, 0, 1, 1], [], []>} : vector<256x1152xf32>, vector<1152x128xf32>, vector<256x128xf32> -> vector<256x128xf32>
    %c0_110 = arith.constant 0 : index
    %c0_111 = arith.constant 0 : index
    %76 = vector.load %arg5[%c0_110, %c0_111] : memref<1x128xf32, #tpu.memory_space<vmem>>, vector<1x128xf32>
    %77 = vector.broadcast %76 : vector<1x128xf32> to vector<256x128xf32>
    %78 = arith.addf %75, %77 : vector<256x128xf32>
    %79 = vector.shape_cast %78 : vector<256x128xf32> to vector<16x16x128xf32>
    %cst_112 = arith.constant 1.000000e+00 : f32
    %80 = vector.broadcast %cst_112 : f32 to vector<16x16x128xf32>
    %81 = arith.mulf %80, %79 : vector<16x16x128xf32>
    %82 = arith.addf %7, %81 : vector<16x16x128xf32>
    %c0_113 = arith.constant 0 : index
    %c0_114 = arith.constant 0 : index
    %c0_115 = arith.constant 0 : index
    %c0_116 = arith.constant 0 : index
    %83 = vector.load %arg6[%c0_113, %c0_114, %c0_115, %c0_116] : memref<1x16x16x128xf32, #tpu.memory_space<vmem>>, vector<1x16x16x128xf32>
    %84 = vector.shape_cast %83 : vector<1x16x16x128xf32> to vector<16x16x128xf32>
    %85 = vector.shape_cast %82 : vector<16x16x128xf32> to vector<1x16x16x128xf32>
    tpu.vector_store %arg6[%c0_113, %c0_114, %c0_115, %c0_116], %85 {strides = array<i32>} : memref<1x16x16x128xf32, #tpu.memory_space<vmem>>, vector<1x16x16x128xf32>,
    return
  }
  func.func @transform_0(%arg0: i32) -> (i32, i32, i32, i32) {
    %c0_i32 = arith.constant 0 : i32
    %c0_i32_0 = arith.constant 0 : i32
    %c0_i32_1 = arith.constant 0 : i32
    %c0_i32_2 = arith.constant 0 : i32
    return %arg0, %c0_i32, %c0_i32_0, %c0_i32_1 : i32, i32, i32, i32
  }
  func.func @transform_1(%arg0: i32) -> (i32, i32) {
    %c0_i32 = arith.constant 0 : i32
    %c0_i32_0 = arith.constant 0 : i32
    %c0_i32_1 = arith.constant 0 : i32
    return %c0_i32, %c0_i32_0 : i32, i32
  }
  func.func @transform_2(%arg0: i32) -> (i32, i32) {
    %c0_i32 = arith.constant 0 : i32
    %c0_i32_0 = arith.constant 0 : i32
    %c0_i32_1 = arith.constant 0 : i32
    return %c0_i32, %c0_i32_0 : i32, i32
  }
  func.func @transform_3(%arg0: i32) -> (i32, i32) {
    %c0_i32 = arith.constant 0 : i32
    %c0_i32_0 = arith.constant 0 : i32
    %c0_i32_1 = arith.constant 0 : i32
    return %c0_i32, %c0_i32_0 : i32, i32
  }
  func.func @transform_4(%arg0: i32) -> (i32, i32) {
    %c0_i32 = arith.constant 0 : i32
    %c0_i32_0 = arith.constant 0 : i32
    %c0_i32_1 = arith.constant 0 : i32
    return %c0_i32, %c0_i32_0 : i32, i32
  }
  func.func @transform_5(%arg0: i32) -> (i32, i32, i32, i32) {
    %c0_i32 = arith.constant 0 : i32
    %c0_i32_0 = arith.constant 0 : i32
    %c0_i32_1 = arith.constant 0 : i32
    %c0_i32_2 = arith.constant 0 : i32
    return %arg0, %c0_i32, %c0_i32_0, %c0_i32_1 : i32, i32, i32, i32
  }
}

</mosaic_0001>

<llo_original>
// kernel: tpu_custom_call.1
$region0: #{tpu_custom_call.1}
  #allocation0 [shape = 'u32[]', space=smem, size = 0x4, offset = 0x4, fixed_abs, tag = 'smem constant byte address 0x4 - core index']
  #allocation1 [shape = 'u32[72,128]{1,0:T(1,128)}', space=vmem, size = 0x9000, scoped, tag = 'internal scratch']
  #allocation2 [shape = 'f32[18,32,128]{2,1,0:T(8,128)}', space=vmem, size = 0x48000, scoped, tag = 'scratch operand']
  #allocation3 [shape = 'f32[256,1152]{1,0:T(8,128)}', space=vmem, size = 0x120000, scoped, tag = 'scratch operand']
  %s0 = inlined_call_operand.hbm [shape: f32[2,16,16,128], index: 0, kind: input, shape index: {}]
  %s1 = inlined_call_operand.hbm [shape: f32[1152,128], index: 1, kind: input, shape index: {}]
  %s2 = inlined_call_operand.vmem [shape: f32[1,128], index: 2, kind: input, shape index: {}]
  %s3 = inlined_call_operand.hbm [shape: f32[1152,128], index: 3, kind: input, shape index: {}]
  %s4 = inlined_call_operand.vmem [shape: f32[1,128], index: 4, kind: input, shape index: {}]
  %s5 = inlined_call_operand.hbm [shape: f32[2,16,16,128], index: 5, kind: output, shape index: {}]
  %s6 = sld [smem:[#allocation0]]
  $region65: #{tpu_custom_call.1} parent=0
    _
  %s8 = ssub.s32 1, %s6
  %s9 = scalar_select 0, %s8, %s6
  $region1: #{tpu_custom_call.1} parent=0
    #allocation4 [shape = 'u8[262144]{0}', space=vmem, size = 0x40000, scoped, tag = 'input window, operand 0']
    #allocation5 [shape = 's32[2]{0}', space=sflag, size = 0x8, scoped, tag = 'scoped memory for tpu_custom_call.1']
    #allocation6 [shape = 's32[2]{0}', space=sflag, size = 0x8, scoped, tag = 'scoped memory for tpu_custom_call.1']
    #allocation7 [shape = 'u8[589824]{0}', space=vmem, size = 0x90000, scoped, tag = 'input window, operand 1, single buffered']
    #allocation8 [shape = 's32[1]{0}', space=sflag, size = 0x4, scoped, tag = 'scoped memory for tpu_custom_call.1']
    #allocation9 [shape = 'u8[589824]{0}', space=vmem, size = 0x90000, scoped, tag = 'input window, operand 3, single buffered']
    #allocation10 [shape = 'u8[262144]{0}', space=vmem, size = 0x40000, scoped, tag = 'output window, operand 0']
    %10 = vsyncpa [#allocation5], 0
    %s11 = scalar_lea.sflag [#allocation5], 1
    %12 = vsyncpa %s11, 0
    %13 = vsyncpa [#allocation8], 0
    %14 = vsyncpa [#allocation6], 0
    %s15 = scalar_lea.sflag [#allocation6], 1
    %16 = vsyncpa %s15, 0
    loop: start=0, step=1, limit=4
    $region2: #{tpu_custom_call.1} parent=1 // loop_pre_header
      _
    $region3: #{tpu_custom_call.1} parent=1 // loop_header
      %s18 = sphi 0, %s22
      %p19 = scmp.ge.s32.totalorder %s18, 4
      %s28 = sphi 0, %s30
      %s31 = sphi 0, %s28
      %s32 = sphi 0, %s31
      %s48 = sphi 0, %s32
      %s52 = sphi 0, %s52
      %s54 = sphi 0, %s52
      %s55 = sphi 0, %s54
      %s69 = sphi 0, %s55
      %s73 = sphi 0, %s73
      %s75 = sphi 0, %s73
      %s76 = sphi 0, %s75
      %s90 = sphi 0, %s76
      %s94 = sphi 0, %s94
      %s96 = sphi 0, %s94
      %s97 = sphi 0, %s96
      %s111 = sphi 0, %s97
      %s115 = sphi 0, %s115
      %s117 = sphi 0, %s115
      %s118 = sphi 0, %s117
      %s132 = sphi 0, %s118
      %s138 = sphi 0, %s140
      %s141 = sphi 0, %s138
      %s142 = sphi 0, %s141
      %s158 = sphi 0, %s142
    $region4: #{tpu_custom_call.1} parent=1 // loop_header_branch
      %21 = sbr.rel (%p19) target = $region8
    $region5: #{tpu_custom_call.1} parent=1 // loop_body
      %s23 = ssub.s32 %s18, 1
      %s24 = ssub.s32 %s18, 2
      %s25 = sadd.s32 %s18, 1
      %s26 = ssub.s32 %s18, %s25
      %p27 = scmp.eq.s32.totalorder %s26, 0
      %s29 = sadd.s32 %s28, 1
      %s30 = scalar_select %p27, %s28, %s29
      %p33 = pneg %p27
      %p34 = scmp.eq.s32.totalorder %s18, 1
      %p35 = por %p33, %p34
      %p36 = scmp.ne.s32.totalorder %s28, %s31
      %p37 = scmp.eq.s32.totalorder %s18, 0
      %p38 = por %p36, %p37
      %p39 = scmp.ne.s32.totalorder %s28, %s31
      %p40 = scmp.eq.s32.totalorder %s23, 1
      %p41 = por %p39, %p40
      %p42 = scmp.ne.s32.totalorder %s31, %s32
      %p43 = scmp.eq.s32.totalorder %s23, 0
      %p44 = por %p42, %p43
      %p45 = scmp.ne.s32.totalorder %s31, %s32
      %p46 = scmp.eq.s32.totalorder %s24, 1
      %p47 = por %p45, %p46
      %p49 = scmp.ne.s32.totalorder %s32, %s48
      %p50 = scmp.eq.s32.totalorder %s24, 0
      %p51 = por %p49, %p50
      %s53 = sadd.s32 %s52, 1
      %p56 = scmp.eq.s32.totalorder %s18, 1
      %p57 = scmp.ne.s32.totalorder %s52, %s54
      %p58 = scmp.eq.s32.totalorder %s18, 0
      %p59 = por %p57, %p58
      %p60 = scmp.ne.s32.totalorder %s52, %s54
      %p61 = scmp.eq.s32.totalorder %s23, 1
      %p62 = por %p60, %p61
      %p63 = scmp.ne.s32.totalorder %s54, %s55
      %p64 = scmp.eq.s32.totalorder %s23, 0
      %p65 = por %p63, %p64
      %p66 = scmp.ne.s32.totalorder %s54, %s55
      %p67 = scmp.eq.s32.totalorder %s24, 1
      %p68 = por %p66, %p67
      %p70 = scmp.ne.s32.totalorder %s55, %s69
      %p71 = scmp.eq.s32.totalorder %s24, 0
      %p72 = por %p70, %p71
      %s74 = sadd.s32 %s73, 1
      %p77 = scmp.eq.s32.totalorder %s18, 1
      %p78 = scmp.ne.s32.totalorder %s73, %s75
      %p79 = scmp.eq.s32.totalorder %s18, 0
      %p80 = por %p78, %p79
      %p81 = scmp.ne.s32.totalorder %s73, %s75
      %p82 = scmp.eq.s32.totalorder %s23, 1
      %p83 = por %p81, %p82
      %p84 = scmp.ne.s32.totalorder %s75, %s76
      %p85 = scmp.eq.s32.totalorder %s23, 0
      %p86 = por %p84, %p85
      %p87 = scmp.ne.s32.totalorder %s75, %s76
      %p88 = scmp.eq.s32.totalorder %s24, 1
      %p89 = por %p87, %p88
      %p91 = scmp.ne.s32.totalorder %s76, %s90
      %p92 = scmp.eq.s32.totalorder %s24, 0
      %p93 = por %p91, %p92
      %s95 = sadd.s32 %s94, 1
      %p98 = scmp.eq.s32.totalorder %s18, 1
      %p99 = scmp.ne.s32.totalorder %s94, %s96
      %p100 = scmp.eq.s32.totalorder %s18, 0
      %p101 = por %p99, %p100
      %p102 = scmp.ne.s32.totalorder %s94, %s96
      %p103 = scmp.eq.s32.totalorder %s23, 1
      %p104 = por %p102, %p103
      %p105 = scmp.ne.s32.totalorder %s96, %s97
      %p106 = scmp.eq.s32.totalorder %s23, 0
      %p107 = por %p105, %p106
      %p108 = scmp.ne.s32.totalorder %s96, %s97
      %p109 = scmp.eq.s32.totalorder %s24, 1
      %p110 = por %p108, %p109
      %p112 = scmp.ne.s32.totalorder %s97, %s111
      %p113 = scmp.eq.s32.totalorder %s24, 0
      %p114 = por %p112, %p113
      %s116 = sadd.s32 %s115, 1
      %p119 = scmp.eq.s32.totalorder %s18, 1
      %p120 = scmp.ne.s32.totalorder %s115, %s117
      %p121 = scmp.eq.s32.totalorder %s18, 0
      %p122 = por %p120, %p121
      %p123 = scmp.ne.s32.totalorder %s115, %s117
      %p124 = scmp.eq.s32.totalorder %s23, 1
      %p125 = por %p123, %p124
      %p126 = scmp.ne.s32.totalorder %s117, %s118
      %p127 = scmp.eq.s32.totalorder %s23, 0
      %p128 = por %p126, %p127
      %p129 = scmp.ne.s32.totalorder %s117, %s118
      %p130 = scmp.eq.s32.totalorder %s24, 1
      %p131 = por %p129, %p130
      %p133 = scmp.ne.s32.totalorder %s118, %s132
      %p134 = scmp.eq.s32.totalorder %s24, 0
      %p135 = por %p133, %p134
      %s136 = ssub.s32 %s18, %s25
      %p137 = scmp.eq.s32.totalorder %s136, 0
      %s139 = sadd.s32 %s138, 1
      %s140 = scalar_select %p137, %s138, %s139
      %p143 = pneg %p137
      %p144 = scmp.eq.s32.totalorder %s18, 1
      %p145 = por %p143, %p144
      %p146 = scmp.ne.s32.totalorder %s138, %s141
      %p147 = scmp.eq.s32.totalorder %s18, 0
      %p148 = por %p146, %p147
      %p149 = scmp.ne.s32.totalorder %s138, %s141
      %p150 = scmp.eq.s32.totalorder %s23, 1
      %p151 = por %p149, %p150
      %p152 = scmp.ne.s32.totalorder %s141, %s142
      %p153 = scmp.eq.s32.totalorder %s23, 0
      %p154 = por %p152, %p153
      %p155 = scmp.ne.s32.totalorder %s141, %s142
      %p156 = scmp.eq.s32.totalorder %s24, 1
      %p157 = por %p155, %p156
      %p159 = scmp.ne.s32.totalorder %s142, %s158
      %p160 = scmp.eq.s32.totalorder %s24, 0
      %p161 = por %p159, %p160
      %p162 = scmp.le.s32.totalorder 1, %s18
      %p163 = scmp.lt.s32.totalorder %s18, 3
      %p164 = pnand %p162, %p163
      %p165 = pneg %p164
      // Predicated region
      $region9: #{tpu_custom_call.1} parent=5 // pred_check
        _
      $region10: #{tpu_custom_call.1} parent=5 // pred_check_branch
        %167 = sbr.rel (%p164) target = $region12
      $region11: #{tpu_custom_call.1} parent=5 // pred_region
        %s168 = ssub.s32 %s18, 1
        // Predicated region
        $region13: #{tpu_custom_call.1} parent=11 // pred_check
          %p169 = pneg %p65
        $region14: #{tpu_custom_call.1} parent=11 // pred_check_branch
          %171 = sbr.rel (%p169) target = $region16
        $region15: #{tpu_custom_call.1} parent=11 // pred_region
          %173 = vsyncadd [#allocation8], 0
          %s174 = sshll.u32 %s1, 4
          %s175 = int_to_ptr.hbm [resolvable:$true] %s174
          %s176 = sshll.u32 [#allocation7], 4
          %s177 = int_to_ptr.vmem [resolvable:$true] %s176
          %182 = dma.hbm_to_vmem [thread:$0]  %s175, 18432, %s177, [#allocation8], 128, 128, 8
        $region16: #{tpu_custom_call.1} parent=11 // pred_fallthru
          _
        // Predicated region
        $region17: #{tpu_custom_call.1} parent=11 // pred_check
          %p183 = pneg %p86
        $region18: #{tpu_custom_call.1} parent=11 // pred_check_branch
          %185 = sbr.rel (%p183) target = $region20
        $region19: #{tpu_custom_call.1} parent=11 // pred_region
          _
        $region20: #{tpu_custom_call.1} parent=11 // pred_fallthru
          _
        // Predicated region
        $region21: #{tpu_custom_call.1} parent=11 // pred_check
          %p186 = pneg %p107
        $region22: #{tpu_custom_call.1} parent=11 // pred_check_branch
          %188 = sbr.rel (%p186) target = $region24
        $region23: #{tpu_custom_call.1} parent=11 // pred_region
          %190 = vsyncadd [#allocation8], 0
          %s191 = sshll.u32 %s3, 4
          %s192 = int_to_ptr.hbm [resolvable:$true] %s191
          %s193 = sshll.u32 [#allocation9], 4
          %s194 = int_to_ptr.vmem [resolvable:$true] %s193
          %199 = dma.hbm_to_vmem [thread:$0]  %s192, 18432, %s194, [#allocation8], 128, 128, 8
        $region24: #{tpu_custom_call.1} parent=11 // pred_fallthru
          _
        // Predicated region
        $region25: #{tpu_custom_call.1} parent=11 // pred_check
          %p200 = pneg %p128
        $region26: #{tpu_custom_call.1} parent=11 // pred_check_branch
          %202 = sbr.rel (%p200) target = $region28
        $region27: #{tpu_custom_call.1} parent=11 // pred_region
          _
        $region28: #{tpu_custom_call.1} parent=11 // pred_fallthru
          _
      $region12: #{tpu_custom_call.1} parent=5 // pred_fallthru
        _
      %p203 = scmp.lt.s32.totalorder %s18, 2
      // Predicated region
      $region29: #{tpu_custom_call.1} parent=5 // pred_check
        %p204 = pneg %p203
      $region30: #{tpu_custom_call.1} parent=5 // pred_check_branch
        %206 = sbr.rel (%p204) target = $region32
      $region31: #{tpu_custom_call.1} parent=5 // pred_region
        // Predicated region
        $region33: #{tpu_custom_call.1} parent=31 // pred_check
          %p207 = pneg %p38
        $region34: #{tpu_custom_call.1} parent=31 // pred_check_branch
          %209 = sbr.rel (%p207) target = $region36
        $region35: #{tpu_custom_call.1} parent=31 // pred_region
          %s210 = sand.u32 %s28, 1
          %s211 = scalar_lea.sflag [#allocation5], %s210
          %s212 = sand.u32 %s28, 1
          %s213 = smul.addr %s212, 256
          %s214 = scalar_lea.vmem [#allocation4], %s213
          %216 = vsyncadd %s211, 0
          %s217 = smul.addr %s18, 32
          %s218 = smul.addr %s217, 8
          %s219 = scalar_lea.hbm %s0, %s218
          %s220 = sshll.u32 %s219, 4
          %s221 = int_to_ptr.hbm [resolvable:$true] %s220
          %s222 = sshll.u32 %s214, 4
          %s223 = int_to_ptr.vmem [resolvable:$true] %s222
          %228 = dma.hbm_to_vmem [thread:$0]  %s221, 4096, %s223, %s211, 128, 128, 8
        $region36: #{tpu_custom_call.1} parent=31 // pred_fallthru
          _
      $region32: #{tpu_custom_call.1} parent=5 // pred_fallthru
        _
      %p229 = scmp.le.s32.totalorder 1, %s18
      %p230 = scmp.lt.s32.totalorder %s18, 3
      %p231 = pnand %p229, %p230
      %p232 = pneg %p231
      // Predicated region
      $region37: #{tpu_custom_call.1} parent=5 // pred_check
        _
      $region38: #{tpu_custom_call.1} parent=5 // pred_check_branch
        %234 = sbr.rel (%p231) target = $region40
      $region39: #{tpu_custom_call.1} parent=5 // pred_region
        %s235 = ssub.s32 %s18, 1
        %s236 = sand.u32 %s31, 1
        %s237 = scalar_lea.sflag [#allocation5], %s236
        %s238 = sand.u32 %s31, 1
        %s239 = smul.addr %s238, 256
        %s240 = scalar_lea.vmem [#allocation4], %s239
        // Predicated region
        $region41: #{tpu_custom_call.1} parent=39 // pred_check
          %p241 = pneg %p44
        $region42: #{tpu_custom_call.1} parent=39 // pred_check_branch
          %243 = sbr.rel (%p241) target = $region44
        $region43: #{tpu_custom_call.1} parent=39 // pred_region
          %245 = dma.done %s237, 4096
        $region44: #{tpu_custom_call.1} parent=39 // pred_fallthru
          _
        // Predicated region
        $region45: #{tpu_custom_call.1} parent=39 // pred_check
          %p246 = pneg %p65
        $region46: #{tpu_custom_call.1} parent=39 // pred_check_branch
          %248 = sbr.rel (%p246) target = $region48
        $region47: #{tpu_custom_call.1} parent=39 // pred_region
          %250 = dma.done [#allocation8], 18432
        $region48: #{tpu_custom_call.1} parent=39 // pred_fallthru
          _
        // Predicated region
        $region49: #{tpu_custom_call.1} parent=39 // pred_check
          %p251 = pneg %p107
        $region50: #{tpu_custom_call.1} parent=39 // pred_check_branch
          %253 = sbr.rel (%p251) target = $region52
        $region51: #{tpu_custom_call.1} parent=39 // pred_region
          %255 = dma.done [#allocation8], 18432
        $region52: #{tpu_custom_call.1} parent=39 // pred_fallthru
          _
        %s256 = sand.u32 %s31, 1
        %s257 = scalar_lea.sflag [#allocation5], %s256
        %s258 = sand.u32 %s31, 1
        %s259 = smul.addr %s258, 256
        %s260 = scalar_lea.vmem [#allocation4], %s259
        %p261 = pneg %p44
        %p262 = pneg %p41
        %p263 = pneg %p65
        %p264 = pneg %p62
        %p265 = pneg %p86
        %p266 = pneg %p83
        %p267 = pneg %p107
        %p268 = pneg %p104
        %p269 = pneg %p128
        %p270 = pneg %p125
        %p271 = pneg %p154
        %p272 = pneg %p151
        %s273 = sand.u32 %s141, 1
        %s274 = scalar_lea.sflag [#allocation6], %s273
        %s275 = sand.u32 %s141, 1
        %s276 = smul.addr %s275, 256
        %s277 = scalar_lea.vmem [#allocation10], %s276
        %278 = vst [vmem:[#allocation2] sm:$0xff] 0.0
        %279 = vst [vmem:[#allocation2 + $0x8] sm:$0xff] 0.0
        %280 = vst [vmem:[#allocation2 + $0x10] sm:$0xff] 0.0
        %281 = vst [vmem:[#allocation2 + $0x18] sm:$0xff] 0.0
        %s282 = scalar_lea.vmem [#allocation2], 544
        %283 = vst [vmem:[%s282] sm:$0xff] 0.0
        %284 = vst [vmem:[%s282 + $0x8] sm:$0xff] 0.0
        %285 = vst [vmem:[%s282 + $0x10] sm:$0xff] 0.0
        %286 = vst [vmem:[%s282 + $0x18] sm:$0xff] 0.0
        %287 = vst [vmem:[#allocation2 + $0x7] sm:$0x1] 0.0
        %288 = vst [vmem:[#allocation2 + $0x27] sm:$0x1] 0.0
        %289 = vst [vmem:[#allocation2 + $0x47] sm:$0x1] 0.0
        %290 = vst [vmem:[#allocation2 + $0x67] sm:$0x1] 0.0
        %291 = vst [vmem:[#allocation2 + $0x87] sm:$0x1] 0.0
        %292 = vst [vmem:[#allocation2 + $0xa7] sm:$0x1] 0.0
        %293 = vst [vmem:[#allocation2 + $0xc7] sm:$0x1] 0.0
        %294 = vst [vmem:[#allocation2 + $0xe7] sm:$0x1] 0.0
        %295 = vst [vmem:[#allocation2 + $0x107] sm:$0x1] 0.0
        %296 = vst [vmem:[#allocation2 + $0x127] sm:$0x1] 0.0
        %297 = vst [vmem:[#allocation2 + $0x147] sm:$0x1] 0.0
        %298 = vst [vmem:[#allocation2 + $0x167] sm:$0x1] 0.0
        %299 = vst [vmem:[#allocation2 + $0x187] sm:$0x1] 0.0
        %300 = vst [vmem:[#allocation2 + $0x1a7] sm:$0x1] 0.0
        %301 = vst [vmem:[#allocation2 + $0x1c7] sm:$0x1] 0.0
        %302 = vst [vmem:[#allocation2 + $0x1e7] sm:$0x1] 0.0
        %303 = vst [vmem:[#allocation2 + $0x207] sm:$0x1] 0.0
        %304 = vst [vmem:[#allocation2 + $0x227] sm:$0x1] 0.0
        %305 = vst [vmem:[#allocation2 + $0x18] sm:$0x1] 0.0
        %306 = vst [vmem:[#allocation2 + $0x38] sm:$0x1] 0.0
        %307 = vst [vmem:[#allocation2 + $0x58] sm:$0x1] 0.0
        %308 = vst [vmem:[#allocation2 + $0x78] sm:$0x1] 0.0
        %309 = vst [vmem:[#allocation2 + $0x98] sm:$0x1] 0.0
        %310 = vst [vmem:[#allocation2 + $0xb8] sm:$0x1] 0.0
        %311 = vst [vmem:[#allocation2 + $0xd8] sm:$0x1] 0.0
        %312 = vst [vmem:[#allocation2 + $0xf8] sm:$0x1] 0.0
        %313 = vst [vmem:[#allocation2 + $0x118] sm:$0x1] 0.0
        %314 = vst [vmem:[#allocation2 + $0x138] sm:$0x1] 0.0
        %315 = vst [vmem:[#allocation2 + $0x158] sm:$0x1] 0.0
        %316 = vst [vmem:[#allocation2 + $0x178] sm:$0x1] 0.0
        %317 = vst [vmem:[#allocation2 + $0x198] sm:$0x1] 0.0
        %318 = vst [vmem:[#allocation2 + $0x1b8] sm:$0x1] 0.0
        %319 = vst [vmem:[#allocation2 + $0x1d8] sm:$0x1] 0.0
        %320 = vst [vmem:[#allocation2 + $0x1f8] sm:$0x1] 0.0
        %321 = vst [vmem:[#allocation2 + $0x218] sm:$0x1] 0.0
        %322 = vst [vmem:[#allocation2 + $0x238] sm:$0x1] 0.0
        %v323 = vld [vmem:[%s240] sm:$0xff]
        %v324 = vld [vmem:[%s240 + $0x8] sm:$0xff]
        %v325 = vld [vmem:[%s240 + $0x10] sm:$0xff]
        %v326 = vld [vmem:[%s240 + $0x18] sm:$0xff]
        %v327 = vld [vmem:[%s240 + $0x20] sm:$0xff]
        %v328 = vld [vmem:[%s240 + $0x28] sm:$0xff]
        %v329 = vld [vmem:[%s240 + $0x30] sm:$0xff]
        %v330 = vld [vmem:[%s240 + $0x38] sm:$0xff]
        %v331 = vld [vmem:[%s240 + $0x40] sm:$0xff]
        %v332 = vld [vmem:[%s240 + $0x48] sm:$0xff]
        %v333 = vld [vmem:[%s240 + $0x50] sm:$0xff]
        %v334 = vld [vmem:[%s240 + $0x58] sm:$0xff]
        %v335 = vld [vmem:[%s240 + $0x60] sm:$0xff]
        %v336 = vld [vmem:[%s240 + $0x68] sm:$0xff]
        %v337 = vld [vmem:[%s240 + $0x70] sm:$0xff]
        %v338 = vld [vmem:[%s240 + $0x78] sm:$0xff]
        %v339 = vld [vmem:[%s240 + $0x80] sm:$0xff]
        %v340 = vld [vmem:[%s240 + $0x88] sm:$0xff]
        %v341 = vld [vmem:[%s240 + $0x90] sm:$0xff]
        %v342 = vld [vmem:[%s240 + $0x98] sm:$0xff]
        %v343 = vld [vmem:[%s240 + $0xa0] sm:$0xff]
        %v344 = vld [vmem:[%s240 + $0xa8] sm:$0xff]
        %v345 = vld [vmem:[%s240 + $0xb0] sm:$0xff]
        %v346 = vld [vmem:[%s240 + $0xb8] sm:$0xff]
        %v347 = vld [vmem:[%s240 + $0xc0] sm:$0xff]
        %v348 = vld [vmem:[%s240 + $0xc8] sm:$0xff]
        %v349 = vld [vmem:[%s240 + $0xd0] sm:$0xff]
        %v350 = vld [vmem:[%s240 + $0xd8] sm:$0xff]
        %v351 = vld [vmem:[%s240 + $0xe0] sm:$0xff]
        %v352 = vld [vmem:[%s240 + $0xe8] sm:$0xff]
        %v353 = vld [vmem:[%s240 + $0xf0] sm:$0xff]
        %v354 = vld [vmem:[%s240 + $0xf8] sm:$0xff]
        %s355 = scalar_lea.vmem [#allocation2], 32
        %356 = vst [vmem:[%s355 + $0x8] sm:$0xff] %v323
        %357 = vst [vmem:[%s355 + $0x10] sm:$0xff] %v324
        %358 = vst [vmem:[%s355 + $0x28] sm:$0xff] %v325
        %359 = vst [vmem:[%s355 + $0x30] sm:$0xff] %v326
        %360 = vst [vmem:[%s355 + $0x48] sm:$0xff] %v327
        %361 = vst [vmem:[%s355 + $0x50] sm:$0xff] %v328
        %362 = vst [vmem:[%s355 + $0x68] sm:$0xff] %v329
        %363 = vst [vmem:[%s355 + $0x70] sm:$0xff] %v330
        %364 = vst [vmem:[%s355 + $0x88] sm:$0xff] %v331
        %365 = vst [vmem:[%s355 + $0x90] sm:$0xff] %v332
        %366 = vst [vmem:[%s355 + $0xa8] sm:$0xff] %v333
        %367 = vst [vmem:[%s355 + $0xb0] sm:$0xff] %v334
        %368 = vst [vmem:[%s355 + $0xc8] sm:$0xff] %v335
        %369 = vst [vmem:[%s355 + $0xd0] sm:$0xff] %v336
        %370 = vst [vmem:[%s355 + $0xe8] sm:$0xff] %v337
        %371 = vst [vmem:[%s355 + $0xf0] sm:$0xff] %v338
        %372 = vst [vmem:[%s355 + $0x108] sm:$0xff] %v339
        %373 = vst [vmem:[%s355 + $0x110] sm:$0xff] %v340
        %374 = vst [vmem:[%s355 + $0x128] sm:$0xff] %v341
        %375 = vst [vmem:[%s355 + $0x130] sm:$0xff] %v342
        %376 = vst [vmem:[%s355 + $0x148] sm:$0xff] %v343
        %377 = vst [vmem:[%s355 + $0x150] sm:$0xff] %v344
        %378 = vst [vmem:[%s355 + $0x168] sm:$0xff] %v345
        %379 = vst [vmem:[%s355 + $0x170] sm:$0xff] %v346
        %380 = vst [vmem:[%s355 + $0x188] sm:$0xff] %v347
        %381 = vst [vmem:[%s355 + $0x190] sm:$0xff] %v348
        %382 = vst [vmem:[%s355 + $0x1a8] sm:$0xff] %v349
        %383 = vst [vmem:[%s355 + $0x1b0] sm:$0xff] %v350
        %384 = vst [vmem:[%s355 + $0x1c8] sm:$0xff] %v351
        %385 = vst [vmem:[%s355 + $0x1d0] sm:$0xff] %v352
        %386 = vst [vmem:[%s355 + $0x1e8] sm:$0xff] %v353
        %387 = vst [vmem:[%s355 + $0x1f0] sm:$0xff] %v354
        %v388 = vld [vmem:[#allocation2 + $0x7] sm:$0xff]
        %v389 = vld [vmem:[#allocation2 + $0xf] sm:$0xff]
        %v390 = vld [vmem:[#allocation2 + $0x27] sm:$0xff]
        %v391 = vld [vmem:[#allocation2 + $0x2f] sm:$0xff]
        %v392 = vld [vmem:[#allocation2 + $0x47] sm:$0xff]
        %v393 = vld [vmem:[#allocation2 + $0x4f] sm:$0xff]
        %v394 = vld [vmem:[#allocation2 + $0x67] sm:$0xff]
        %v395 = vld [vmem:[#allocation2 + $0x6f] sm:$0xff]
        %v396 = vld [vmem:[#allocation2 + $0x87] sm:$0xff]
        %v397 = vld [vmem:[#allocation2 + $0x8f] sm:$0xff]
        %v398 = vld [vmem:[#allocation2 + $0xa7] sm:$0xff]
        %v399 = vld [vmem:[#allocation2 + $0xaf] sm:$0xff]
        %v400 = vld [vmem:[#allocation2 + $0xc7] sm:$0xff]
        %v401 = vld [vmem:[#allocation2 + $0xcf] sm:$0xff]
        %v402 = vld [vmem:[#allocation2 + $0xe7] sm:$0xff]
        %v403 = vld [vmem:[#allocation2 + $0xef] sm:$0xff]
        %v404 = vld [vmem:[#allocation2 + $0x107] sm:$0xff]
        %v405 = vld [vmem:[#allocation2 + $0x10f] sm:$0xff]
        %v406 = vld [vmem:[#allocation2 + $0x127] sm:$0xff]
        %v407 = vld [vmem:[#allocation2 + $0x12f] sm:$0xff]
        %v408 = vld [vmem:[#allocation2 + $0x147] sm:$0xff]
        %v409 = vld [vmem:[#allocation2 + $0x14f] sm:$0xff]
        %v410 = vld [vmem:[#allocation2 + $0x167] sm:$0xff]
        %v411 = vld [vmem:[#allocation2 + $0x16f] sm:$0xff]
        %v412 = vld [vmem:[#allocation2 + $0x187] sm:$0xff]
        %v413 = vld [vmem:[#allocation2 + $0x18f] sm:$0xff]
        %v414 = vld [vmem:[#allocation2 + $0x1a7] sm:$0xff]
        %v415 = vld [vmem:[#allocation2 + $0x1af] sm:$0xff]
        %v416 = vld [vmem:[#allocation2 + $0x1c7] sm:$0xff]
        %v417 = vld [vmem:[#allocation2 + $0x1cf] sm:$0xff]
        %v418 = vld [vmem:[#allocation2 + $0x1e7] sm:$0xff]
        %v419 = vld [vmem:[#allocation2 + $0x1ef] sm:$0xff]
        %420 = vst [vmem:[#allocation3] sm:$0xff] %v388
        %421 = vst [vmem:[#allocation3 + $0x48] sm:$0xff] %v389
        %422 = vst [vmem:[#allocation3 + $0x90] sm:$0xff] %v390
        %423 = vst [vmem:[#allocation3 + $0xd8] sm:$0xff] %v391
        %424 = vst [vmem:[#allocation3 + $0x120] sm:$0xff] %v392
        %425 = vst [vmem:[#allocation3 + $0x168] sm:$0xff] %v393
        %426 = vst [vmem:[#allocation3 + $0x1b0] sm:$0xff] %v394
        %427 = vst [vmem:[#allocation3 + $0x1f8] sm:$0xff] %v395
        %428 = vst [vmem:[#allocation3 + $0x240] sm:$0xff] %v396
        %429 = vst [vmem:[#allocation3 + $0x288] sm:$0xff] %v397
        %430 = vst [vmem:[#allocation3 + $0x2d0] sm:$0xff] %v398
        %431 = vst [vmem:[#allocation3 + $0x318] sm:$0xff] %v399
        %432 = vst [vmem:[#allocation3 + $0x360] sm:$0xff] %v400
        %433 = vst [vmem:[#allocation3 + $0x3a8] sm:$0xff] %v401
        %434 = vst [vmem:[#allocation3 + $0x3f0] sm:$0xff] %v402
        %435 = vst [vmem:[#allocation3 + $0x438] sm:$0xff] %v403
        %436 = vst [vmem:[#allocation3 + $0x480] sm:$0xff] %v404
        %437 = vst [vmem:[#allocation3 + $0x4c8] sm:$0xff] %v405
        %438 = vst [vmem:[#allocation3 + $0x510] sm:$0xff] %v406
        %439 = vst [vmem:[#allocation3 + $0x558] sm:$0xff] %v407
        %440 = vst [vmem:[#allocation3 + $0x5a0] sm:$0xff] %v408
        %441 = vst [vmem:[#allocation3 + $0x5e8] sm:$0xff] %v409
        %442 = vst [vmem:[#allocation3 + $0x630] sm:$0xff] %v410
        %443 = vst [vmem:[#allocation3 + $0x678] sm:$0xff] %v411
        %444 = vst [vmem:[#allocation3 + $0x6c0] sm:$0xff] %v412
        %445 = vst [vmem:[#allocation3 + $0x708] sm:$0xff] %v413
        %446 = vst [vmem:[#allocation3 + $0x750] sm:$0xff] %v414
        %447 = vst [vmem:[#allocation3 + $0x798] sm:$0xff] %v415
        %448 = vst [vmem:[#allocation3 + $0x7e0] sm:$0xff] %v416
        %449 = vst [vmem:[#allocation3 + $0x828] sm:$0xff] %v417
        %450 = vst [vmem:[#allocation3 + $0x870] sm:$0xff] %v418
        %451 = vst [vmem:[#allocation3 + $0x8b8] sm:$0xff] %v419
        %v452 = vld [vmem:[#allocation2 + $0x8] sm:$0xff]
        %v453 = vld [vmem:[#allocation2 + $0x10] sm:$0xff]
        %v454 = vld [vmem:[#allocation2 + $0x28] sm:$0xff]
        %v455 = vld [vmem:[#allocation2 + $0x30] sm:$0xff]
        %v456 = vld [vmem:[#allocation2 + $0x48] sm:$0xff]
        %v457 = vld [vmem:[#allocation2 + $0x50] sm:$0xff]
        %v458 = vld [vmem:[#allocation2 + $0x68] sm:$0xff]
        %v459 = vld [vmem:[#allocation2 + $0x70] sm:$0xff]
        %v460 = vld [vmem:[#allocation2 + $0x88] sm:$0xff]
        %v461 = vld [vmem:[#allocation2 + $0x90] sm:$0xff]
        %v462 = vld [vmem:[#allocation2 + $0xa8] sm:$0xff]
        %v463 = vld [vmem:[#allocation2 + $0xb0] sm:$0xff]
        %v464 = vld [vmem:[#allocation2 + $0xc8] sm:$0xff]
        %v465 = vld [vmem:[#allocation2 + $0xd0] sm:$0xff]
        %v466 = vld [vmem:[#allocation2 + $0xe8] sm:$0xff]
        %v467 = vld [vmem:[#allocation2 + $0xf0] sm:$0xff]
        %v468 = vld [vmem:[#allocation2 + $0x108] sm:$0xff]
        %v469 = vld [vmem:[#allocation2 + $0x110] sm:$0xff]
        %v470 = vld [vmem:[#allocation2 + $0x128] sm:$0xff]
        %v471 = vld [vmem:[#allocation2 + $0x130] sm:$0xff]
        %v472 = vld [vmem:[#allocation2 + $0x148] sm:$0xff]
        %v473 = vld [vmem:[#allocation2 + $0x150] sm:$0xff]
        %v474 = vld [vmem:[#allocation2 + $0x168] sm:$0xff]
        %v475 = vld [vmem:[#allocation2 + $0x170] sm:$0xff]
        %v476 = vld [vmem:[#allocation2 + $0x188] sm:$0xff]
        %v477 = vld [vmem:[#allocation2 + $0x190] sm:$0xff]
        %v478 = vld [vmem:[#allocation2 + $0x1a8] sm:$0xff]
        %v479 = vld [vmem:[#allocation2 + $0x1b0] sm:$0xff]
        %v480 = vld [vmem:[#allocation2 + $0x1c8] sm:$0xff]
        %v481 = vld [vmem:[#allocation2 + $0x1d0] sm:$0xff]
        %v482 = vld [vmem:[#allocation2 + $0x1e8] sm:$0xff]
        %v483 = vld [vmem:[#allocation2 + $0x1f0] sm:$0xff]
        %484 = vst [vmem:[#allocation3 + $0x8] sm:$0xff] %v452
        %485 = vst [vmem:[#allocation3 + $0x50] sm:$0xff] %v453
        %486 = vst [vmem:[#allocation3 + $0x98] sm:$0xff] %v454
        %487 = vst [vmem:[#allocation3 + $0xe0] sm:$0xff] %v455
        %488 = vst [vmem:[#allocation3 + $0x128] sm:$0xff] %v456
        %489 = vst [vmem:[#allocation3 + $0x170] sm:$0xff] %v457
        %490 = vst [vmem:[#allocation3 + $0x1b8] sm:$0xff] %v458
        %491 = vst [vmem:[#allocation3 + $0x200] sm:$0xff] %v459
        %492 = vst [vmem:[#allocation3 + $0x248] sm:$0xff] %v460
        %493 = vst [vmem:[#allocation3 + $0x290] sm:$0xff] %v461
        %494 = vst [vmem:[#allocation3 + $0x2d8] sm:$0xff] %v462
        %495 = vst [vmem:[#allocation3 + $0x320] sm:$0xff] %v463
        %496 = vst [vmem:[#allocation3 + $0x368] sm:$0xff] %v464
        %497 = vst [vmem:[#allocation3 + $0x3b0] sm:$0xff] %v465
        %498 = vst [vmem:[#allocation3 + $0x3f8] sm:$0xff] %v466
        %499 = vst [vmem:[#allocation3 + $0x440] sm:$0xff] %v467
        %500 = vst [vmem:[#allocation3 + $0x488] sm:$0xff] %v468
        %501 = vst [vmem:[#allocation3 + $0x4d0] sm:$0xff] %v469
        %502 = vst [vmem:[#allocation3 + $0x518] sm:$0xff] %v470
        %503 = vst [vmem:[#allocation3 + $0x560] sm:$0xff] %v471
        %504 = vst [vmem:[#allocation3 + $0x5a8] sm:$0xff] %v472
        %505 = vst [vmem:[#allocation3 + $0x5f0] sm:$0xff] %v473
        %506 = vst [vmem:[#allocation3 + $0x638] sm:$0xff] %v474
        %507 = vst [vmem:[#allocation3 + $0x680] sm:$0xff] %v475
        %508 = vst [vmem:[#allocation3 + $0x6c8] sm:$0xff] %v476
        %509 = vst [vmem:[#allocation3 + $0x710] sm:$0xff] %v477
        %510 = vst [vmem:[#allocation3 + $0x758] sm:$0xff] %v478
        %511 = vst [vmem:[#allocation3 + $0x7a0] sm:$0xff] %v479
        %512 = vst [vmem:[#allocation3 + $0x7e8] sm:$0xff] %v480
        %513 = vst [vmem:[#allocation3 + $0x830] sm:$0xff] %v481
        %514 = vst [vmem:[#allocation3 + $0x878] sm:$0xff] %v482
        %515 = vst [vmem:[#allocation3 + $0x8c0] sm:$0xff] %v483
        %v516 = vld [vmem:[#allocation2 + $0x9] sm:$0xff]
        %v517 = vld [vmem:[#allocation2 + $0x11] sm:$0xff]
        %v518 = vld [vmem:[#allocation2 + $0x29] sm:$0xff]
        %v519 = vld [vmem:[#allocation2 + $0x31] sm:$0xff]
        %v520 = vld [vmem:[#allocation2 + $0x49] sm:$0xff]
        %v521 = vld [vmem:[#allocation2 + $0x51] sm:$0xff]
        %v522 = vld [vmem:[#allocation2 + $0x69] sm:$0xff]
        %v523 = vld [vmem:[#allocation2 + $0x71] sm:$0xff]
        %v524 = vld [vmem:[#allocation2 + $0x89] sm:$0xff]
        %v525 = vld [vmem:[#allocation2 + $0x91] sm:$0xff]
        %v526 = vld [vmem:[#allocation2 + $0xa9] sm:$0xff]
        %v527 = vld [vmem:[#allocation2 + $0xb1] sm:$0xff]
        %v528 = vld [vmem:[#allocation2 + $0xc9] sm:$0xff]
        %v529 = vld [vmem:[#allocation2 + $0xd1] sm:$0xff]
        %v530 = vld [vmem:[#allocation2 + $0xe9] sm:$0xff]
        %v531 = vld [vmem:[#allocation2 + $0xf1] sm:$0xff]
        %v532 = vld [vmem:[#allocation2 + $0x109] sm:$0xff]
        %v533 = vld [vmem:[#allocation2 + $0x111] sm:$0xff]
        %v534 = vld [vmem:[#allocation2 + $0x129] sm:$0xff]
        %v535 = vld [vmem:[#allocation2 + $0x131] sm:$0xff]
        %v536 = vld [vmem:[#allocation2 + $0x149] sm:$0xff]
        %v537 = vld [vmem:[#allocation2 + $0x151] sm:$0xff]
        %v538 = vld [vmem:[#allocation2 + $0x169] sm:$0xff]
        %v539 = vld [vmem:[#allocation2 + $0x171] sm:$0xff]
        %v540 = vld [vmem:[#allocation2 + $0x189] sm:$0xff]
        %v541 = vld [vmem:[#allocation2 + $0x191] sm:$0xff]
        %v542 = vld [vmem:[#allocation2 + $0x1a9] sm:$0xff]
        %v543 = vld [vmem:[#allocation2 + $0x1b1] sm:$0xff]
        %v544 = vld [vmem:[#allocation2 + $0x1c9] sm:$0xff]
        %v545 = vld [vmem:[#allocation2 + $0x1d1] sm:$0xff]
        %v546 = vld [vmem:[#allocation2 + $0x1e9] sm:$0xff]
        %v547 = vld [vmem:[#allocation2 + $0x1f1] sm:$0xff]
        %548 = vst [vmem:[#allocation3 + $0x10] sm:$0xff] %v516
        %549 = vst [vmem:[#allocation3 + $0x58] sm:$0xff] %v517
        %550 = vst [vmem:[#allocation3 + $0xa0] sm:$0xff] %v518
        %551 = vst [vmem:[#allocation3 + $0xe8] sm:$0xff] %v519
        %552 = vst [vmem:[#allocation3 + $0x130] sm:$0xff] %v520
        %553 = vst [vmem:[#allocation3 + $0x178] sm:$0xff] %v521
        %554 = vst [vmem:[#allocation3 + $0x1c0] sm:$0xff] %v522
        %555 = vst [vmem:[#allocation3 + $0x208] sm:$0xff] %v523
        %556 = vst [vmem:[#allocation3 + $0x250] sm:$0xff] %v524
        %557 = vst [vmem:[#allocation3 + $0x298] sm:$0xff] %v525
        %558 = vst [vmem:[#allocation3 + $0x2e0] sm:$0xff] %v526
        %559 = vst [vmem:[#allocation3 + $0x328] sm:$0xff] %v527
        %560 = vst [vmem:[#allocation3 + $0x370] sm:$0xff] %v528
        %561 = vst [vmem:[#allocation3 + $0x3b8] sm:$0xff] %v529
        %562 = vst [vmem:[#allocation3 + $0x400] sm:$0xff] %v530
        %563 = vst [vmem:[#allocation3 + $0x448] sm:$0xff] %v531
        %564 = vst [vmem:[#allocation3 + $0x490] sm:$0xff] %v532
        %565 = vst [vmem:[#allocation3 + $0x4d8] sm:$0xff] %v533
        %566 = vst [vmem:[#allocation3 + $0x520] sm:$0xff] %v534
        %567 = vst [vmem:[#allocation3 + $0x568] sm:$0xff] %v535
        %568 = vst [vmem:[#allocation3 + $0x5b0] sm:$0xff] %v536
        %569 = vst [vmem:[#allocation3 + $0x5f8] sm:$0xff] %v537
        %570 = vst [vmem:[#allocation3 + $0x640] sm:$0xff] %v538
        %571 = vst [vmem:[#allocation3 + $0x688] sm:$0xff] %v539
        %572 = vst [vmem:[#allocation3 + $0x6d0] sm:$0xff] %v540
        %573 = vst [vmem:[#allocation3 + $0x718] sm:$0xff] %v541
        %574 = vst [vmem:[#allocation3 + $0x760] sm:$0xff] %v542
        %575 = vst [vmem:[#allocation3 + $0x7a8] sm:$0xff] %v543
        %576 = vst [vmem:[#allocation3 + $0x7f0] sm:$0xff] %v544
        %577 = vst [vmem:[#allocation3 + $0x838] sm:$0xff] %v545
        %578 = vst [vmem:[#allocation3 + $0x880] sm:$0xff] %v546
        %579 = vst [vmem:[#allocation3 + $0x8c8] sm:$0xff] %v547
        %v580 = vld [vmem:[%s355 + $0x7] sm:$0xff]
        %v581 = vld [vmem:[%s355 + $0xf] sm:$0xff]
        %v582 = vld [vmem:[%s355 + $0x27] sm:$0xff]
        %v583 = vld [vmem:[%s355 + $0x2f] sm:$0xff]
        %v584 = vld [vmem:[%s355 + $0x47] sm:$0xff]
        %v585 = vld [vmem:[%s355 + $0x4f] sm:$0xff]
        %v586 = vld [vmem:[%s355 + $0x67] sm:$0xff]
        %v587 = vld [vmem:[%s355 + $0x6f] sm:$0xff]
        %v588 = vld [vmem:[%s355 + $0x87] sm:$0xff]
        %v589 = vld [vmem:[%s355 + $0x8f] sm:$0xff]
        %v590 = vld [vmem:[%s355 + $0xa7] sm:$0xff]
        %v591 = vld [vmem:[%s355 + $0xaf] sm:$0xff]
        %v592 = vld [vmem:[%s355 + $0xc7] sm:$0xff]
        %v593 = vld [vmem:[%s355 + $0xcf] sm:$0xff]
        %v594 = vld [vmem:[%s355 + $0xe7] sm:$0xff]
        %v595 = vld [vmem:[%s355 + $0xef] sm:$0xff]
        %v596 = vld [vmem:[%s355 + $0x107] sm:$0xff]
        %v597 = vld [vmem:[%s355 + $0x10f] sm:$0xff]
        %v598 = vld [vmem:[%s355 + $0x127] sm:$0xff]
        %v599 = vld [vmem:[%s355 + $0x12f] sm:$0xff]
        %v600 = vld [vmem:[%s355 + $0x147] sm:$0xff]
        %v601 = vld [vmem:[%s355 + $0x14f] sm:$0xff]
        %v602 = vld [vmem:[%s355 + $0x167] sm:$0xff]
        %v603 = vld [vmem:[%s355 + $0x16f] sm:$0xff]
        %v604 = vld [vmem:[%s355 + $0x187] sm:$0xff]
        %v605 = vld [vmem:[%s355 + $0x18f] sm:$0xff]
        %v606 = vld [vmem:[%s355 + $0x1a7] sm:$0xff]
        %v607 = vld [vmem:[%s355 + $0x1af] sm:$0xff]
        %v608 = vld [vmem:[%s355 + $0x1c7] sm:$0xff]
        %v609 = vld [vmem:[%s355 + $0x1cf] sm:$0xff]
        %v610 = vld [vmem:[%s355 + $0x1e7] sm:$0xff]
        %v611 = vld [vmem:[%s355 + $0x1ef] sm:$0xff]
        %612 = vst [vmem:[#allocation3 + $0x18] sm:$0xff] %v580
        %613 = vst [vmem:[#allocation3 + $0x60] sm:$0xff] %v581
        %614 = vst [vmem:[#allocation3 + $0xa8] sm:$0xff] %v582
        %615 = vst [vmem:[#allocation3 + $0xf0] sm:$0xff] %v583
        %616 = vst [vmem:[#allocation3 + $0x138] sm:$0xff] %v584
        %617 = vst [vmem:[#allocation3 + $0x180] sm:$0xff] %v585
        %618 = vst [vmem:[#allocation3 + $0x1c8] sm:$0xff] %v586
        %619 = vst [vmem:[#allocation3 + $0x210] sm:$0xff] %v587
        %620 = vst [vmem:[#allocation3 + $0x258] sm:$0xff] %v588
        %621 = vst [vmem:[#allocation3 + $0x2a0] sm:$0xff] %v589
        %622 = vst [vmem:[#allocation3 + $0x2e8] sm:$0xff] %v590
        %623 = vst [vmem:[#allocation3 + $0x330] sm:$0xff] %v591
        %624 = vst [vmem:[#allocation3 + $0x378] sm:$0xff] %v592
        %625 = vst [vmem:[#allocation3 + $0x3c0] sm:$0xff] %v593
        %626 = vst [vmem:[#allocation3 + $0x408] sm:$0xff] %v594
        %627 = vst [vmem:[#allocation3 + $0x450] sm:$0xff] %v595
        %628 = vst [vmem:[#allocation3 + $0x498] sm:$0xff] %v596
        %629 = vst [vmem:[#allocation3 + $0x4e0] sm:$0xff] %v597
        %630 = vst [vmem:[#allocation3 + $0x528] sm:$0xff] %v598
        %631 = vst [vmem:[#allocation3 + $0x570] sm:$0xff] %v599
        %632 = vst [vmem:[#allocation3 + $0x5b8] sm:$0xff] %v600
        %633 = vst [vmem:[#allocation3 + $0x600] sm:$0xff] %v601
        %634 = vst [vmem:[#allocation3 + $0x648] sm:$0xff] %v602
        %635 = vst [vmem:[#allocation3 + $0x690] sm:$0xff] %v603
        %636 = vst [vmem:[#allocation3 + $0x6d8] sm:$0xff] %v604
        %637 = vst [vmem:[#allocation3 + $0x720] sm:$0xff] %v605
        %638 = vst [vmem:[#allocation3 + $0x768] sm:$0xff] %v606
        %639 = vst [vmem:[#allocation3 + $0x7b0] sm:$0xff] %v607
        %640 = vst [vmem:[#allocation3 + $0x7f8] sm:$0xff] %v608
        %641 = vst [vmem:[#allocation3 + $0x840] sm:$0xff] %v609
        %642 = vst [vmem:[#allocation3 + $0x888] sm:$0xff] %v610
        %643 = vst [vmem:[#allocation3 + $0x8d0] sm:$0xff] %v611
        %v644 = vld [vmem:[%s355 + $0x8] sm:$0xff]
        %v645 = vld [vmem:[%s355 + $0x10] sm:$0xff]
        %v646 = vld [vmem:[%s355 + $0x28] sm:$0xff]
        %v647 = vld [vmem:[%s355 + $0x30] sm:$0xff]
        %v648 = vld [vmem:[%s355 + $0x48] sm:$0xff]
        %v649 = vld [vmem:[%s355 + $0x50] sm:$0xff]
        %v650 = vld [vmem:[%s355 + $0x68] sm:$0xff]
        %v651 = vld [vmem:[%s355 + $0x70] sm:$0xff]
        %v652 = vld [vmem:[%s355 + $0x88] sm:$0xff]
        %v653 = vld [vmem:[%s355 + $0x90] sm:$0xff]
        %v654 = vld [vmem:[%s355 + $0xa8] sm:$0xff]
        %v655 = vld [vmem:[%s355 + $0xb0] sm:$0xff]
        %v656 = vld [vmem:[%s355 + $0xc8] sm:$0xff]
        %v657 = vld [vmem:[%s355 + $0xd0] sm:$0xff]
        %v658 = vld [vmem:[%s355 + $0xe8] sm:$0xff]
        %v659 = vld [vmem:[%s355 + $0xf0] sm:$0xff]
        %v660 = vld [vmem:[%s355 + $0x108] sm:$0xff]
        %v661 = vld [vmem:[%s355 + $0x110] sm:$0xff]
        %v662 = vld [vmem:[%s355 + $0x128] sm:$0xff]
        %v663 = vld [vmem:[%s355 + $0x130] sm:$0xff]
        %v664 = vld [vmem:[%s355 + $0x148] sm:$0xff]
        %v665 = vld [vmem:[%s355 + $0x150] sm:$0xff]
        %v666 = vld [vmem:[%s355 + $0x168] sm:$0xff]
        %v667 = vld [vmem:[%s355 + $0x170] sm:$0xff]
        %v668 = vld [vmem:[%s355 + $0x188] sm:$0xff]
        %v669 = vld [vmem:[%s355 + $0x190] sm:$0xff]
        %v670 = vld [vmem:[%s355 + $0x1a8] sm:$0xff]
        %v671 = vld [vmem:[%s355 + $0x1b0] sm:$0xff]
        %v672 = vld [vmem:[%s355 + $0x1c8] sm:$0xff]
        %v673 = vld [vmem:[%s355 + $0x1d0] sm:$0xff]
        %v674 = vld [vmem:[%s355 + $0x1e8] sm:$0xff]
        %v675 = vld [vmem:[%s355 + $0x1f0] sm:$0xff]
        %676 = vst [vmem:[#allocation3 + $0x20] sm:$0xff] %v644
        %677 = vst [vmem:[#allocation3 + $0x68] sm:$0xff] %v645
        %678 = vst [vmem:[#allocation3 + $0xb0] sm:$0xff] %v646
        %679 = vst [vmem:[#allocation3 + $0xf8] sm:$0xff] %v647
        %680 = vst [vmem:[#allocation3 + $0x140] sm:$0xff] %v648
        %681 = vst [vmem:[#allocation3 + $0x188] sm:$0xff] %v649
        %682 = vst [vmem:[#allocation3 + $0x1d0] sm:$0xff] %v650
        %683 = vst [vmem:[#allocation3 + $0x218] sm:$0xff] %v651
        %684 = vst [vmem:[#allocation3 + $0x260] sm:$0xff] %v652
        %685 = vst [vmem:[#allocation3 + $0x2a8] sm:$0xff] %v653
        %686 = vst [vmem:[#allocation3 + $0x2f0] sm:$0xff] %v654
        %687 = vst [vmem:[#allocation3 + $0x338] sm:$0xff] %v655
        %688 = vst [vmem:[#allocation3 + $0x380] sm:$0xff] %v656
        %689 = vst [vmem:[#allocation3 + $0x3c8] sm:$0xff] %v657
        %690 = vst [vmem:[#allocation3 + $0x410] sm:$0xff] %v658
        %691 = vst [vmem:[#allocation3 + $0x458] sm:$0xff] %v659
        %692 = vst [vmem:[#allocation3 + $0x4a0] sm:$0xff] %v660
        %693 = vst [vmem:[#allocation3 + $0x4e8] sm:$0xff] %v661
        %694 = vst [vmem:[#allocation3 + $0x530] sm:$0xff] %v662
        %695 = vst [vmem:[#allocation3 + $0x578] sm:$0xff] %v663
        %696 = vst [vmem:[#allocation3 + $0x5c0] sm:$0xff] %v664
        %697 = vst [vmem:[#allocation3 + $0x608] sm:$0xff] %v665
        %698 = vst [vmem:[#allocation3 + $0x650] sm:$0xff] %v666
        %699 = vst [vmem:[#allocation3 + $0x698] sm:$0xff] %v667
        %700 = vst [vmem:[#allocation3 + $0x6e0] sm:$0xff] %v668
        %701 = vst [vmem:[#allocation3 + $0x728] sm:$0xff] %v669
        %702 = vst [vmem:[#allocation3 + $0x770] sm:$0xff] %v670
        %703 = vst [vmem:[#allocation3 + $0x7b8] sm:$0xff] %v671
        %704 = vst [vmem:[#allocation3 + $0x800] sm:$0xff] %v672
        %705 = vst [vmem:[#allocation3 + $0x848] sm:$0xff] %v673
        %706 = vst [vmem:[#allocation3 + $0x890] sm:$0xff] %v674
        %707 = vst [vmem:[#allocation3 + $0x8d8] sm:$0xff] %v675
        %v708 = vld [vmem:[%s355 + $0x9] sm:$0xff]
        %v709 = vld [vmem:[%s355 + $0x11] sm:$0xff]
        %v710 = vld [vmem:[%s355 + $0x29] sm:$0xff]
        %v711 = vld [vmem:[%s355 + $0x31] sm:$0xff]
        %v712 = vld [vmem:[%s355 + $0x49] sm:$0xff]
        %v713 = vld [vmem:[%s355 + $0x51] sm:$0xff]
        %v714 = vld [vmem:[%s355 + $0x69] sm:$0xff]
        %v715 = vld [vmem:[%s355 + $0x71] sm:$0xff]
        %v716 = vld [vmem:[%s355 + $0x89] sm:$0xff]
        %v717 = vld [vmem:[%s355 + $0x91] sm:$0xff]
        %v718 = vld [vmem:[%s355 + $0xa9] sm:$0xff]
        %v719 = vld [vmem:[%s355 + $0xb1] sm:$0xff]
        %v720 = vld [vmem:[%s355 + $0xc9] sm:$0xff]
        %v721 = vld [vmem:[%s355 + $0xd1] sm:$0xff]
        %v722 = vld [vmem:[%s355 + $0xe9] sm:$0xff]
        %v723 = vld [vmem:[%s355 + $0xf1] sm:$0xff]
        %v724 = vld [vmem:[%s355 + $0x109] sm:$0xff]
        %v725 = vld [vmem:[%s355 + $0x111] sm:$0xff]
        %v726 = vld [vmem:[%s355 + $0x129] sm:$0xff]
        %v727 = vld [vmem:[%s355 + $0x131] sm:$0xff]
        %v728 = vld [vmem:[%s355 + $0x149] sm:$0xff]
        %v729 = vld [vmem:[%s355 + $0x151] sm:$0xff]
        %v730 = vld [vmem:[%s355 + $0x169] sm:$0xff]
        %v731 = vld [vmem:[%s355 + $0x171] sm:$0xff]
        %v732 = vld [vmem:[%s355 + $0x189] sm:$0xff]
        %v733 = vld [vmem:[%s355 + $0x191] sm:$0xff]
        %v734 = vld [vmem:[%s355 + $0x1a9] sm:$0xff]
        %v735 = vld [vmem:[%s355 + $0x1b1] sm:$0xff]
        %v736 = vld [vmem:[%s355 + $0x1c9] sm:$0xff]
        %v737 = vld [vmem:[%s355 + $0x1d1] sm:$0xff]
        %v738 = vld [vmem:[%s355 + $0x1e9] sm:$0xff]
        %v739 = vld [vmem:[%s355 + $0x1f1] sm:$0xff]
        %740 = vst [vmem:[#allocation3 + $0x28] sm:$0xff] %v708
        %741 = vst [vmem:[#allocation3 + $0x70] sm:$0xff] %v709
        %742 = vst [vmem:[#allocation3 + $0xb8] sm:$0xff] %v710
        %743 = vst [vmem:[#allocation3 + $0x100] sm:$0xff] %v711
        %744 = vst [vmem:[#allocation3 + $0x148] sm:$0xff] %v712
        %745 = vst [vmem:[#allocation3 + $0x190] sm:$0xff] %v713
        %746 = vst [vmem:[#allocation3 + $0x1d8] sm:$0xff] %v714
        %747 = vst [vmem:[#allocation3 + $0x220] sm:$0xff] %v715
        %748 = vst [vmem:[#allocation3 + $0x268] sm:$0xff] %v716
        %749 = vst [vmem:[#allocation3 + $0x2b0] sm:$0xff] %v717
        %750 = vst [vmem:[#allocation3 + $0x2f8] sm:$0xff] %v718
        %751 = vst [vmem:[#allocation3 + $0x340] sm:$0xff] %v719
        %752 = vst [vmem:[#allocation3 + $0x388] sm:$0xff] %v720
        %753 = vst [vmem:[#allocation3 + $0x3d0] sm:$0xff] %v721
        %754 = vst [vmem:[#allocation3 + $0x418] sm:$0xff] %v722
        %755 = vst [vmem:[#allocation3 + $0x460] sm:$0xff] %v723
        %756 = vst [vmem:[#allocation3 + $0x4a8] sm:$0xff] %v724
        %757 = vst [vmem:[#allocation3 + $0x4f0] sm:$0xff] %v725
        %758 = vst [vmem:[#allocation3 + $0x538] sm:$0xff] %v726
        %759 = vst [vmem:[#allocation3 + $0x580] sm:$0xff] %v727
        %760 = vst [vmem:[#allocation3 + $0x5c8] sm:$0xff] %v728
        %761 = vst [vmem:[#allocation3 + $0x610] sm:$0xff] %v729
        %762 = vst [vmem:[#allocation3 + $0x658] sm:$0xff] %v730
        %763 = vst [vmem:[#allocation3 + $0x6a0] sm:$0xff] %v731
        %764 = vst [vmem:[#allocation3 + $0x6e8] sm:$0xff] %v732
        %765 = vst [vmem:[#allocation3 + $0x730] sm:$0xff] %v733
        %766 = vst [vmem:[#allocation3 + $0x778] sm:$0xff] %v734
        %767 = vst [vmem:[#allocation3 + $0x7c0] sm:$0xff] %v735
        %768 = vst [vmem:[#allocation3 + $0x808] sm:$0xff] %v736
        %769 = vst [vmem:[#allocation3 + $0x850] sm:$0xff] %v737
        %770 = vst [vmem:[#allocation3 + $0x898] sm:$0xff] %v738
        %771 = vst [vmem:[#allocation3 + $0x8e0] sm:$0xff] %v739
        %s772 = scalar_lea.vmem [#allocation2], 64
        %v773 = vld [vmem:[%s772 + $0x7] sm:$0xff]
        %v774 = vld [vmem:[%s772 + $0xf] sm:$0xff]
        %v775 = vld [vmem:[%s772 + $0x27] sm:$0xff]
        %v776 = vld [vmem:[%s772 + $0x2f] sm:$0xff]
        %v777 = vld [vmem:[%s772 + $0x47] sm:$0xff]
        %v778 = vld [vmem:[%s772 + $0x4f] sm:$0xff]
        %v779 = vld [vmem:[%s772 + $0x67] sm:$0xff]
        %v780 = vld [vmem:[%s772 + $0x6f] sm:$0xff]
        %v781 = vld [vmem:[%s772 + $0x87] sm:$0xff]
        %v782 = vld [vmem:[%s772 + $0x8f] sm:$0xff]
        %v783 = vld [vmem:[%s772 + $0xa7] sm:$0xff]
        %v784 = vld [vmem:[%s772 + $0xaf] sm:$0xff]
        %v785 = vld [vmem:[%s772 + $0xc7] sm:$0xff]
        %v786 = vld [vmem:[%s772 + $0xcf] sm:$0xff]
        %v787 = vld [vmem:[%s772 + $0xe7] sm:$0xff]
        %v788 = vld [vmem:[%s772 + $0xef] sm:$0xff]
        %v789 = vld [vmem:[%s772 + $0x107] sm:$0xff]
        %v790 = vld [vmem:[%s772 + $0x10f] sm:$0xff]
        %v791 = vld [vmem:[%s772 + $0x127] sm:$0xff]
        %v792 = vld [vmem:[%s772 + $0x12f] sm:$0xff]
        %v793 = vld [vmem:[%s772 + $0x147] sm:$0xff]
        %v794 = vld [vmem:[%s772 + $0x14f] sm:$0xff]
        %v795 = vld [vmem:[%s772 + $0x167] sm:$0xff]
        %v796 = vld [vmem:[%s772 + $0x16f] sm:$0xff]
        %v797 = vld [vmem:[%s772 + $0x187] sm:$0xff]
        %v798 = vld [vmem:[%s772 + $0x18f] sm:$0xff]
        %v799 = vld [vmem:[%s772 + $0x1a7] sm:$0xff]
        %v800 = vld [vmem:[%s772 + $0x1af] sm:$0xff]
        %v801 = vld [vmem:[%s772 + $0x1c7] sm:$0xff]
        %v802 = vld [vmem:[%s772 + $0x1cf] sm:$0xff]
        %v803 = vld [vmem:[%s772 + $0x1e7] sm:$0xff]
        %v804 = vld [vmem:[%s772 + $0x1ef] sm:$0xff]
        %805 = vst [vmem:[#allocation3 + $0x30] sm:$0xff] %v773
        %806 = vst [vmem:[#allocation3 + $0x78] sm:$0xff] %v774
        %807 = vst [vmem:[#allocation3 + $0xc0] sm:$0xff] %v775
        %808 = vst [vmem:[#allocation3 + $0x108] sm:$0xff] %v776
        %809 = vst [vmem:[#allocation3 + $0x150] sm:$0xff] %v777
        %810 = vst [vmem:[#allocation3 + $0x198] sm:$0xff] %v778
        %811 = vst [vmem:[#allocation3 + $0x1e0] sm:$0xff] %v779
        %812 = vst [vmem:[#allocation3 + $0x228] sm:$0xff] %v780
        %813 = vst [vmem:[#allocation3 + $0x270] sm:$0xff] %v781
        %814 = vst [vmem:[#allocation3 + $0x2b8] sm:$0xff] %v782
        %815 = vst [vmem:[#allocation3 + $0x300] sm:$0xff] %v783
        %816 = vst [vmem:[#allocation3 + $0x348] sm:$0xff] %v784
        %817 = vst [vmem:[#allocation3 + $0x390] sm:$0xff] %v785
        %818 = vst [vmem:[#allocation3 + $0x3d8] sm:$0xff] %v786
        %819 = vst [vmem:[#allocation3 + $0x420] sm:$0xff] %v787
        %820 = vst [vmem:[#allocation3 + $0x468] sm:$0xff] %v788
        %821 = vst [vmem:[#allocation3 + $0x4b0] sm:$0xff] %v789
        %822 = vst [vmem:[#allocation3 + $0x4f8] sm:$0xff] %v790
        %823 = vst [vmem:[#allocation3 + $0x540] sm:$0xff] %v791
        %824 = vst [vmem:[#allocation3 + $0x588] sm:$0xff] %v792
        %825 = vst [vmem:[#allocation3 + $0x5d0] sm:$0xff] %v793
        %826 = vst [vmem:[#allocation3 + $0x618] sm:$0xff] %v794
        %827 = vst [vmem:[#allocation3 + $0x660] sm:$0xff] %v795
        %828 = vst [vmem:[#allocation3 + $0x6a8] sm:$0xff] %v796
        %829 = vst [vmem:[#allocation3 + $0x6f0] sm:$0xff] %v797
        %830 = vst [vmem:[#allocation3 + $0x738] sm:$0xff] %v798
        %831 = vst [vmem:[#allocation3 + $0x780] sm:$0xff] %v799
        %832 = vst [vmem:[#allocation3 + $0x7c8] sm:$0xff] %v800
        %833 = vst [vmem:[#allocation3 + $0x810] sm:$0xff] %v801
        %834 = vst [vmem:[#allocation3 + $0x858] sm:$0xff] %v802
        %835 = vst [vmem:[#allocation3 + $0x8a0] sm:$0xff] %v803
        %836 = vst [vmem:[#allocation3 + $0x8e8] sm:$0xff] %v804
        %v837 = vld [vmem:[%s772 + $0x8] sm:$0xff]
        %v838 = vld [vmem:[%s772 + $0x10] sm:$0xff]
        %v839 = vld [vmem:[%s772 + $0x28] sm:$0xff]
        %v840 = vld [vmem:[%s772 + $0x30] sm:$0xff]
        %v841 = vld [vmem:[%s772 + $0x48] sm:$0xff]
        %v842 = vld [vmem:[%s772 + $0x50] sm:$0xff]
        %v843 = vld [vmem:[%s772 + $0x68] sm:$0xff]
        %v844 = vld [vmem:[%s772 + $0x70] sm:$0xff]
        %v845 = vld [vmem:[%s772 + $0x88] sm:$0xff]
        %v846 = vld [vmem:[%s772 + $0x90] sm:$0xff]
        %v847 = vld [vmem:[%s772 + $0xa8] sm:$0xff]
        %v848 = vld [vmem:[%s772 + $0xb0] sm:$0xff]
        %v849 = vld [vmem:[%s772 + $0xc8] sm:$0xff]
        %v850 = vld [vmem:[%s772 + $0xd0] sm:$0xff]
        %v851 = vld [vmem:[%s772 + $0xe8] sm:$0xff]
        %v852 = vld [vmem:[%s772 + $0xf0] sm:$0xff]
        %v853 = vld [vmem:[%s772 + $0x108] sm:$0xff]
        %v854 = vld [vmem:[%s772 + $0x110] sm:$0xff]
        %v855 = vld [vmem:[%s772 + $0x128] sm:$0xff]
        %v856 = vld [vmem:[%s772 + $0x130] sm:$0xff]
        %v857 = vld [vmem:[%s772 + $0x148] sm:$0xff]
        %v858 = vld [vmem:[%s772 + $0x150] sm:$0xff]
        %v859 = vld [vmem:[%s772 + $0x168] sm:$0xff]
        %v860 = vld [vmem:[%s772 + $0x170] sm:$0xff]
        %v861 = vld [vmem:[%s772 + $0x188] sm:$0xff]
        %v862 = vld [vmem:[%s772 + $0x190] sm:$0xff]
        %v863 = vld [vmem:[%s772 + $0x1a8] sm:$0xff]
        %v864 = vld [vmem:[%s772 + $0x1b0] sm:$0xff]
        %v865 = vld [vmem:[%s772 + $0x1c8] sm:$0xff]
        %v866 = vld [vmem:[%s772 + $0x1d0] sm:$0xff]
        %v867 = vld [vmem:[%s772 + $0x1e8] sm:$0xff]
        %v868 = vld [vmem:[%s772 + $0x1f0] sm:$0xff]
        %869 = vst [vmem:[#allocation3 + $0x38] sm:$0xff] %v837
        %870 = vst [vmem:[#allocation3 + $0x80] sm:$0xff] %v838
        %871 = vst [vmem:[#allocation3 + $0xc8] sm:$0xff] %v839
        %872 = vst [vmem:[#allocation3 + $0x110] sm:$0xff] %v840
        %873 = vst [vmem:[#allocation3 + $0x158] sm:$0xff] %v841
        %874 = vst [vmem:[#allocation3 + $0x1a0] sm:$0xff] %v842
        %875 = vst [vmem:[#allocation3 + $0x1e8] sm:$0xff] %v843
        %876 = vst [vmem:[#allocation3 + $0x230] sm:$0xff] %v844
        %877 = vst [vmem:[#allocation3 + $0x278] sm:$0xff] %v845
        %878 = vst [vmem:[#allocation3 + $0x2c0] sm:$0xff] %v846
        %879 = vst [vmem:[#allocation3 + $0x308] sm:$0xff] %v847
        %880 = vst [vmem:[#allocation3 + $0x350] sm:$0xff] %v848
        %881 = vst [vmem:[#allocation3 + $0x398] sm:$0xff] %v849
        %882 = vst [vmem:[#allocation3 + $0x3e0] sm:$0xff] %v850
        %883 = vst [vmem:[#allocation3 + $0x428] sm:$0xff] %v851
        %884 = vst [vmem:[#allocation3 + $0x470] sm:$0xff] %v852
        %885 = vst [vmem:[#allocation3 + $0x4b8] sm:$0xff] %v853
        %886 = vst [vmem:[#allocation3 + $0x500] sm:$0xff] %v854
        %887 = vst [vmem:[#allocation3 + $0x548] sm:$0xff] %v855
        %888 = vst [vmem:[#allocation3 + $0x590] sm:$0xff] %v856
        %889 = vst [vmem:[#allocation3 + $0x5d8] sm:$0xff] %v857
        %890 = vst [vmem:[#allocation3 + $0x620] sm:$0xff] %v858
        %891 = vst [vmem:[#allocation3 + $0x668] sm:$0xff] %v859
        %892 = vst [vmem:[#allocation3 + $0x6b0] sm:$0xff] %v860
        %893 = vst [vmem:[#allocation3 + $0x6f8] sm:$0xff] %v861
        %894 = vst [vmem:[#allocation3 + $0x740] sm:$0xff] %v862
        %895 = vst [vmem:[#allocation3 + $0x788] sm:$0xff] %v863
        %896 = vst [vmem:[#allocation3 + $0x7d0] sm:$0xff] %v864
        %897 = vst [vmem:[#allocation3 + $0x818] sm:$0xff] %v865
        %898 = vst [vmem:[#allocation3 + $0x860] sm:$0xff] %v866
        %899 = vst [vmem:[#allocation3 + $0x8a8] sm:$0xff] %v867
        %900 = vst [vmem:[#allocation3 + $0x8f0] sm:$0xff] %v868
        %v901 = vld [vmem:[%s772 + $0x9] sm:$0xff]
        %v902 = vld [vmem:[%s772 + $0x11] sm:$0xff]
        %v903 = vld [vmem:[%s772 + $0x29] sm:$0xff]
        %v904 = vld [vmem:[%s772 + $0x31] sm:$0xff]
        %v905 = vld [vmem:[%s772 + $0x49] sm:$0xff]
        %v906 = vld [vmem:[%s772 + $0x51] sm:$0xff]
        %v907 = vld [vmem:[%s772 + $0x69] sm:$0xff]
        %v908 = vld [vmem:[%s772 + $0x71] sm:$0xff]
        %v909 = vld [vmem:[%s772 + $0x89] sm:$0xff]
        %v910 = vld [vmem:[%s772 + $0x91] sm:$0xff]
        %v911 = vld [vmem:[%s772 + $0xa9] sm:$0xff]
        %v912 = vld [vmem:[%s772 + $0xb1] sm:$0xff]
        %v913 = vld [vmem:[%s772 + $0xc9] sm:$0xff]
        %v914 = vld [vmem:[%s772 + $0xd1] sm:$0xff]
        %v915 = vld [vmem:[%s772 + $0xe9] sm:$0xff]
        %v916 = vld [vmem:[%s772 + $0xf1] sm:$0xff]
        %v917 = vld [vmem:[%s772 + $0x109] sm:$0xff]
        %v918 = vld [vmem:[%s772 + $0x111] sm:$0xff]
        %v919 = vld [vmem:[%s772 + $0x129] sm:$0xff]
        %v920 = vld [vmem:[%s772 + $0x131] sm:$0xff]
        %v921 = vld [vmem:[%s772 + $0x149] sm:$0xff]
        %v922 = vld [vmem:[%s772 + $0x151] sm:$0xff]
        %v923 = vld [vmem:[%s772 + $0x169] sm:$0xff]
        %v924 = vld [vmem:[%s772 + $0x171] sm:$0xff]
        %v925 = vld [vmem:[%s772 + $0x189] sm:$0xff]
        %v926 = vld [vmem:[%s772 + $0x191] sm:$0xff]
        %v927 = vld [vmem:[%s772 + $0x1a9] sm:$0xff]
        %v928 = vld [vmem:[%s772 + $0x1b1] sm:$0xff]
        %v929 = vld [vmem:[%s772 + $0x1c9] sm:$0xff]
        %v930 = vld [vmem:[%s772 + $0x1d1] sm:$0xff]
        %v931 = vld [vmem:[%s772 + $0x1e9] sm:$0xff]
        %v932 = vld [vmem:[%s772 + $0x1f1] sm:$0xff]
        %933 = vst [vmem:[#allocation3 + $0x40] sm:$0xff] %v901
        %934 = vst [vmem:[#allocation3 + $0x88] sm:$0xff] %v902
        %935 = vst [vmem:[#allocation3 + $0xd0] sm:$0xff] %v903
        %936 = vst [vmem:[#allocation3 + $0x118] sm:$0xff] %v904
        %937 = vst [vmem:[#allocation3 + $0x160] sm:$0xff] %v905
        %938 = vst [vmem:[#allocation3 + $0x1a8] sm:$0xff] %v906
        %939 = vst [vmem:[#allocation3 + $0x1f0] sm:$0xff] %v907
        %940 = vst [vmem:[#allocation3 + $0x238] sm:$0xff] %v908
        %941 = vst [vmem:[#allocation3 + $0x280] sm:$0xff] %v909
        %942 = vst [vmem:[#allocation3 + $0x2c8] sm:$0xff] %v910
        %943 = vst [vmem:[#allocation3 + $0x310] sm:$0xff] %v911
        %944 = vst [vmem:[#allocation3 + $0x358] sm:$0xff] %v912
        %945 = vst [vmem:[#allocation3 + $0x3a0] sm:$0xff] %v913
        %946 = vst [vmem:[#allocation3 + $0x3e8] sm:$0xff] %v914
        %947 = vst [vmem:[#allocation3 + $0x430] sm:$0xff] %v915
        %948 = vst [vmem:[#allocation3 + $0x478] sm:$0xff] %v916
        %949 = vst [vmem:[#allocation3 + $0x4c0] sm:$0xff] %v917
        %950 = vst [vmem:[#allocation3 + $0x508] sm:$0xff] %v918
        %951 = vst [vmem:[#allocation3 + $0x550] sm:$0xff] %v919
        %952 = vst [vmem:[#allocation3 + $0x598] sm:$0xff] %v920
        %953 = vst [vmem:[#allocation3 + $0x5e0] sm:$0xff] %v921
        %954 = vst [vmem:[#allocation3 + $0x628] sm:$0xff] %v922
        %955 = vst [vmem:[#allocation3 + $0x670] sm:$0xff] %v923
        %956 = vst [vmem:[#allocation3 + $0x6b8] sm:$0xff] %v924
        %957 = vst [vmem:[#allocation3 + $0x700] sm:$0xff] %v925
        %958 = vst [vmem:[#allocation3 + $0x748] sm:$0xff] %v926
        %959 = vst [vmem:[#allocation3 + $0x790] sm:$0xff] %v927
        %960 = vst [vmem:[#allocation3 + $0x7d8] sm:$0xff] %v928
        %961 = vst [vmem:[#allocation3 + $0x820] sm:$0xff] %v929
        %962 = vst [vmem:[#allocation3 + $0x868] sm:$0xff] %v930
        %963 = vst [vmem:[#allocation3 + $0x8b0] sm:$0xff] %v931
        %964 = vst [vmem:[#allocation3 + $0x8f8] sm:$0xff] %v932
        %v965 = vld [vmem:[#allocation3] sm:$0xff]
        %v966 = vld [vmem:[#allocation3 + $0x8] sm:$0xff]
        %v967 = vld [vmem:[#allocation3 + $0x10] sm:$0xff]
        %v968 = vld [vmem:[#allocation3 + $0x18] sm:$0xff]
        %v969 = vld [vmem:[#allocation3 + $0x20] sm:$0xff]
        %v970 = vld [vmem:[#allocation3 + $0x28] sm:$0xff]
        %v971 = vld [vmem:[#allocation3 + $0x30] sm:$0xff]
        %v972 = vld [vmem:[#allocation3 + $0x38] sm:$0xff]
        %v973 = vld [vmem:[#allocation3 + $0x40] sm:$0xff]
        %v974 = vld [vmem:[#allocation3 + $0x48] sm:$0xff]
        %v975 = vld [vmem:[#allocation3 + $0x50] sm:$0xff]
        %v976 = vld [vmem:[#allocation3 + $0x58] sm:$0xff]
        %v977 = vld [vmem:[#allocation3 + $0x60] sm:$0xff]
        %v978 = vld [vmem:[#allocation3 + $0x68] sm:$0xff]
        %v979 = vld [vmem:[#allocation3 + $0x70] sm:$0xff]
        %v980 = vld [vmem:[#allocation3 + $0x78] sm:$0xff]
        %v981 = vld [vmem:[#allocation3 + $0x80] sm:$0xff]
        %v982 = vld [vmem:[#allocation3 + $0x88] sm:$0xff]
        %v983 = vld [vmem:[#allocation3 + $0x90] sm:$0xff]
        %v984 = vld [vmem:[#allocation3 + $0x98] sm:$0xff]
        %v985 = vld [vmem:[#allocation3 + $0xa0] sm:$0xff]
        %v986 = vld [vmem:[#allocation3 + $0xa8] sm:$0xff]
        %v987 = vld [vmem:[#allocation3 + $0xb0] sm:$0xff]
        %v988 = vld [vmem:[#allocation3 + $0xb8] sm:$0xff]
        %v989 = vld [vmem:[#allocation3 + $0xc0] sm:$0xff]
        %v990 = vld [vmem:[#allocation3 + $0xc8] sm:$0xff]
        %v991 = vld [vmem:[#allocation3 + $0xd0] sm:$0xff]
        %v992 = vld [vmem:[#allocation3 + $0xd8] sm:$0xff]
        %v993 = vld [vmem:[#allocation3 + $0xe0] sm:$0xff]
        %v994 = vld [vmem:[#allocation3 + $0xe8] sm:$0xff]
        %v995 = vld [vmem:[#allocation3 + $0xf0] sm:$0xff]
        %v996 = vld [vmem:[#allocation3 + $0xf8] sm:$0xff]
        %v997 = vld [vmem:[#allocation3 + $0x100] sm:$0xff]
        %v998 = vld [vmem:[#allocation3 + $0x108] sm:$0xff]
        %v999 = vld [vmem:[#allocation3 + $0x110] sm:$0xff]
        %v1000 = vld [vmem:[#allocation3 + $0x118] sm:$0xff]
        %v1001 = vld [vmem:[#allocation3 + $0x120] sm:$0xff]
        %v1002 = vld [vmem:[#allocation3 + $0x128] sm:$0xff]
        %v1003 = vld [vmem:[#allocation3 + $0x130] sm:$0xff]
        %v1004 = vld [vmem:[#allocation3 + $0x138] sm:$0xff]
        %v1005 = vld [vmem:[#allocation3 + $0x140] sm:$0xff]
        %v1006 = vld [vmem:[#allocation3 + $0x148] sm:$0xff]
        %v1007 = vld [vmem:[#allocation3 + $0x150] sm:$0xff]
        %v1008 = vld [vmem:[#allocation3 + $0x158] sm:$0xff]
        %v1009 = vld [vmem:[#allocation3 + $0x160] sm:$0xff]
        %v1010 = vld [vmem:[#allocation3 + $0x168] sm:$0xff]
        %v1011 = vld [vmem:[#allocation3 + $0x170] sm:$0xff]
        %v1012 = vld [vmem:[#allocation3 + $0x178] sm:$0xff]
        %v1013 = vld [vmem:[#allocation3 + $0x180] sm:$0xff]
        %v1014 = vld [vmem:[#allocation3 + $0x188] sm:$0xff]
        %v1015 = vld [vmem:[#allocation3 + $0x190] sm:$0xff]
        %v1016 = vld [vmem:[#allocation3 + $0x198] sm:$0xff]
        %v1017 = vld [vmem:[#allocation3 + $0x1a0] sm:$0xff]
        %v1018 = vld [vmem:[#allocation3 + $0x1a8] sm:$0xff]
        %v1019 = vld [vmem:[#allocation3 + $0x1b0] sm:$0xff]
        %v1020 = vld [vmem:[#allocation3 + $0x1b8] sm:$0xff]
        %v1021 = vld [vmem:[#allocation3 + $0x1c0] sm:$0xff]
        %v1022 = vld [vmem:[#allocation3 + $0x1c8] sm:$0xff]
        %v1023 = vld [vmem:[#allocation3 + $0x1d0] sm:$0xff]
        %v1024 = vld [vmem:[#allocation3 + $0x1d8] sm:$0xff]
        %v1025 = vld [vmem:[#allocation3 + $0x1e0] sm:$0xff]
        %v1026 = vld [vmem:[#allocation3 + $0x1e8] sm:$0xff]
        %v1027 = vld [vmem:[#allocation3 + $0x1f0] sm:$0xff]
        %v1028 = vld [vmem:[#allocation3 + $0x1f8] sm:$0xff]
        %v1029 = vld [vmem:[#allocation3 + $0x200] sm:$0xff]
        %v1030 = vld [vmem:[#allocation3 + $0x208] sm:$0xff]
        %v1031 = vld [vmem:[#allocation3 + $0x210] sm:$0xff]
        %v1032 = vld [vmem:[#allocation3 + $0x218] sm:$0xff]
        %v1033 = vld [vmem:[#allocation3 + $0x220] sm:$0xff]
        %v1034 = vld [vmem:[#allocation3 + $0x228] sm:$0xff]
        %v1035 = vld [vmem:[#allocation3 + $0x230] sm:$0xff]
        %v1036 = vld [vmem:[#allocation3 + $0x238] sm:$0xff]
        %v1037 = vld [vmem:[#allocation3 + $0x240] sm:$0xff]
        %v1038 = vld [vmem:[#allocation3 + $0x248] sm:$0xff]
        %v1039 = vld [vmem:[#allocation3 + $0x250] sm:$0xff]
        %v1040 = vld [vmem:[#allocation3 + $0x258] sm:$0xff]
        %v1041 = vld [vmem:[#allocation3 + $0x260] sm:$0xff]
        %v1042 = vld [vmem:[#allocation3 + $0x268] sm:$0xff]
        %v1043 = vld [vmem:[#allocation3 + $0x270] sm:$0xff]
        %v1044 = vld [vmem:[#allocation3 + $0x278] sm:$0xff]
        %v1045 = vld [vmem:[#allocation3 + $0x280] sm:$0xff]
        %v1046 = vld [vmem:[#allocation3 + $0x288] sm:$0xff]
        %v1047 = vld [vmem:[#allocation3 + $0x290] sm:$0xff]
        %v1048 = vld [vmem:[#allocation3 + $0x298] sm:$0xff]
        %v1049 = vld [vmem:[#allocation3 + $0x2a0] sm:$0xff]
        %v1050 = vld [vmem:[#allocation3 + $0x2a8] sm:$0xff]
        %v1051 = vld [vmem:[#allocation3 + $0x2b0] sm:$0xff]
        %v1052 = vld [vmem:[#allocation3 + $0x2b8] sm:$0xff]
        %v1053 = vld [vmem:[#allocation3 + $0x2c0] sm:$0xff]
        %v1054 = vld [vmem:[#allocation3 + $0x2c8] sm:$0xff]
        %v1055 = vld [vmem:[#allocation3 + $0x2d0] sm:$0xff]
        %v1056 = vld [vmem:[#allocation3 + $0x2d8] sm:$0xff]
        %v1057 = vld [vmem:[#allocation3 + $0x2e0] sm:$0xff]
        %v1058 = vld [vmem:[#allocation3 + $0x2e8] sm:$0xff]
        %v1059 = vld [vmem:[#allocation3 + $0x2f0] sm:$0xff]
        %v1060 = vld [vmem:[#allocation3 + $0x2f8] sm:$0xff]
        %v1061 = vld [vmem:[#allocation3 + $0x300] sm:$0xff]
        %v1062 = vld [vmem:[#allocation3 + $0x308] sm:$0xff]
        %v1063 = vld [vmem:[#allocation3 + $0x310] sm:$0xff]
        %v1064 = vld [vmem:[#allocation3 + $0x318] sm:$0xff]
        %v1065 = vld [vmem:[#allocation3 + $0x320] sm:$0xff]
        %v1066 = vld [vmem:[#allocation3 + $0x328] sm:$0xff]
        %v1067 = vld [vmem:[#allocation3 + $0x330] sm:$0xff]
        %v1068 = vld [vmem:[#allocation3 + $0x338] sm:$0xff]
        %v1069 = vld [vmem:[#allocation3 + $0x340] sm:$0xff]
        %v1070 = vld [vmem:[#allocation3 + $0x348] sm:$0xff]
        %v1071 = vld [vmem:[#allocation3 + $0x350] sm:$0xff]
        %v1072 = vld [vmem:[#allocation3 + $0x358] sm:$0xff]
        %v1073 = vld [vmem:[#allocation3 + $0x360] sm:$0xff]
        %v1074 = vld [vmem:[#allocation3 + $0x368] sm:$0xff]
        %v1075 = vld [vmem:[#allocation3 + $0x370] sm:$0xff]
        %v1076 = vld [vmem:[#allocation3 + $0x378] sm:$0xff]
        %v1077 = vld [vmem:[#allocation3 + $0x380] sm:$0xff]
        %v1078 = vld [vmem:[#allocation3 + $0x388] sm:$0xff]
        %v1079 = vld [vmem:[#allocation3 + $0x390] sm:$0xff]
        %v1080 = vld [vmem:[#allocation3 + $0x398] sm:$0xff]
        %v1081 = vld [vmem:[#allocation3 + $0x3a0] sm:$0xff]
        %v1082 = vld [vmem:[#allocation3 + $0x3a8] sm:$0xff]
        %v1083 = vld [vmem:[#allocation3 + $0x3b0] sm:$0xff]
        %v1084 = vld [vmem:[#allocation3 + $0x3b8] sm:$0xff]
        %v1085 = vld [vmem:[#allocation3 + $0x3c0] sm:$0xff]
        %v1086 = vld [vmem:[#allocation3 + $0x3c8] sm:$0xff]
        %v1087 = vld [vmem:[#allocation3 + $0x3d0] sm:$0xff]
        %v1088 = vld [vmem:[#allocation3 + $0x3d8] sm:$0xff]
        %v1089 = vld [vmem:[#allocation3 + $0x3e0] sm:$0xff]
        %v1090 = vld [vmem:[#allocation3 + $0x3e8] sm:$0xff]
        %v1091 = vld [vmem:[#allocation3 + $0x3f0] sm:$0xff]
        %v1092 = vld [vmem:[#allocation3 + $0x3f8] sm:$0xff]
        %v1093 = vld [vmem:[#allocation3 + $0x400] sm:$0xff]
        %v1094 = vld [vmem:[#allocation3 + $0x408] sm:$0xff]
        %v1095 = vld [vmem:[#allocation3 + $0x410] sm:$0xff]
        %v1096 = vld [vmem:[#allocation3 + $0x418] sm:$0xff]
        %v1097 = vld [vmem:[#allocation3 + $0x420] sm:$0xff]
        %v1098 = vld [vmem:[#allocation3 + $0x428] sm:$0xff]
        %v1099 = vld [vmem:[#allocation3 + $0x430] sm:$0xff]
        %v1100 = vld [vmem:[#allocation3 + $0x438] sm:$0xff]
        %v1101 = vld [vmem:[#allocation3 + $0x440] sm:$0xff]
        %v1102 = vld [vmem:[#allocation3 + $0x448] sm:$0xff]
        %v1103 = vld [vmem:[#allocation3 + $0x450] sm:$0xff]
        %v1104 = vld [vmem:[#allocation3 + $0x458] sm:$0xff]
        %v1105 = vld [vmem:[#allocation3 + $0x460] sm:$0xff]
        %v1106 = vld [vmem:[#allocation3 + $0x468] sm:$0xff]
        %v1107 = vld [vmem:[#allocation3 + $0x470] sm:$0xff]
        %v1108 = vld [vmem:[#allocation3 + $0x478] sm:$0xff]
        %v1109 = vld [vmem:[#allocation3 + $0x480] sm:$0xff]
        %v1110 = vld [vmem:[#allocation3 + $0x488] sm:$0xff]
        %v1111 = vld [vmem:[#allocation3 + $0x490] sm:$0xff]
        %v1112 = vld [vmem:[#allocation3 + $0x498] sm:$0xff]
        %v1113 = vld [vmem:[#allocation3 + $0x4a0] sm:$0xff]
        %v1114 = vld [vmem:[#allocation3 + $0x4a8] sm:$0xff]
        %v1115 = vld [vmem:[#allocation3 + $0x4b0] sm:$0xff]
        %v1116 = vld [vmem:[#allocation3 + $0x4b8] sm:$0xff]
        %v1117 = vld [vmem:[#allocation3 + $0x4c0] sm:$0xff]
        %v1118 = vld [vmem:[#allocation3 + $0x4c8] sm:$0xff]
        %v1119 = vld [vmem:[#allocation3 + $0x4d0] sm:$0xff]
        %v1120 = vld [vmem:[#allocation3 + $0x4d8] sm:$0xff]
        %v1121 = vld [vmem:[#allocation3 + $0x4e0] sm:$0xff]
        %v1122 = vld [vmem:[#allocation3 + $0x4e8] sm:$0xff]
        %v1123 = vld [vmem:[#allocation3 + $0x4f0] sm:$0xff]
        %v1124 = vld [vmem:[#allocation3 + $0x4f8] sm:$0xff]
        %v1125 = vld [vmem:[#allocation3 + $0x500] sm:$0xff]
        %v1126 = vld [vmem:[#allocation3 + $0x508] sm:$0xff]
        %v1127 = vld [vmem:[#allocation3 + $0x510] sm:$0xff]
        %v1128 = vld [vmem:[#allocation3 + $0x518] sm:$0xff]
        %v1129 = vld [vmem:[#allocation3 + $0x520] sm:$0xff]
        %v1130 = vld [vmem:[#allocation3 + $0x528] sm:$0xff]
        %v1131 = vld [vmem:[#allocation3 + $0x530] sm:$0xff]
        %v1132 = vld [vmem:[#allocation3 + $0x538] sm:$0xff]
        %v1133 = vld [vmem:[#allocation3 + $0x540] sm:$0xff]
        %v1134 = vld [vmem:[#allocation3 + $0x548] sm:$0xff]
        %v1135 = vld [vmem:[#allocation3 + $0x550] sm:$0xff]
        %v1136 = vld [vmem:[#allocation3 + $0x558] sm:$0xff]
        %v1137 = vld [vmem:[#allocation3 + $0x560] sm:$0xff]
        %v1138 = vld [vmem:[#allocation3 + $0x568] sm:$0xff]
        %v1139 = vld [vmem:[#allocation3 + $0x570] sm:$0xff]
        %v1140 = vld [vmem:[#allocation3 + $0x578] sm:$0xff]
        %v1141 = vld [vmem:[#allocation3 + $0x580] sm:$0xff]
        %v1142 = vld [vmem:[#allocation3 + $0x588] sm:$0xff]
        %v1143 = vld [vmem:[#allocation3 + $0x590] sm:$0xff]
        %v1144 = vld [vmem:[#allocation3 + $0x598] sm:$0xff]
        %v1145 = vld [vmem:[#allocation3 + $0x5a0] sm:$0xff]
        %v1146 = vld [vmem:[#allocation3 + $0x5a8] sm:$0xff]
        %v1147 = vld [vmem:[#allocation3 + $0x5b0] sm:$0xff]
        %v1148 = vld [vmem:[#allocation3 + $0x5b8] sm:$0xff]
        %v1149 = vld [vmem:[#allocation3 + $0x5c0] sm:$0xff]
        %v1150 = vld [vmem:[#allocation3 + $0x5c8] sm:$0xff]
        %v1151 = vld [vmem:[#allocation3 + $0x5d0] sm:$0xff]
        %v1152 = vld [vmem:[#allocation3 + $0x5d8] sm:$0xff]
        %v1153 = vld [vmem:[#allocation3 + $0x5e0] sm:$0xff]
        %v1154 = vld [vmem:[#allocation3 + $0x5e8] sm:$0xff]
        %v1155 = vld [vmem:[#allocation3 + $0x5f0] sm:$0xff]
        %v1156 = vld [vmem:[#allocation3 + $0x5f8] sm:$0xff]
        %v1157 = vld [vmem:[#allocation3 + $0x600] sm:$0xff]
        %v1158 = vld [vmem:[#allocation3 + $0x608] sm:$0xff]
        %v1159 = vld [vmem:[#allocation3 + $0x610] sm:$0xff]
        %v1160 = vld [vmem:[#allocation3 + $0x618] sm:$0xff]
        %v1161 = vld [vmem:[#allocation3 + $0x620] sm:$0xff]
        %v1162 = vld [vmem:[#allocation3 + $0x628] sm:$0xff]
        %v1163 = vld [vmem:[#allocation3 + $0x630] sm:$0xff]
        %v1164 = vld [vmem:[#allocation3 + $0x638] sm:$0xff]
        %v1165 = vld [vmem:[#allocation3 + $0x640] sm:$0xff]
        %v1166 = vld [vmem:[#allocation3 + $0x648] sm:$0xff]
        %v1167 = vld [vmem:[#allocation3 + $0x650] sm:$0xff]
        %v1168 = vld [vmem:[#allocation3 + $0x658] sm:$0xff]
        %v1169 = vld [vmem:[#allocation3 + $0x660] sm:$0xff]
        %v1170 = vld [vmem:[#allocation3 + $0x668] sm:$0xff]
        %v1171 = vld [vmem:[#allocation3 + $0x670] sm:$0xff]
        %v1172 = vld [vmem:[#allocation3 + $0x678] sm:$0xff]
        %v1173 = vld [vmem:[#allocation3 + $0x680] sm:$0xff]
        %v1174 = vld [vmem:[#allocation3 + $0x688] sm:$0xff]
        %v1175 = vld [vmem:[#allocation3 + $0x690] sm:$0xff]
        %v1176 = vld [vmem:[#allocation3 + $0x698] sm:$0xff]
        %v1177 = vld [vmem:[#allocation3 + $0x6a0] sm:$0xff]
        %v1178 = vld [vmem:[#allocation3 + $0x6a8] sm:$0xff]
        %v1179 = vld [vmem:[#allocation3 + $0x6b0] sm:$0xff]
        %v1180 = vld [vmem:[#allocation3 + $0x6b8] sm:$0xff]
        %v1181 = vld [vmem:[#allocation3 + $0x6c0] sm:$0xff]
        %v1182 = vld [vmem:[#allocation3 + $0x6c8] sm:$0xff]
        %v1183 = vld [vmem:[#allocation3 + $0x6d0] sm:$0xff]
        %v1184 = vld [vmem:[#allocation3 + $0x6d8] sm:$0xff]
        %v1185 = vld [vmem:[#allocation3 + $0x6e0] sm:$0xff]
        %v1186 = vld [vmem:[#allocation3 + $0x6e8] sm:$0xff]
        %v1187 = vld [vmem:[#allocation3 + $0x6f0] sm:$0xff]
        %v1188 = vld [vmem:[#allocation3 + $0x6f8] sm:$0xff]
        %v1189 = vld [vmem:[#allocation3 + $0x700] sm:$0xff]
        %v1190 = vld [vmem:[#allocation3 + $0x708] sm:$0xff]
        %v1191 = vld [vmem:[#allocation3 + $0x710] sm:$0xff]
        %v1192 = vld [vmem:[#allocation3 + $0x718] sm:$0xff]
        %v1193 = vld [vmem:[#allocation3 + $0x720] sm:$0xff]
        %v1194 = vld [vmem:[#allocation3 + $0x728] sm:$0xff]
        %v1195 = vld [vmem:[#allocation3 + $0x730] sm:$0xff]
        %v1196 = vld [vmem:[#allocation3 + $0x738] sm:$0xff]
        %v1197 = vld [vmem:[#allocation3 + $0x740] sm:$0xff]
        %v1198 = vld [vmem:[#allocation3 + $0x748] sm:$0xff]
        %v1199 = vld [vmem:[#allocation3 + $0x750] sm:$0xff]
        %v1200 = vld [vmem:[#allocation3 + $0x758] sm:$0xff]
        %v1201 = vld [vmem:[#allocation3 + $0x760] sm:$0xff]
        %v1202 = vld [vmem:[#allocation3 + $0x768] sm:$0xff]
        %v1203 = vld [vmem:[#allocation3 + $0x770] sm:$0xff]
        %v1204 = vld [vmem:[#allocation3 + $0x778] sm:$0xff]
        %v1205 = vld [vmem:[#allocation3 + $0x780] sm:$0xff]
        %v1206 = vld [vmem:[#allocation3 + $0x788] sm:$0xff]
        %v1207 = vld [vmem:[#allocation3 + $0x790] sm:$0xff]
        %v1208 = vld [vmem:[#allocation3 + $0x798] sm:$0xff]
        %v1209 = vld [vmem:[#allocation3 + $0x7a0] sm:$0xff]
        %v1210 = vld [vmem:[#allocation3 + $0x7a8] sm:$0xff]
        %v1211 = vld [vmem:[#allocation3 + $0x7b0] sm:$0xff]
        %v1212 = vld [vmem:[#allocation3 + $0x7b8] sm:$0xff]
        %v1213 = vld [vmem:[#allocation3 + $0x7c0] sm:$0xff]
        %v1214 = vld [vmem:[#allocation3 + $0x7c8] sm:$0xff]
        %v1215 = vld [vmem:[#allocation3 + $0x7d0] sm:$0xff]
        %v1216 = vld [vmem:[#allocation3 + $0x7d8] sm:$0xff]
        %v1217 = vld [vmem:[#allocation3 + $0x7e0] sm:$0xff]
        %v1218 = vld [vmem:[#allocation3 + $0x7e8] sm:$0xff]
        %v1219 = vld [vmem:[#allocation3 + $0x7f0] sm:$0xff]
        %v1220 = vld [vmem:[#allocation3 + $0x7f8] sm:$0xff]
        %v1221 = vld [vmem:[#allocation3 + $0x800] sm:$0xff]
        %v1222 = vld [vmem:[#allocation3 + $0x808] sm:$0xff]
        %v1223 = vld [vmem:[#allocation3 + $0x810] sm:$0xff]
        %v1224 = vld [vmem:[#allocation3 + $0x818] sm:$0xff]
        %v1225 = vld [vmem:[#allocation3 + $0x820] sm:$0xff]
        %v1226 = vld [vmem:[#allocation3 + $0x828] sm:$0xff]
        %v1227 = vld [vmem:[#allocation3 + $0x830] sm:$0xff]
        %v1228 = vld [vmem:[#allocation3 + $0x838] sm:$0xff]
        %v1229 = vld [vmem:[#allocation3 + $0x840] sm:$0xff]
        %v1230 = vld [vmem:[#allocation3 + $0x848] sm:$0xff]
        %v1231 = vld [vmem:[#allocation3 + $0x850] sm:$0xff]
        %v1232 = vld [vmem:[#allocation3 + $0x858] sm:$0xff]
        %v1233 = vld [vmem:[#allocation3 + $0x860] sm:$0xff]
        %v1234 = vld [vmem:[#allocation3 + $0x868] sm:$0xff]
        %v1235 = vld [vmem:[#allocation3 + $0x870] sm:$0xff]
        %v1236 = vld [vmem:[#allocation3 + $0x878] sm:$0xff]
        %v1237 = vld [vmem:[#allocation3 + $0x880] sm:$0xff]
        %v1238 = vld [vmem:[#allocation3 + $0x888] sm:$0xff]
        %v1239 = vld [vmem:[#allocation3 + $0x890] sm:$0xff]
        %v1240 = vld [vmem:[#allocation3 + $0x898] sm:$0xff]
        %v1241 = vld [vmem:[#allocation3 + $0x8a0] sm:$0xff]
        %v1242 = vld [vmem:[#allocation3 + $0x8a8] sm:$0xff]
        %v1243 = vld [vmem:[#allocation3 + $0x8b0] sm:$0xff]
        %v1244 = vld [vmem:[#allocation3 + $0x8b8] sm:$0xff]
        %v1245 = vld [vmem:[#allocation3 + $0x8c0] sm:$0xff]
        %v1246 = vld [vmem:[#allocation3 + $0x8c8] sm:$0xff]
        %v1247 = vld [vmem:[#allocation3 + $0x8d0] sm:$0xff]
        %v1248 = vld [vmem:[#allocation3 + $0x8d8] sm:$0xff]
        %v1249 = vld [vmem:[#allocation3 + $0x8e0] sm:$0xff]
        %v1250 = vld [vmem:[#allocation3 + $0x8e8] sm:$0xff]
        %v1251 = vld [vmem:[#allocation3 + $0x8f0] sm:$0xff]
        %v1252 = vld [vmem:[#allocation3 + $0x8f8] sm:$0xff]
        %v1253 = vld [vmem:[#allocation7] sm:$0xff]
        %v1254 = vld [vmem:[#allocation7 + $0x8] sm:$0xff]
        %v1255 = vld [vmem:[#allocation7 + $0x10] sm:$0xff]
        %v1256 = vld [vmem:[#allocation7 + $0x18] sm:$0xff]
        %v1257 = vld [vmem:[#allocation7 + $0x20] sm:$0xff]
        %v1258 = vld [vmem:[#allocation7 + $0x28] sm:$0xff]
        %v1259 = vld [vmem:[#allocation7 + $0x30] sm:$0xff]
        %v1260 = vld [vmem:[#allocation7 + $0x38] sm:$0xff]
        %v1261 = vld [vmem:[#allocation7 + $0x40] sm:$0xff]
        %v1262 = vld [vmem:[#allocation7 + $0x48] sm:$0xff]
        %v1263 = vld [vmem:[#allocation7 + $0x50] sm:$0xff]
        %v1264 = vld [vmem:[#allocation7 + $0x58] sm:$0xff]
        %v1265 = vld [vmem:[#allocation7 + $0x60] sm:$0xff]
        %v1266 = vld [vmem:[#allocation7 + $0x68] sm:$0xff]
        %v1267 = vld [vmem:[#allocation7 + $0x70] sm:$0xff]
        %v1268 = vld [vmem:[#allocation7 + $0x78] sm:$0xff]
        %v1269 = vld [vmem:[#allocation7 + $0x80] sm:$0xff]
        %v1270 = vld [vmem:[#allocation7 + $0x88] sm:$0xff]
        %v1271 = vld [vmem:[#allocation7 + $0x90] sm:$0xff]
        %v1272 = vld [vmem:[#allocation7 + $0x98] sm:$0xff]
        %v1273 = vld [vmem:[#allocation7 + $0xa0] sm:$0xff]
        %v1274 = vld [vmem:[#allocation7 + $0xa8] sm:$0xff]
        %v1275 = vld [vmem:[#allocation7 + $0xb0] sm:$0xff]
        %v1276 = vld [vmem:[#allocation7 + $0xb8] sm:$0xff]
        %v1277 = vld [vmem:[#allocation7 + $0xc0] sm:$0xff]
        %v1278 = vld [vmem:[#allocation7 + $0xc8] sm:$0xff]
        %v1279 = vld [vmem:[#allocation7 + $0xd0] sm:$0xff]
        %v1280 = vld [vmem:[#allocation7 + $0xd8] sm:$0xff]
        %v1281 = vld [vmem:[#allocation7 + $0xe0] sm:$0xff]
        %v1282 = vld [vmem:[#allocation7 + $0xe8] sm:$0xff]
        %v1283 = vld [vmem:[#allocation7 + $0xf0] sm:$0xff]
        %v1284 = vld [vmem:[#allocation7 + $0xf8] sm:$0xff]
        %v1285 = vld [vmem:[#allocation7 + $0x100] sm:$0xff]
        %v1286 = vld [vmem:[#allocation7 + $0x108] sm:$0xff]
        %v1287 = vld [vmem:[#allocation7 + $0x110] sm:$0xff]
        %v1288 = vld [vmem:[#allocation7 + $0x118] sm:$0xff]
        %v1289 = vld [vmem:[#allocation7 + $0x120] sm:$0xff]
        %v1290 = vld [vmem:[#allocation7 + $0x128] sm:$0xff]
        %v1291 = vld [vmem:[#allocation7 + $0x130] sm:$0xff]
        %v1292 = vld [vmem:[#allocation7 + $0x138] sm:$0xff]
        %v1293 = vld [vmem:[#allocation7 + $0x140] sm:$0xff]
        %v1294 = vld [vmem:[#allocation7 + $0x148] sm:$0xff]
        %v1295 = vld [vmem:[#allocation7 + $0x150] sm:$0xff]
        %v1296 = vld [vmem:[#allocation7 + $0x158] sm:$0xff]
        %v1297 = vld [vmem:[#allocation7 + $0x160] sm:$0xff]
        %v1298 = vld [vmem:[#allocation7 + $0x168] sm:$0xff]
        %v1299 = vld [vmem:[#allocation7 + $0x170] sm:$0xff]
        %v1300 = vld [vmem:[#allocation7 + $0x178] sm:$0xff]
        %v1301 = vld [vmem:[#allocation7 + $0x180] sm:$0xff]
        %v1302 = vld [vmem:[#allocation7 + $0x188] sm:$0xff]
        %v1303 = vld [vmem:[#allocation7 + $0x190] sm:$0xff]
        %v1304 = vld [vmem:[#allocation7 + $0x198] sm:$0xff]
        %v1305 = vld [vmem:[#allocation7 + $0x1a0] sm:$0xff]
        %v1306 = vld [vmem:[#allocation7 + $0x1a8] sm:$0xff]
        %v1307 = vld [vmem:[#allocation7 + $0x1b0] sm:$0xff]
        %v1308 = vld [vmem:[#allocation7 + $0x1b8] sm:$0xff]
        %v1309 = vld [vmem:[#allocation7 + $0x1c0] sm:$0xff]
        %v1310 = vld [vmem:[#allocation7 + $0x1c8] sm:$0xff]
        %v1311 = vld [vmem:[#allocation7 + $0x1d0] sm:$0xff]
        %v1312 = vld [vmem:[#allocation7 + $0x1d8] sm:$0xff]
        %v1313 = vld [vmem:[#allocation7 + $0x1e0] sm:$0xff]
        %v1314 = vld [vmem:[#allocation7 + $0x1e8] sm:$0xff]
        %v1315 = vld [vmem:[#allocation7 + $0x1f0] sm:$0xff]
        %v1316 = vld [vmem:[#allocation7 + $0x1f8] sm:$0xff]
        %v1317 = vld [vmem:[#allocation7 + $0x200] sm:$0xff]
        %v1318 = vld [vmem:[#allocation7 + $0x208] sm:$0xff]
        %v1319 = vld [vmem:[#allocation7 + $0x210] sm:$0xff]
        %v1320 = vld [vmem:[#allocation7 + $0x218] sm:$0xff]
        %v1321 = vld [vmem:[#allocation7 + $0x220] sm:$0xff]
        %v1322 = vld [vmem:[#allocation7 + $0x228] sm:$0xff]
        %v1323 = vld [vmem:[#allocation7 + $0x230] sm:$0xff]
        %v1324 = vld [vmem:[#allocation7 + $0x238] sm:$0xff]
        %v1325 = vld [vmem:[#allocation7 + $0x240] sm:$0xff]
        %v1326 = vld [vmem:[#allocation7 + $0x248] sm:$0xff]
        %v1327 = vld [vmem:[#allocation7 + $0x250] sm:$0xff]
        %v1328 = vld [vmem:[#allocation7 + $0x258] sm:$0xff]
        %v1329 = vld [vmem:[#allocation7 + $0x260] sm:$0xff]
        %v1330 = vld [vmem:[#allocation7 + $0x268] sm:$0xff]
        %v1331 = vld [vmem:[#allocation7 + $0x270] sm:$0xff]
        %v1332 = vld [vmem:[#allocation7 + $0x278] sm:$0xff]
        %v1333 = vld [vmem:[#allocation7 + $0x280] sm:$0xff]
        %v1334 = vld [vmem:[#allocation7 + $0x288] sm:$0xff]
        %v1335 = vld [vmem:[#allocation7 + $0x290] sm:$0xff]
        %v1336 = vld [vmem:[#allocation7 + $0x298] sm:$0xff]
        %v1337 = vld [vmem:[#allocation7 + $0x2a0] sm:$0xff]
        %v1338 = vld [vmem:[#allocation7 + $0x2a8] sm:$0xff]
        %v1339 = vld [vmem:[#allocation7 + $0x2b0] sm:$0xff]
        %v1340 = vld [vmem:[#allocation7 + $0x2b8] sm:$0xff]
        %v1341 = vld [vmem:[#allocation7 + $0x2c0] sm:$0xff]
        %v1342 = vld [vmem:[#allocation7 + $0x2c8] sm:$0xff]
        %v1343 = vld [vmem:[#allocation7 + $0x2d0] sm:$0xff]
        %v1344 = vld [vmem:[#allocation7 + $0x2d8] sm:$0xff]
        %v1345 = vld [vmem:[#allocation7 + $0x2e0] sm:$0xff]
        %v1346 = vld [vmem:[#allocation7 + $0x2e8] sm:$0xff]
        %v1347 = vld [vmem:[#allocation7 + $0x2f0] sm:$0xff]
        %v1348 = vld [vmem:[#allocation7 + $0x2f8] sm:$0xff]
        %v1349 = vld [vmem:[#allocation7 + $0x300] sm:$0xff]
        %v1350 = vld [vmem:[#allocation7 + $0x308] sm:$0xff]
        %v1351 = vld [vmem:[#allocation7 + $0x310] sm:$0xff]
        %v1352 = vld [vmem:[#allocation7 + $0x318] sm:$0xff]
        %v1353 = vld [vmem:[#allocation7 + $0x320] sm:$0xff]
        %v1354 = vld [vmem:[#allocation7 + $0x328] sm:$0xff]
        %v1355 = vld [vmem:[#allocation7 + $0x330] sm:$0xff]
        %v1356 = vld [vmem:[#allocation7 + $0x338] sm:$0xff]
        %v1357 = vld [vmem:[#allocation7 + $0x340] sm:$0xff]
        %v1358 = vld [vmem:[#allocation7 + $0x348] sm:$0xff]
        %v1359 = vld [vmem:[#allocation7 + $0x350] sm:$0xff]
        %v1360 = vld [vmem:[#allocation7 + $0x358] sm:$0xff]
        %v1361 = vld [vmem:[#allocation7 + $0x360] sm:$0xff]
        %v1362 = vld [vmem:[#allocation7 + $0x368] sm:$0xff]
        %v1363 = vld [vmem:[#allocation7 + $0x370] sm:$0xff]
        %v1364 = vld [vmem:[#allocation7 + $0x378] sm:$0xff]
        %v1365 = vld [vmem:[#allocation7 + $0x380] sm:$0xff]
        %v1366 = vld [vmem:[#allocation7 + $0x388] sm:$0xff]
        %v1367 = vld [vmem:[#allocation7 + $0x390] sm:$0xff]
        %v1368 = vld [vmem:[#allocation7 + $0x398] sm:$0xff]
        %v1369 = vld [vmem:[#allocation7 + $0x3a0] sm:$0xff]
        %v1370 = vld [vmem:[#allocation7 + $0x3a8] sm:$0xff]
        %v1371 = vld [vmem:[#allocation7 + $0x3b0] sm:$0xff]
        %v1372 = vld [vmem:[#allocation7 + $0x3b8] sm:$0xff]
        %v1373 = vld [vmem:[#allocation7 + $0x3c0] sm:$0xff]
        %v1374 = vld [vmem:[#allocation7 + $0x3c8] sm:$0xff]
        %v1375 = vld [vmem:[#allocation7 + $0x3d0] sm:$0xff]
        %v1376 = vld [vmem:[#allocation7 + $0x3d8] sm:$0xff]
        %v1377 = vld [vmem:[#allocation7 + $0x3e0] sm:$0xff]
        %v1378 = vld [vmem:[#allocation7 + $0x3e8] sm:$0xff]
        %v1379 = vld [vmem:[#allocation7 + $0x3f0] sm:$0xff]
        %v1380 = vld [vmem:[#allocation7 + $0x3f8] sm:$0xff]
        %v1381 = vld [vmem:[#allocation7 + $0x400] sm:$0xff]
        %v1382 = vld [vmem:[#allocation7 + $0x408] sm:$0xff]
        %v1383 = vld [vmem:[#allocation7 + $0x410] sm:$0xff]
        %v1384 = vld [vmem:[#allocation7 + $0x418] sm:$0xff]
        %v1385 = vld [vmem:[#allocation7 + $0x420] sm:$0xff]
        %v1386 = vld [vmem:[#allocation7 + $0x428] sm:$0xff]
        %v1387 = vld [vmem:[#allocation7 + $0x430] sm:$0xff]
        %v1388 = vld [vmem:[#allocation7 + $0x438] sm:$0xff]
        %v1389 = vld [vmem:[#allocation7 + $0x440] sm:$0xff]
        %v1390 = vld [vmem:[#allocation7 + $0x448] sm:$0xff]
        %v1391 = vld [vmem:[#allocation7 + $0x450] sm:$0xff]
        %v1392 = vld [vmem:[#allocation7 + $0x458] sm:$0xff]
        %v1393 = vld [vmem:[#allocation7 + $0x460] sm:$0xff]
        %v1394 = vld [vmem:[#allocation7 + $0x468] sm:$0xff]
        %v1395 = vld [vmem:[#allocation7 + $0x470] sm:$0xff]
        %v1396 = vld [vmem:[#allocation7 + $0x478] sm:$0xff]
        %v1397 = vld [vmem:[%s2] sm:$0x1]
        %v1399 = vperm.slane %v1397, 0
        %1401 = vmatpush.msra.mxu0 %v1268
        %1402 = vmatpush.msra.mxu0 %v1267
        %1403 = vmatpush.msra.mxu0 %v1266
        %1404 = vmatpush.msra.mxu0 %v1265
        %1405 = vmatpush.msra.mxu0 %v1264
        %1406 = vmatpush.msra.mxu0 %v1263
        %1407 = vmatpush.msra.mxu0 %v1262
        %1408 = vmatpush.msra.mxu0 %v1261
        %1409 = vmatpush.msra.mxu0 %v1260
        %1410 = vmatpush.msra.mxu0 %v1259
        %1411 = vmatpush.msra.mxu0 %v1258
        %1412 = vmatpush.msra.mxu0 %v1257
        %1413 = vmatpush.msra.mxu0 %v1256
        %1414 = vmatpush.msra.mxu0 %v1255
        %1415 = vmatpush.msra.mxu0 %v1254
        %1416 = vmatpush.msra.mxu0 %v1253
        %1417 = vmatmul.f32.gmra.mxu0 %v965
        %v1418 = vpop.f32.mrf.mxu0
        %v1419 = vadd.f32 %v1399, %v1418
        %1420 = vmatmul.f32.gmra.mxu0 %v974
        %v1421 = vpop.f32.mrf.mxu0
        %v1422 = vadd.f32 %v1399, %v1421
        %1423 = vmatmul.f32.gmra.mxu0 %v983
        %v1424 = vpop.f32.mrf.mxu0
        %v1425 = vadd.f32 %v1399, %v1424
        %1426 = vmatmul.f32.gmra.mxu0 %v992
        %v1427 = vpop.f32.mrf.mxu0
        %v1428 = vadd.f32 %v1399, %v1427
        %1429 = vmatmul.f32.gmra.mxu0 %v1001
        %v1430 = vpop.f32.mrf.mxu0
        %v1431 = vadd.f32 %v1399, %v1430
        %1432 = vmatmul.f32.gmra.mxu0 %v1010
        %v1433 = vpop.f32.mrf.mxu0
        %v1434 = vadd.f32 %v1399, %v1433
        %1435 = vmatmul.f32.gmra.mxu0 %v1019
        %v1436 = vpop.f32.mrf.mxu0
        %v1437 = vadd.f32 %v1399, %v1436
        %1438 = vmatmul.f32.gmra.mxu0 %v1028
        %v1439 = vpop.f32.mrf.mxu0
        %v1440 = vadd.f32 %v1399, %v1439
        %1441 = vmatmul.f32.gmra.mxu0 %v1037
        %v1442 = vpop.f32.mrf.mxu0
        %v1443 = vadd.f32 %v1399, %v1442
        %1444 = vmatmul.f32.gmra.mxu0 %v1046
        %v1445 = vpop.f32.mrf.mxu0
        %v1446 = vadd.f32 %v1399, %v1445
        %1447 = vmatmul.f32.gmra.mxu0 %v1055
        %v1448 = vpop.f32.mrf.mxu0
        %v1449 = vadd.f32 %v1399, %v1448
        %1450 = vmatmul.f32.gmra.mxu0 %v1064
        %v1451 = vpop.f32.mrf.mxu0
        %v1452 = vadd.f32 %v1399, %v1451
        %1453 = vmatmul.f32.gmra.mxu0 %v1073
        %v1454 = vpop.f32.mrf.mxu0
        %v1455 = vadd.f32 %v1399, %v1454
        %1456 = vmatmul.f32.gmra.mxu0 %v1082
        %v1457 = vpop.f32.mrf.mxu0
        %v1458 = vadd.f32 %v1399, %v1457
        %1459 = vmatmul.f32.gmra.mxu0 %v1091
        %v1460 = vpop.f32.mrf.mxu0
        %v1461 = vadd.f32 %v1399, %v1460
        %1462 = vmatmul.f32.gmra.mxu0 %v1100
        %v1463 = vpop.f32.mrf.mxu0
        %v1464 = vadd.f32 %v1399, %v1463
        %1465 = vmatmul.f32.gmra.mxu0 %v1109
        %v1466 = vpop.f32.mrf.mxu0
        %v1467 = vadd.f32 %v1399, %v1466
        %1468 = vmatmul.f32.gmra.mxu0 %v1118
        %v1469 = vpop.f32.mrf.mxu0
        %v1470 = vadd.f32 %v1399, %v1469
        %1471 = vmatmul.f32.gmra.mxu0 %v1127
        %v1472 = vpop.f32.mrf.mxu0
        %v1473 = vadd.f32 %v1399, %v1472
        %1474 = vmatmul.f32.gmra.mxu0 %v1136
        %v1475 = vpop.f32.mrf.mxu0
        %v1476 = vadd.f32 %v1399, %v1475
        %1477 = vmatmul.f32.gmra.mxu0 %v1145
        %v1478 = vpop.f32.mrf.mxu0
        %v1479 = vadd.f32 %v1399, %v1478
        %1480 = vmatmul.f32.gmra.mxu0 %v1154
        %v1481 = vpop.f32.mrf.mxu0
        %v1482 = vadd.f32 %v1399, %v1481
        %1483 = vmatmul.f32.gmra.mxu0 %v1163
        %v1484 = vpop.f32.mrf.mxu0
        %v1485 = vadd.f32 %v1399, %v1484
        %1486 = vmatmul.f32.gmra.mxu0 %v1172
        %v1487 = vpop.f32.mrf.mxu0
        %v1488 = vadd.f32 %v1399, %v1487
        %1489 = vmatmul.f32.gmra.mxu0 %v1181
        %v1490 = vpop.f32.mrf.mxu0
        %v1491 = vadd.f32 %v1399, %v1490
        %1492 = vmatmul.f32.gmra.mxu0 %v1190
        %v1493 = vpop.f32.mrf.mxu0
        %v1494 = vadd.f32 %v1399, %v1493
        %1495 = vmatmul.f32.gmra.mxu0 %v1199
        %v1496 = vpop.f32.mrf.mxu0
        %v1497 = vadd.f32 %v1399, %v1496
        %1498 = vmatmul.f32.gmra.mxu0 %v1208
        %v1499 = vpop.f32.mrf.mxu0
        %v1500 = vadd.f32 %v1399, %v1499
        %1501 = vmatmul.f32.gmra.mxu0 %v1217
        %v1502 = vpop.f32.mrf.mxu0
        %v1503 = vadd.f32 %v1399, %v1502
        %1504 = vmatmul.f32.gmra.mxu0 %v1226
        %v1505 = vpop.f32.mrf.mxu0
        %v1506 = vadd.f32 %v1399, %v1505
        %1507 = vmatmul.f32.gmra.mxu0 %v1235
        %v1508 = vpop.f32.mrf.mxu0
        %v1509 = vadd.f32 %v1399, %v1508
        %1510 = vmatmul.f32.gmra.mxu0 %v1244
        %v1511 = vpop.f32.mrf.mxu0
        %v1512 = vadd.f32 %v1399, %v1511
        %1513 = vdwg.mxu0
        %1514 = vmatpush.msra.mxu0 %v1284
        %1515 = vmatpush.msra.mxu0 %v1283
        %1516 = vmatpush.msra.mxu0 %v1282
        %1517 = vmatpush.msra.mxu0 %v1281
        %1518 = vmatpush.msra.mxu0 %v1280
        %1519 = vmatpush.msra.mxu0 %v1279
        %1520 = vmatpush.msra.mxu0 %v1278
        %1521 = vmatpush.msra.mxu0 %v1277
        %1522 = vmatpush.msra.mxu0 %v1276
        %1523 = vmatpush.msra.mxu0 %v1275
        %1524 = vmatpush.msra.mxu0 %v1274
        %1525 = vmatpush.msra.mxu0 %v1273
        %1526 = vmatpush.msra.mxu0 %v1272
        %1527 = vmatpush.msra.mxu0 %v1271
        %1528 = vmatpush.msra.mxu0 %v1270
        %1529 = vmatpush.msra.mxu0 %v1269
        %1530 = vmatmul.f32.gmra.mxu0 %v966
        %v1531 = vpop.f32.mrf.mxu0
        %v1532 = vadd.f32 %v1419, %v1531
        %1533 = vmatmul.f32.gmra.mxu0 %v975
        %v1534 = vpop.f32.mrf.mxu0
        %v1535 = vadd.f32 %v1422, %v1534
        %1536 = vmatmul.f32.gmra.mxu0 %v984
        %v1537 = vpop.f32.mrf.mxu0
        %v1538 = vadd.f32 %v1425, %v1537
        %1539 = vmatmul.f32.gmra.mxu0 %v993
        %v1540 = vpop.f32.mrf.mxu0
        %v1541 = vadd.f32 %v1428, %v1540
        %1542 = vmatmul.f32.gmra.mxu0 %v1002
        %v1543 = vpop.f32.mrf.mxu0
        %v1544 = vadd.f32 %v1431, %v1543
        %1545 = vmatmul.f32.gmra.mxu0 %v1011
        %v1546 = vpop.f32.mrf.mxu0
        %v1547 = vadd.f32 %v1434, %v1546
        %1548 = vmatmul.f32.gmra.mxu0 %v1020
        %v1549 = vpop.f32.mrf.mxu0
        %v1550 = vadd.f32 %v1437, %v1549
        %1551 = vmatmul.f32.gmra.mxu0 %v1029
        %v1552 = vpop.f32.mrf.mxu0
        %v1553 = vadd.f32 %v1440, %v1552
        %1554 = vmatmul.f32.gmra.mxu0 %v1038
        %v1555 = vpop.f32.mrf.mxu0
        %v1556 = vadd.f32 %v1443, %v1555
        %1557 = vmatmul.f32.gmra.mxu0 %v1047
        %v1558 = vpop.f32.mrf.mxu0
        %v1559 = vadd.f32 %v1446, %v1558
        %1560 = vmatmul.f32.gmra.mxu0 %v1056
        %v1561 = vpop.f32.mrf.mxu0
        %v1562 = vadd.f32 %v1449, %v1561
        %1563 = vmatmul.f32.gmra.mxu0 %v1065
        %v1564 = vpop.f32.mrf.mxu0
        %v1565 = vadd.f32 %v1452, %v1564
        %1566 = vmatmul.f32.gmra.mxu0 %v1074
        %v1567 = vpop.f32.mrf.mxu0
        %v1568 = vadd.f32 %v1455, %v1567
        %1569 = vmatmul.f32.gmra.mxu0 %v1083
        %v1570 = vpop.f32.mrf.mxu0
        %v1571 = vadd.f32 %v1458, %v1570
        %1572 = vmatmul.f32.gmra.mxu0 %v1092
        %v1573 = vpop.f32.mrf.mxu0
        %v1574 = vadd.f32 %v1461, %v1573
        %1575 = vmatmul.f32.gmra.mxu0 %v1101
        %v1576 = vpop.f32.mrf.mxu0
        %v1577 = vadd.f32 %v1464, %v1576
        %1578 = vmatmul.f32.gmra.mxu0 %v1110
        %v1579 = vpop.f32.mrf.mxu0
        %v1580 = vadd.f32 %v1467, %v1579
        %1581 = vmatmul.f32.gmra.mxu0 %v1119
        %v1582 = vpop.f32.mrf.mxu0
        %v1583 = vadd.f32 %v1470, %v1582
        %1584 = vmatmul.f32.gmra.mxu0 %v1128
        %v1585 = vpop.f32.mrf.mxu0
        %v1586 = vadd.f32 %v1473, %v1585
        %1587 = vmatmul.f32.gmra.mxu0 %v1137
        %v1588 = vpop.f32.mrf.mxu0
        %v1589 = vadd.f32 %v1476, %v1588
        %1590 = vmatmul.f32.gmra.mxu0 %v1146
        %v1591 = vpop.f32.mrf.mxu0
        %v1592 = vadd.f32 %v1479, %v1591
        %1593 = vmatmul.f32.gmra.mxu0 %v1155
        %v1594 = vpop.f32.mrf.mxu0
        %v1595 = vadd.f32 %v1482, %v1594
        %1596 = vmatmul.f32.gmra.mxu0 %v1164
        %v1597 = vpop.f32.mrf.mxu0
        %v1598 = vadd.f32 %v1485, %v1597
        %1599 = vmatmul.f32.gmra.mxu0 %v1173
        %v1600 = vpop.f32.mrf.mxu0
        %v1601 = vadd.f32 %v1488, %v1600
        %1602 = vmatmul.f32.gmra.mxu0 %v1182
        %v1603 = vpop.f32.mrf.mxu0
        %v1604 = vadd.f32 %v1491, %v1603
        %1605 = vmatmul.f32.gmra.mxu0 %v1191
        %v1606 = vpop.f32.mrf.mxu0
        %v1607 = vadd.f32 %v1494, %v1606
        %1608 = vmatmul.f32.gmra.mxu0 %v1200
        %v1609 = vpop.f32.mrf.mxu0
        %v1610 = vadd.f32 %v1497, %v1609
        %1611 = vmatmul.f32.gmra.mxu0 %v1209
        %v1612 = vpop.f32.mrf.mxu0
        %v1613 = vadd.f32 %v1500, %v1612
        %1614 = vmatmul.f32.gmra.mxu0 %v1218
        %v1615 = vpop.f32.mrf.mxu0
        %v1616 = vadd.f32 %v1503, %v1615
        %1617 = vmatmul.f32.gmra.mxu0 %v1227
        %v1618 = vpop.f32.mrf.mxu0
        %v1619 = vadd.f32 %v1506, %v1618
        %1620 = vmatmul.f32.gmra.mxu0 %v1236
        %v1621 = vpop.f32.mrf.mxu0
        %v1622 = vadd.f32 %v1509, %v1621
        %1623 = vmatmul.f32.gmra.mxu0 %v1245
        %v1624 = vpop.f32.mrf.mxu0
        %v1625 = vadd.f32 %v1512, %v1624
        %1626 = vdwg.mxu0
        %1627 = vmatpush.msra.mxu0 %v1300
        %1628 = vmatpush.msra.mxu0 %v1299
        %1629 = vmatpush.msra.mxu0 %v1298
        %1630 = vmatpush.msra.mxu0 %v1297
        %1631 = vmatpush.msra.mxu0 %v1296
        %1632 = vmatpush.msra.mxu0 %v1295
        %1633 = vmatpush.msra.mxu0 %v1294
        %1634 = vmatpush.msra.mxu0 %v1293
        %1635 = vmatpush.msra.mxu0 %v1292
        %1636 = vmatpush.msra.mxu0 %v1291
        %1637 = vmatpush.msra.mxu0 %v1290
        %1638 = vmatpush.msra.mxu0 %v1289
        %1639 = vmatpush.msra.mxu0 %v1288
        %1640 = vmatpush.msra.mxu0 %v1287
        %1641 = vmatpush.msra.mxu0 %v1286
        %1642 = vmatpush.msra.mxu0 %v1285
        %1643 = vmatmul.f32.gmra.mxu0 %v967
        %v1644 = vpop.f32.mrf.mxu0
        %v1645 = vadd.f32 %v1532, %v1644
        %1646 = vmatmul.f32.gmra.mxu0 %v976
        %v1647 = vpop.f32.mrf.mxu0
        %v1648 = vadd.f32 %v1535, %v1647
        %1649 = vmatmul.f32.gmra.mxu0 %v985
        %v1650 = vpop.f32.mrf.mxu0
        %v1651 = vadd.f32 %v1538, %v1650
        %1652 = vmatmul.f32.gmra.mxu0 %v994
        %v1653 = vpop.f32.mrf.mxu0
        %v1654 = vadd.f32 %v1541, %v1653
        %1655 = vmatmul.f32.gmra.mxu0 %v1003
        %v1656 = vpop.f32.mrf.mxu0
        %v1657 = vadd.f32 %v1544, %v1656
        %1658 = vmatmul.f32.gmra.mxu0 %v1012
        %v1659 = vpop.f32.mrf.mxu0
        %v1660 = vadd.f32 %v1547, %v1659
        %1661 = vmatmul.f32.gmra.mxu0 %v1021
        %v1662 = vpop.f32.mrf.mxu0
        %v1663 = vadd.f32 %v1550, %v1662
        %1664 = vmatmul.f32.gmra.mxu0 %v1030
        %v1665 = vpop.f32.mrf.mxu0
        %v1666 = vadd.f32 %v1553, %v1665
        %1667 = vmatmul.f32.gmra.mxu0 %v1039
        %v1668 = vpop.f32.mrf.mxu0
        %v1669 = vadd.f32 %v1556, %v1668
        %1670 = vmatmul.f32.gmra.mxu0 %v1048
        %v1671 = vpop.f32.mrf.mxu0
        %v1672 = vadd.f32 %v1559, %v1671
        %1673 = vmatmul.f32.gmra.mxu0 %v1057
        %v1674 = vpop.f32.mrf.mxu0
        %v1675 = vadd.f32 %v1562, %v1674
        %1676 = vmatmul.f32.gmra.mxu0 %v1066
        %v1677 = vpop.f32.mrf.mxu0
        %v1678 = vadd.f32 %v1565, %v1677
        %1679 = vmatmul.f32.gmra.mxu0 %v1075
        %v1680 = vpop.f32.mrf.mxu0
        %v1681 = vadd.f32 %v1568, %v1680
        %1682 = vmatmul.f32.gmra.mxu0 %v1084
        %v1683 = vpop.f32.mrf.mxu0
        %v1684 = vadd.f32 %v1571, %v1683
        %1685 = vmatmul.f32.gmra.mxu0 %v1093
        %v1686 = vpop.f32.mrf.mxu0
        %v1687 = vadd.f32 %v1574, %v1686
        %1688 = vmatmul.f32.gmra.mxu0 %v1102
        %v1689 = vpop.f32.mrf.mxu0
        %v1690 = vadd.f32 %v1577, %v1689
        %1691 = vmatmul.f32.gmra.mxu0 %v1111
        %v1692 = vpop.f32.mrf.mxu0
        %v1693 = vadd.f32 %v1580, %v1692
        %1694 = vmatmul.f32.gmra.mxu0 %v1120
        %v1695 = vpop.f32.mrf.mxu0
        %v1696 = vadd.f32 %v1583, %v1695
        %1697 = vmatmul.f32.gmra.mxu0 %v1129
        %v1698 = vpop.f32.mrf.mxu0
        %v1699 = vadd.f32 %v1586, %v1698
        %1700 = vmatmul.f32.gmra.mxu0 %v1138
        %v1701 = vpop.f32.mrf.mxu0
        %v1702 = vadd.f32 %v1589, %v1701
        %1703 = vmatmul.f32.gmra.mxu0 %v1147
        %v1704 = vpop.f32.mrf.mxu0
        %v1705 = vadd.f32 %v1592, %v1704
        %1706 = vmatmul.f32.gmra.mxu0 %v1156
        %v1707 = vpop.f32.mrf.mxu0
        %v1708 = vadd.f32 %v1595, %v1707
        %1709 = vmatmul.f32.gmra.mxu0 %v1165
        %v1710 = vpop.f32.mrf.mxu0
        %v1711 = vadd.f32 %v1598, %v1710
        %1712 = vmatmul.f32.gmra.mxu0 %v1174
        %v1713 = vpop.f32.mrf.mxu0
        %v1714 = vadd.f32 %v1601, %v1713
        %1715 = vmatmul.f32.gmra.mxu0 %v1183
        %v1716 = vpop.f32.mrf.mxu0
        %v1717 = vadd.f32 %v1604, %v1716
        %1718 = vmatmul.f32.gmra.mxu0 %v1192
        %v1719 = vpop.f32.mrf.mxu0
        %v1720 = vadd.f32 %v1607, %v1719
        %1721 = vmatmul.f32.gmra.mxu0 %v1201
        %v1722 = vpop.f32.mrf.mxu0
        %v1723 = vadd.f32 %v1610, %v1722
        %1724 = vmatmul.f32.gmra.mxu0 %v1210
        %v1725 = vpop.f32.mrf.mxu0
        %v1726 = vadd.f32 %v1613, %v1725
        %1727 = vmatmul.f32.gmra.mxu0 %v1219
        %v1728 = vpop.f32.mrf.mxu0
        %v1729 = vadd.f32 %v1616, %v1728
        %1730 = vmatmul.f32.gmra.mxu0 %v1228
        %v1731 = vpop.f32.mrf.mxu0
        %v1732 = vadd.f32 %v1619, %v1731
        %1733 = vmatmul.f32.gmra.mxu0 %v1237
        %v1734 = vpop.f32.mrf.mxu0
        %v1735 = vadd.f32 %v1622, %v1734
        %1736 = vmatmul.f32.gmra.mxu0 %v1246
        %v1737 = vpop.f32.mrf.mxu0
        %v1738 = vadd.f32 %v1625, %v1737
        %1739 = vdwg.mxu0
        %1740 = vmatpush.msra.mxu0 %v1316
        %1741 = vmatpush.msra.mxu0 %v1315
        %1742 = vmatpush.msra.mxu0 %v1314
        %1743 = vmatpush.msra.mxu0 %v1313
        %1744 = vmatpush.msra.mxu0 %v1312
        %1745 = vmatpush.msra.mxu0 %v1311
        %1746 = vmatpush.msra.mxu0 %v1310
        %1747 = vmatpush.msra.mxu0 %v1309
        %1748 = vmatpush.msra.mxu0 %v1308
        %1749 = vmatpush.msra.mxu0 %v1307
        %1750 = vmatpush.msra.mxu0 %v1306
        %1751 = vmatpush.msra.mxu0 %v1305
        %1752 = vmatpush.msra.mxu0 %v1304
        %1753 = vmatpush.msra.mxu0 %v1303
        %1754 = vmatpush.msra.mxu0 %v1302
        %1755 = vmatpush.msra.mxu0 %v1301
        %1756 = vmatmul.f32.gmra.mxu0 %v968
        %v1757 = vpop.f32.mrf.mxu0
        %v1758 = vadd.f32 %v1645, %v1757
        %1759 = vmatmul.f32.gmra.mxu0 %v977
        %v1760 = vpop.f32.mrf.mxu0
        %v1761 = vadd.f32 %v1648, %v1760
        %1762 = vmatmul.f32.gmra.mxu0 %v986
        %v1763 = vpop.f32.mrf.mxu0
        %v1764 = vadd.f32 %v1651, %v1763
        %1765 = vmatmul.f32.gmra.mxu0 %v995
        %v1766 = vpop.f32.mrf.mxu0
        %v1767 = vadd.f32 %v1654, %v1766
        %1768 = vmatmul.f32.gmra.mxu0 %v1004
        %v1769 = vpop.f32.mrf.mxu0
        %v1770 = vadd.f32 %v1657, %v1769
        %1771 = vmatmul.f32.gmra.mxu0 %v1013
        %v1772 = vpop.f32.mrf.mxu0
        %v1773 = vadd.f32 %v1660, %v1772
        %1774 = vmatmul.f32.gmra.mxu0 %v1022
        %v1775 = vpop.f32.mrf.mxu0
        %v1776 = vadd.f32 %v1663, %v1775
        %1777 = vmatmul.f32.gmra.mxu0 %v1031
        %v1778 = vpop.f32.mrf.mxu0
        %v1779 = vadd.f32 %v1666, %v1778
        %1780 = vmatmul.f32.gmra.mxu0 %v1040
        %v1781 = vpop.f32.mrf.mxu0
        %v1782 = vadd.f32 %v1669, %v1781
        %1783 = vmatmul.f32.gmra.mxu0 %v1049
        %v1784 = vpop.f32.mrf.mxu0
        %v1785 = vadd.f32 %v1672, %v1784
        %1786 = vmatmul.f32.gmra.mxu0 %v1058
        %v1787 = vpop.f32.mrf.mxu0
        %v1788 = vadd.f32 %v1675, %v1787
        %1789 = vmatmul.f32.gmra.mxu0 %v1067
        %v1790 = vpop.f32.mrf.mxu0
        %v1791 = vadd.f32 %v1678, %v1790
        %1792 = vmatmul.f32.gmra.mxu0 %v1076
        %v1793 = vpop.f32.mrf.mxu0
        %v1794 = vadd.f32 %v1681, %v1793
        %1795 = vmatmul.f32.gmra.mxu0 %v1085
        %v1796 = vpop.f32.mrf.mxu0
        %v1797 = vadd.f32 %v1684, %v1796
        %1798 = vmatmul.f32.gmra.mxu0 %v1094
        %v1799 = vpop.f32.mrf.mxu0
        %v1800 = vadd.f32 %v1687, %v1799
        %1801 = vmatmul.f32.gmra.mxu0 %v1103
        %v1802 = vpop.f32.mrf.mxu0
        %v1803 = vadd.f32 %v1690, %v1802
        %1804 = vmatmul.f32.gmra.mxu0 %v1112
        %v1805 = vpop.f32.mrf.mxu0
        %v1806 = vadd.f32 %v1693, %v1805
        %1807 = vmatmul.f32.gmra.mxu0 %v1121
        %v1808 = vpop.f32.mrf.mxu0
        %v1809 = vadd.f32 %v1696, %v1808
        %1810 = vmatmul.f32.gmra.mxu0 %v1130
        %v1811 = vpop.f32.mrf.mxu0
        %v1812 = vadd.f32 %v1699, %v1811
        %1813 = vmatmul.f32.gmra.mxu0 %v1139
        %v1814 = vpop.f32.mrf.mxu0
        %v1815 = vadd.f32 %v1702, %v1814
        %1816 = vmatmul.f32.gmra.mxu0 %v1148
        %v1817 = vpop.f32.mrf.mxu0
        %v1818 = vadd.f32 %v1705, %v1817
        %1819 = vmatmul.f32.gmra.mxu0 %v1157
        %v1820 = vpop.f32.mrf.mxu0
        %v1821 = vadd.f32 %v1708, %v1820
        %1822 = vmatmul.f32.gmra.mxu0 %v1166
        %v1823 = vpop.f32.mrf.mxu0
        %v1824 = vadd.f32 %v1711, %v1823
        %1825 = vmatmul.f32.gmra.mxu0 %v1175
        %v1826 = vpop.f32.mrf.mxu0
        %v1827 = vadd.f32 %v1714, %v1826
        %1828 = vmatmul.f32.gmra.mxu0 %v1184
        %v1829 = vpop.f32.mrf.mxu0
        %v1830 = vadd.f32 %v1717, %v1829
        %1831 = vmatmul.f32.gmra.mxu0 %v1193
        %v1832 = vpop.f32.mrf.mxu0
        %v1833 = vadd.f32 %v1720, %v1832
        %1834 = vmatmul.f32.gmra.mxu0 %v1202
        %v1835 = vpop.f32.mrf.mxu0
        %v1836 = vadd.f32 %v1723, %v1835
        %1837 = vmatmul.f32.gmra.mxu0 %v1211
        %v1838 = vpop.f32.mrf.mxu0
        %v1839 = vadd.f32 %v1726, %v1838
        %1840 = vmatmul.f32.gmra.mxu0 %v1220
        %v1841 = vpop.f32.mrf.mxu0
        %v1842 = vadd.f32 %v1729, %v1841
        %1843 = vmatmul.f32.gmra.mxu0 %v1229
        %v1844 = vpop.f32.mrf.mxu0
        %v1845 = vadd.f32 %v1732, %v1844
        %1846 = vmatmul.f32.gmra.mxu0 %v1238
        %v1847 = vpop.f32.mrf.mxu0
        %v1848 = vadd.f32 %v1735, %v1847
        %1849 = vmatmul.f32.gmra.mxu0 %v1247
        %v1850 = vpop.f32.mrf.mxu0
        %v1851 = vadd.f32 %v1738, %v1850
        %1852 = vdwg.mxu0
        %1853 = vmatpush.msra.mxu0 %v1332
        %1854 = vmatpush.msra.mxu0 %v1331
        %1855 = vmatpush.msra.mxu0 %v1330
        %1856 = vmatpush.msra.mxu0 %v1329
        %1857 = vmatpush.msra.mxu0 %v1328
        %1858 = vmatpush.msra.mxu0 %v1327
        %1859 = vmatpush.msra.mxu0 %v1326
        %1860 = vmatpush.msra.mxu0 %v1325
        %1861 = vmatpush.msra.mxu0 %v1324
        %1862 = vmatpush.msra.mxu0 %v1323
        %1863 = vmatpush.msra.mxu0 %v1322
        %1864 = vmatpush.msra.mxu0 %v1321
        %1865 = vmatpush.msra.mxu0 %v1320
        %1866 = vmatpush.msra.mxu0 %v1319
        %1867 = vmatpush.msra.mxu0 %v1318
        %1868 = vmatpush.msra.mxu0 %v1317
        %1869 = vmatmul.f32.gmra.mxu0 %v969
        %v1870 = vpop.f32.mrf.mxu0
        %v1871 = vadd.f32 %v1758, %v1870
        %1872 = vmatmul.f32.gmra.mxu0 %v978
        %v1873 = vpop.f32.mrf.mxu0
        %v1874 = vadd.f32 %v1761, %v1873
        %1875 = vmatmul.f32.gmra.mxu0 %v987
        %v1876 = vpop.f32.mrf.mxu0
        %v1877 = vadd.f32 %v1764, %v1876
        %1878 = vmatmul.f32.gmra.mxu0 %v996
        %v1879 = vpop.f32.mrf.mxu0
        %v1880 = vadd.f32 %v1767, %v1879
        %1881 = vmatmul.f32.gmra.mxu0 %v1005
        %v1882 = vpop.f32.mrf.mxu0
        %v1883 = vadd.f32 %v1770, %v1882
        %1884 = vmatmul.f32.gmra.mxu0 %v1014
        %v1885 = vpop.f32.mrf.mxu0
        %v1886 = vadd.f32 %v1773, %v1885
        %1887 = vmatmul.f32.gmra.mxu0 %v1023
        %v1888 = vpop.f32.mrf.mxu0
        %v1889 = vadd.f32 %v1776, %v1888
        %1890 = vmatmul.f32.gmra.mxu0 %v1032
        %v1891 = vpop.f32.mrf.mxu0
        %v1892 = vadd.f32 %v1779, %v1891
        %1893 = vmatmul.f32.gmra.mxu0 %v1041
        %v1894 = vpop.f32.mrf.mxu0
        %v1895 = vadd.f32 %v1782, %v1894
        %1896 = vmatmul.f32.gmra.mxu0 %v1050
        %v1897 = vpop.f32.mrf.mxu0
        %v1898 = vadd.f32 %v1785, %v1897
        %1899 = vmatmul.f32.gmra.mxu0 %v1059
        %v1900 = vpop.f32.mrf.mxu0
        %v1901 = vadd.f32 %v1788, %v1900
        %1902 = vmatmul.f32.gmra.mxu0 %v1068
        %v1903 = vpop.f32.mrf.mxu0
        %v1904 = vadd.f32 %v1791, %v1903
        %1905 = vmatmul.f32.gmra.mxu0 %v1077
        %v1906 = vpop.f32.mrf.mxu0
        %v1907 = vadd.f32 %v1794, %v1906
        %1908 = vmatmul.f32.gmra.mxu0 %v1086
        %v1909 = vpop.f32.mrf.mxu0
        %v1910 = vadd.f32 %v1797, %v1909
        %1911 = vmatmul.f32.gmra.mxu0 %v1095
        %v1912 = vpop.f32.mrf.mxu0
        %v1913 = vadd.f32 %v1800, %v1912
        %1914 = vmatmul.f32.gmra.mxu0 %v1104
        %v1915 = vpop.f32.mrf.mxu0
        %v1916 = vadd.f32 %v1803, %v1915
        %1917 = vmatmul.f32.gmra.mxu0 %v1113
        %v1918 = vpop.f32.mrf.mxu0
        %v1919 = vadd.f32 %v1806, %v1918
        %1920 = vmatmul.f32.gmra.mxu0 %v1122
        %v1921 = vpop.f32.mrf.mxu0
        %v1922 = vadd.f32 %v1809, %v1921
        %1923 = vmatmul.f32.gmra.mxu0 %v1131
        %v1924 = vpop.f32.mrf.mxu0
        %v1925 = vadd.f32 %v1812, %v1924
        %1926 = vmatmul.f32.gmra.mxu0 %v1140
        %v1927 = vpop.f32.mrf.mxu0
        %v1928 = vadd.f32 %v1815, %v1927
        %1929 = vmatmul.f32.gmra.mxu0 %v1149
        %v1930 = vpop.f32.mrf.mxu0
        %v1931 = vadd.f32 %v1818, %v1930
        %1932 = vmatmul.f32.gmra.mxu0 %v1158
        %v1933 = vpop.f32.mrf.mxu0
        %v1934 = vadd.f32 %v1821, %v1933
        %1935 = vmatmul.f32.gmra.mxu0 %v1167
        %v1936 = vpop.f32.mrf.mxu0
        %v1937 = vadd.f32 %v1824, %v1936
        %1938 = vmatmul.f32.gmra.mxu0 %v1176
        %v1939 = vpop.f32.mrf.mxu0
        %v1940 = vadd.f32 %v1827, %v1939
        %1941 = vmatmul.f32.gmra.mxu0 %v1185
        %v1942 = vpop.f32.mrf.mxu0
        %v1943 = vadd.f32 %v1830, %v1942
        %1944 = vmatmul.f32.gmra.mxu0 %v1194
        %v1945 = vpop.f32.mrf.mxu0
        %v1946 = vadd.f32 %v1833, %v1945
        %1947 = vmatmul.f32.gmra.mxu0 %v1203
        %v1948 = vpop.f32.mrf.mxu0
        %v1949 = vadd.f32 %v1836, %v1948
        %1950 = vmatmul.f32.gmra.mxu0 %v1212
        %v1951 = vpop.f32.mrf.mxu0
        %v1952 = vadd.f32 %v1839, %v1951
        %1953 = vmatmul.f32.gmra.mxu0 %v1221
        %v1954 = vpop.f32.mrf.mxu0
        %v1955 = vadd.f32 %v1842, %v1954
        %1956 = vmatmul.f32.gmra.mxu0 %v1230
        %v1957 = vpop.f32.mrf.mxu0
        %v1958 = vadd.f32 %v1845, %v1957
        %1959 = vmatmul.f32.gmra.mxu0 %v1239
        %v1960 = vpop.f32.mrf.mxu0
        %v1961 = vadd.f32 %v1848, %v1960
        %1962 = vmatmul.f32.gmra.mxu0 %v1248
        %v1963 = vpop.f32.mrf.mxu0
        %v1964 = vadd.f32 %v1851, %v1963
        %1965 = vdwg.mxu0
        %1966 = vmatpush.msra.mxu0 %v1348
        %1967 = vmatpush.msra.mxu0 %v1347
        %1968 = vmatpush.msra.mxu0 %v1346
        %1969 = vmatpush.msra.mxu0 %v1345
        %1970 = vmatpush.msra.mxu0 %v1344
        %1971 = vmatpush.msra.mxu0 %v1343
        %1972 = vmatpush.msra.mxu0 %v1342
        %1973 = vmatpush.msra.mxu0 %v1341
        %1974 = vmatpush.msra.mxu0 %v1340
        %1975 = vmatpush.msra.mxu0 %v1339
        %1976 = vmatpush.msra.mxu0 %v1338
        %1977 = vmatpush.msra.mxu0 %v1337
        %1978 = vmatpush.msra.mxu0 %v1336
        %1979 = vmatpush.msra.mxu0 %v1335
        %1980 = vmatpush.msra.mxu0 %v1334
        %1981 = vmatpush.msra.mxu0 %v1333
        %1982 = vmatmul.f32.gmra.mxu0 %v970
        %v1983 = vpop.f32.mrf.mxu0
        %v1984 = vadd.f32 %v1871, %v1983
        %1985 = vmatmul.f32.gmra.mxu0 %v979
        %v1986 = vpop.f32.mrf.mxu0
        %v1987 = vadd.f32 %v1874, %v1986
        %1988 = vmatmul.f32.gmra.mxu0 %v988
        %v1989 = vpop.f32.mrf.mxu0
        %v1990 = vadd.f32 %v1877, %v1989
        %1991 = vmatmul.f32.gmra.mxu0 %v997
        %v1992 = vpop.f32.mrf.mxu0
        %v1993 = vadd.f32 %v1880, %v1992
        %1994 = vmatmul.f32.gmra.mxu0 %v1006
        %v1995 = vpop.f32.mrf.mxu0
        %v1996 = vadd.f32 %v1883, %v1995
        %1997 = vmatmul.f32.gmra.mxu0 %v1015
        %v1998 = vpop.f32.mrf.mxu0
        %v1999 = vadd.f32 %v1886, %v1998
        %2000 = vmatmul.f32.gmra.mxu0 %v1024
        %v2001 = vpop.f32.mrf.mxu0
        %v2002 = vadd.f32 %v1889, %v2001
        %2003 = vmatmul.f32.gmra.mxu0 %v1033
        %v2004 = vpop.f32.mrf.mxu0
        %v2005 = vadd.f32 %v1892, %v2004
        %2006 = vmatmul.f32.gmra.mxu0 %v1042
        %v2007 = vpop.f32.mrf.mxu0
        %v2008 = vadd.f32 %v1895, %v2007
        %2009 = vmatmul.f32.gmra.mxu0 %v1051
        %v2010 = vpop.f32.mrf.mxu0
        %v2011 = vadd.f32 %v1898, %v2010
        %2012 = vmatmul.f32.gmra.mxu0 %v1060
        %v2013 = vpop.f32.mrf.mxu0
        %v2014 = vadd.f32 %v1901, %v2013
        %2015 = vmatmul.f32.gmra.mxu0 %v1069
        %v2016 = vpop.f32.mrf.mxu0
        %v2017 = vadd.f32 %v1904, %v2016
        %2018 = vmatmul.f32.gmra.mxu0 %v1078
        %v2019 = vpop.f32.mrf.mxu0
        %v2020 = vadd.f32 %v1907, %v2019
        %2021 = vmatmul.f32.gmra.mxu0 %v1087
        %v2022 = vpop.f32.mrf.mxu0
        %v2023 = vadd.f32 %v1910, %v2022
        %2024 = vmatmul.f32.gmra.mxu0 %v1096
        %v2025 = vpop.f32.mrf.mxu0
        %v2026 = vadd.f32 %v1913, %v2025
        %2027 = vmatmul.f32.gmra.mxu0 %v1105
        %v2028 = vpop.f32.mrf.mxu0
        %v2029 = vadd.f32 %v1916, %v2028
        %2030 = vmatmul.f32.gmra.mxu0 %v1114
        %v2031 = vpop.f32.mrf.mxu0
        %v2032 = vadd.f32 %v1919, %v2031
        %2033 = vmatmul.f32.gmra.mxu0 %v1123
        %v2034 = vpop.f32.mrf.mxu0
        %v2035 = vadd.f32 %v1922, %v2034
        %2036 = vmatmul.f32.gmra.mxu0 %v1132
        %v2037 = vpop.f32.mrf.mxu0
        %v2038 = vadd.f32 %v1925, %v2037
        %2039 = vmatmul.f32.gmra.mxu0 %v1141
        %v2040 = vpop.f32.mrf.mxu0
        %v2041 = vadd.f32 %v1928, %v2040
        %2042 = vmatmul.f32.gmra.mxu0 %v1150
        %v2043 = vpop.f32.mrf.mxu0
        %v2044 = vadd.f32 %v1931, %v2043
        %2045 = vmatmul.f32.gmra.mxu0 %v1159
        %v2046 = vpop.f32.mrf.mxu0
        %v2047 = vadd.f32 %v1934, %v2046
        %2048 = vmatmul.f32.gmra.mxu0 %v1168
        %v2049 = vpop.f32.mrf.mxu0
        %v2050 = vadd.f32 %v1937, %v2049
        %2051 = vmatmul.f32.gmra.mxu0 %v1177
        %v2052 = vpop.f32.mrf.mxu0
        %v2053 = vadd.f32 %v1940, %v2052
        %2054 = vmatmul.f32.gmra.mxu0 %v1186
        %v2055 = vpop.f32.mrf.mxu0
        %v2056 = vadd.f32 %v1943, %v2055
        %2057 = vmatmul.f32.gmra.mxu0 %v1195
        %v2058 = vpop.f32.mrf.mxu0
        %v2059 = vadd.f32 %v1946, %v2058
        %2060 = vmatmul.f32.gmra.mxu0 %v1204
        %v2061 = vpop.f32.mrf.mxu0
        %v2062 = vadd.f32 %v1949, %v2061
        %2063 = vmatmul.f32.gmra.mxu0 %v1213
        %v2064 = vpop.f32.mrf.mxu0
        %v2065 = vadd.f32 %v1952, %v2064
        %2066 = vmatmul.f32.gmra.mxu0 %v1222
        %v2067 = vpop.f32.mrf.mxu0
        %v2068 = vadd.f32 %v1955, %v2067
        %2069 = vmatmul.f32.gmra.mxu0 %v1231
        %v2070 = vpop.f32.mrf.mxu0
        %v2071 = vadd.f32 %v1958, %v2070
        %2072 = vmatmul.f32.gmra.mxu0 %v1240
        %v2073 = vpop.f32.mrf.mxu0
        %v2074 = vadd.f32 %v1961, %v2073
        %2075 = vmatmul.f32.gmra.mxu0 %v1249
        %v2076 = vpop.f32.mrf.mxu0
        %v2077 = vadd.f32 %v1964, %v2076
        %2078 = vdwg.mxu0
        %2079 = vmatpush.msra.mxu0 %v1364
        %2080 = vmatpush.msra.mxu0 %v1363
        %2081 = vmatpush.msra.mxu0 %v1362
        %2082 = vmatpush.msra.mxu0 %v1361
        %2083 = vmatpush.msra.mxu0 %v1360
        %2084 = vmatpush.msra.mxu0 %v1359
        %2085 = vmatpush.msra.mxu0 %v1358
        %2086 = vmatpush.msra.mxu0 %v1357
        %2087 = vmatpush.msra.mxu0 %v1356
        %2088 = vmatpush.msra.mxu0 %v1355
        %2089 = vmatpush.msra.mxu0 %v1354
        %2090 = vmatpush.msra.mxu0 %v1353
        %2091 = vmatpush.msra.mxu0 %v1352
        %2092 = vmatpush.msra.mxu0 %v1351
        %2093 = vmatpush.msra.mxu0 %v1350
        %2094 = vmatpush.msra.mxu0 %v1349
        %2095 = vmatmul.f32.gmra.mxu0 %v971
        %v2096 = vpop.f32.mrf.mxu0
        %v2097 = vadd.f32 %v1984, %v2096
        %2098 = vmatmul.f32.gmra.mxu0 %v980
        %v2099 = vpop.f32.mrf.mxu0
        %v2100 = vadd.f32 %v1987, %v2099
        %2101 = vmatmul.f32.gmra.mxu0 %v989
        %v2102 = vpop.f32.mrf.mxu0
        %v2103 = vadd.f32 %v1990, %v2102
        %2104 = vmatmul.f32.gmra.mxu0 %v998
        %v2105 = vpop.f32.mrf.mxu0
        %v2106 = vadd.f32 %v1993, %v2105
        %2107 = vmatmul.f32.gmra.mxu0 %v1007
        %v2108 = vpop.f32.mrf.mxu0
        %v2109 = vadd.f32 %v1996, %v2108
        %2110 = vmatmul.f32.gmra.mxu0 %v1016
        %v2111 = vpop.f32.mrf.mxu0
        %v2112 = vadd.f32 %v1999, %v2111
        %2113 = vmatmul.f32.gmra.mxu0 %v1025
        %v2114 = vpop.f32.mrf.mxu0
        %v2115 = vadd.f32 %v2002, %v2114
        %2116 = vmatmul.f32.gmra.mxu0 %v1034
        %v2117 = vpop.f32.mrf.mxu0
        %v2118 = vadd.f32 %v2005, %v2117
        %2119 = vmatmul.f32.gmra.mxu0 %v1043
        %v2120 = vpop.f32.mrf.mxu0
        %v2121 = vadd.f32 %v2008, %v2120
        %2122 = vmatmul.f32.gmra.mxu0 %v1052
        %v2123 = vpop.f32.mrf.mxu0
        %v2124 = vadd.f32 %v2011, %v2123
        %2125 = vmatmul.f32.gmra.mxu0 %v1061
        %v2126 = vpop.f32.mrf.mxu0
        %v2127 = vadd.f32 %v2014, %v2126
        %2128 = vmatmul.f32.gmra.mxu0 %v1070
        %v2129 = vpop.f32.mrf.mxu0
        %v2130 = vadd.f32 %v2017, %v2129
        %2131 = vmatmul.f32.gmra.mxu0 %v1079
        %v2132 = vpop.f32.mrf.mxu0
        %v2133 = vadd.f32 %v2020, %v2132
        %2134 = vmatmul.f32.gmra.mxu0 %v1088
        %v2135 = vpop.f32.mrf.mxu0
        %v2136 = vadd.f32 %v2023, %v2135
        %2137 = vmatmul.f32.gmra.mxu0 %v1097
        %v2138 = vpop.f32.mrf.mxu0
        %v2139 = vadd.f32 %v2026, %v2138
        %2140 = vmatmul.f32.gmra.mxu0 %v1106
        %v2141 = vpop.f32.mrf.mxu0
        %v2142 = vadd.f32 %v2029, %v2141
        %2143 = vmatmul.f32.gmra.mxu0 %v1115
        %v2144 = vpop.f32.mrf.mxu0
        %v2145 = vadd.f32 %v2032, %v2144
        %2146 = vmatmul.f32.gmra.mxu0 %v1124
        %v2147 = vpop.f32.mrf.mxu0
        %v2148 = vadd.f32 %v2035, %v2147
        %2149 = vmatmul.f32.gmra.mxu0 %v1133
        %v2150 = vpop.f32.mrf.mxu0
        %v2151 = vadd.f32 %v2038, %v2150
        %2152 = vmatmul.f32.gmra.mxu0 %v1142
        %v2153 = vpop.f32.mrf.mxu0
        %v2154 = vadd.f32 %v2041, %v2153
        %2155 = vmatmul.f32.gmra.mxu0 %v1151
        %v2156 = vpop.f32.mrf.mxu0
        %v2157 = vadd.f32 %v2044, %v2156
        %2158 = vmatmul.f32.gmra.mxu0 %v1160
        %v2159 = vpop.f32.mrf.mxu0
        %v2160 = vadd.f32 %v2047, %v2159
        %2161 = vmatmul.f32.gmra.mxu0 %v1169
        %v2162 = vpop.f32.mrf.mxu0
        %v2163 = vadd.f32 %v2050, %v2162
        %2164 = vmatmul.f32.gmra.mxu0 %v1178
        %v2165 = vpop.f32.mrf.mxu0
        %v2166 = vadd.f32 %v2053, %v2165
        %2167 = vmatmul.f32.gmra.mxu0 %v1187
        %v2168 = vpop.f32.mrf.mxu0
        %v2169 = vadd.f32 %v2056, %v2168
        %2170 = vmatmul.f32.gmra.mxu0 %v1196
        %v2171 = vpop.f32.mrf.mxu0
        %v2172 = vadd.f32 %v2059, %v2171
        %2173 = vmatmul.f32.gmra.mxu0 %v1205
        %v2174 = vpop.f32.mrf.mxu0
        %v2175 = vadd.f32 %v2062, %v2174
        %2176 = vmatmul.f32.gmra.mxu0 %v1214
        %v2177 = vpop.f32.mrf.mxu0
        %v2178 = vadd.f32 %v2065, %v2177
        %2179 = vmatmul.f32.gmra.mxu0 %v1223
        %v2180 = vpop.f32.mrf.mxu0
        %v2181 = vadd.f32 %v2068, %v2180
        %2182 = vmatmul.f32.gmra.mxu0 %v1232
        %v2183 = vpop.f32.mrf.mxu0
        %v2184 = vadd.f32 %v2071, %v2183
        %2185 = vmatmul.f32.gmra.mxu0 %v1241
        %v2186 = vpop.f32.mrf.mxu0
        %v2187 = vadd.f32 %v2074, %v2186
        %2188 = vmatmul.f32.gmra.mxu0 %v1250
        %v2189 = vpop.f32.mrf.mxu0
        %v2190 = vadd.f32 %v2077, %v2189
        %2191 = vdwg.mxu0
        %2192 = vmatpush.msra.mxu0 %v1380
        %2193 = vmatpush.msra.mxu0 %v1379
        %2194 = vmatpush.msra.mxu0 %v1378
        %2195 = vmatpush.msra.mxu0 %v1377
        %2196 = vmatpush.msra.mxu0 %v1376
        %2197 = vmatpush.msra.mxu0 %v1375
        %2198 = vmatpush.msra.mxu0 %v1374
        %2199 = vmatpush.msra.mxu0 %v1373
        %2200 = vmatpush.msra.mxu0 %v1372
        %2201 = vmatpush.msra.mxu0 %v1371
        %2202 = vmatpush.msra.mxu0 %v1370
        %2203 = vmatpush.msra.mxu0 %v1369
        %2204 = vmatpush.msra.mxu0 %v1368
        %2205 = vmatpush.msra.mxu0 %v1367
        %2206 = vmatpush.msra.mxu0 %v1366
        %2207 = vmatpush.msra.mxu0 %v1365
        %2208 = vmatmul.f32.gmra.mxu0 %v972
        %v2209 = vpop.f32.mrf.mxu0
        %v2210 = vadd.f32 %v2097, %v2209
        %2211 = vmatmul.f32.gmra.mxu0 %v981
        %v2212 = vpop.f32.mrf.mxu0
        %v2213 = vadd.f32 %v2100, %v2212
        %2214 = vmatmul.f32.gmra.mxu0 %v990
        %v2215 = vpop.f32.mrf.mxu0
        %v2216 = vadd.f32 %v2103, %v2215
        %2217 = vmatmul.f32.gmra.mxu0 %v999
        %v2218 = vpop.f32.mrf.mxu0
        %v2219 = vadd.f32 %v2106, %v2218
        %2220 = vmatmul.f32.gmra.mxu0 %v1008
        %v2221 = vpop.f32.mrf.mxu0
        %v2222 = vadd.f32 %v2109, %v2221
        %2223 = vmatmul.f32.gmra.mxu0 %v1017
        %v2224 = vpop.f32.mrf.mxu0
        %v2225 = vadd.f32 %v2112, %v2224
        %2226 = vmatmul.f32.gmra.mxu0 %v1026
        %v2227 = vpop.f32.mrf.mxu0
        %v2228 = vadd.f32 %v2115, %v2227
        %2229 = vmatmul.f32.gmra.mxu0 %v1035
        %v2230 = vpop.f32.mrf.mxu0
        %v2231 = vadd.f32 %v2118, %v2230
        %2232 = vmatmul.f32.gmra.mxu0 %v1044
        %v2233 = vpop.f32.mrf.mxu0
        %v2234 = vadd.f32 %v2121, %v2233
        %2235 = vmatmul.f32.gmra.mxu0 %v1053
        %v2236 = vpop.f32.mrf.mxu0
        %v2237 = vadd.f32 %v2124, %v2236
        %2238 = vmatmul.f32.gmra.mxu0 %v1062
        %v2239 = vpop.f32.mrf.mxu0
        %v2240 = vadd.f32 %v2127, %v2239
        %2241 = vmatmul.f32.gmra.mxu0 %v1071
        %v2242 = vpop.f32.mrf.mxu0
        %v2243 = vadd.f32 %v2130, %v2242
        %2244 = vmatmul.f32.gmra.mxu0 %v1080
        %v2245 = vpop.f32.mrf.mxu0
        %v2246 = vadd.f32 %v2133, %v2245
        %2247 = vmatmul.f32.gmra.mxu0 %v1089
        %v2248 = vpop.f32.mrf.mxu0
        %v2249 = vadd.f32 %v2136, %v2248
        %2250 = vmatmul.f32.gmra.mxu0 %v1098
        %v2251 = vpop.f32.mrf.mxu0
        %v2252 = vadd.f32 %v2139, %v2251
        %2253 = vmatmul.f32.gmra.mxu0 %v1107
        %v2254 = vpop.f32.mrf.mxu0
        %v2255 = vadd.f32 %v2142, %v2254
        %2256 = vmatmul.f32.gmra.mxu0 %v1116
        %v2257 = vpop.f32.mrf.mxu0
        %v2258 = vadd.f32 %v2145, %v2257
        %2259 = vmatmul.f32.gmra.mxu0 %v1125
        %v2260 = vpop.f32.mrf.mxu0
        %v2261 = vadd.f32 %v2148, %v2260
        %2262 = vmatmul.f32.gmra.mxu0 %v1134
        %v2263 = vpop.f32.mrf.mxu0
        %v2264 = vadd.f32 %v2151, %v2263
        %2265 = vmatmul.f32.gmra.mxu0 %v1143
        %v2266 = vpop.f32.mrf.mxu0
        %v2267 = vadd.f32 %v2154, %v2266
        %2268 = vmatmul.f32.gmra.mxu0 %v1152
        %v2269 = vpop.f32.mrf.mxu0
        %v2270 = vadd.f32 %v2157, %v2269
        %2271 = vmatmul.f32.gmra.mxu0 %v1161
        %v2272 = vpop.f32.mrf.mxu0
        %v2273 = vadd.f32 %v2160, %v2272
        %2274 = vmatmul.f32.gmra.mxu0 %v1170
        %v2275 = vpop.f32.mrf.mxu0
        %v2276 = vadd.f32 %v2163, %v2275
        %2277 = vmatmul.f32.gmra.mxu0 %v1179
        %v2278 = vpop.f32.mrf.mxu0
        %v2279 = vadd.f32 %v2166, %v2278
        %2280 = vmatmul.f32.gmra.mxu0 %v1188
        %v2281 = vpop.f32.mrf.mxu0
        %v2282 = vadd.f32 %v2169, %v2281
        %2283 = vmatmul.f32.gmra.mxu0 %v1197
        %v2284 = vpop.f32.mrf.mxu0
        %v2285 = vadd.f32 %v2172, %v2284
        %2286 = vmatmul.f32.gmra.mxu0 %v1206
        %v2287 = vpop.f32.mrf.mxu0
        %v2288 = vadd.f32 %v2175, %v2287
        %2289 = vmatmul.f32.gmra.mxu0 %v1215
        %v2290 = vpop.f32.mrf.mxu0
        %v2291 = vadd.f32 %v2178, %v2290
        %2292 = vmatmul.f32.gmra.mxu0 %v1224
        %v2293 = vpop.f32.mrf.mxu0
        %v2294 = vadd.f32 %v2181, %v2293
        %2295 = vmatmul.f32.gmra.mxu0 %v1233
        %v2296 = vpop.f32.mrf.mxu0
        %v2297 = vadd.f32 %v2184, %v2296
        %2298 = vmatmul.f32.gmra.mxu0 %v1242
        %v2299 = vpop.f32.mrf.mxu0
        %v2300 = vadd.f32 %v2187, %v2299
        %2301 = vmatmul.f32.gmra.mxu0 %v1251
        %v2302 = vpop.f32.mrf.mxu0
        %v2303 = vadd.f32 %v2190, %v2302
        %2304 = vdwg.mxu0
        %2305 = vmatpush.msra.mxu0 %v1396
        %2306 = vmatpush.msra.mxu0 %v1395
        %2307 = vmatpush.msra.mxu0 %v1394
        %2308 = vmatpush.msra.mxu0 %v1393
        %2309 = vmatpush.msra.mxu0 %v1392
        %2310 = vmatpush.msra.mxu0 %v1391
        %2311 = vmatpush.msra.mxu0 %v1390
        %2312 = vmatpush.msra.mxu0 %v1389
        %2313 = vmatpush.msra.mxu0 %v1388
        %2314 = vmatpush.msra.mxu0 %v1387
        %2315 = vmatpush.msra.mxu0 %v1386
        %2316 = vmatpush.msra.mxu0 %v1385
        %2317 = vmatpush.msra.mxu0 %v1384
        %2318 = vmatpush.msra.mxu0 %v1383
        %2319 = vmatpush.msra.mxu0 %v1382
        %2320 = vmatpush.msra.mxu0 %v1381
        %2321 = vmatmul.f32.gmra.mxu0 %v973
        %v2322 = vpop.f32.mrf.mxu0
        %v2323 = vadd.f32 %v2210, %v2322
        %2324 = vmatmul.f32.gmra.mxu0 %v982
        %v2325 = vpop.f32.mrf.mxu0
        %v2326 = vadd.f32 %v2213, %v2325
        %2327 = vmatmul.f32.gmra.mxu0 %v991
        %v2328 = vpop.f32.mrf.mxu0
        %v2329 = vadd.f32 %v2216, %v2328
        %2330 = vmatmul.f32.gmra.mxu0 %v1000
        %v2331 = vpop.f32.mrf.mxu0
        %v2332 = vadd.f32 %v2219, %v2331
        %2333 = vmatmul.f32.gmra.mxu0 %v1009
        %v2334 = vpop.f32.mrf.mxu0
        %v2335 = vadd.f32 %v2222, %v2334
        %2336 = vmatmul.f32.gmra.mxu0 %v1018
        %v2337 = vpop.f32.mrf.mxu0
        %v2338 = vadd.f32 %v2225, %v2337
        %2339 = vmatmul.f32.gmra.mxu0 %v1027
        %v2340 = vpop.f32.mrf.mxu0
        %v2341 = vadd.f32 %v2228, %v2340
        %2342 = vmatmul.f32.gmra.mxu0 %v1036
        %v2343 = vpop.f32.mrf.mxu0
        %v2344 = vadd.f32 %v2231, %v2343
        %2345 = vmatmul.f32.gmra.mxu0 %v1045
        %v2346 = vpop.f32.mrf.mxu0
        %v2347 = vadd.f32 %v2234, %v2346
        %2348 = vmatmul.f32.gmra.mxu0 %v1054
        %v2349 = vpop.f32.mrf.mxu0
        %v2350 = vadd.f32 %v2237, %v2349
        %2351 = vmatmul.f32.gmra.mxu0 %v1063
        %v2352 = vpop.f32.mrf.mxu0
        %v2353 = vadd.f32 %v2240, %v2352
        %2354 = vmatmul.f32.gmra.mxu0 %v1072
        %v2355 = vpop.f32.mrf.mxu0
        %v2356 = vadd.f32 %v2243, %v2355
        %2357 = vmatmul.f32.gmra.mxu0 %v1081
        %v2358 = vpop.f32.mrf.mxu0
        %v2359 = vadd.f32 %v2246, %v2358
        %2360 = vmatmul.f32.gmra.mxu0 %v1090
        %v2361 = vpop.f32.mrf.mxu0
        %v2362 = vadd.f32 %v2249, %v2361
        %2363 = vmatmul.f32.gmra.mxu0 %v1099
        %v2364 = vpop.f32.mrf.mxu0
        %v2365 = vadd.f32 %v2252, %v2364
        %2366 = vmatmul.f32.gmra.mxu0 %v1108
        %v2367 = vpop.f32.mrf.mxu0
        %v2368 = vadd.f32 %v2255, %v2367
        %2369 = vmatmul.f32.gmra.mxu0 %v1117
        %v2370 = vpop.f32.mrf.mxu0
        %v2371 = vadd.f32 %v2258, %v2370
        %2372 = vmatmul.f32.gmra.mxu0 %v1126
        %v2373 = vpop.f32.mrf.mxu0
        %v2374 = vadd.f32 %v2261, %v2373
        %2375 = vmatmul.f32.gmra.mxu0 %v1135
        %v2376 = vpop.f32.mrf.mxu0
        %v2377 = vadd.f32 %v2264, %v2376
        %2378 = vmatmul.f32.gmra.mxu0 %v1144
        %v2379 = vpop.f32.mrf.mxu0
        %v2380 = vadd.f32 %v2267, %v2379
        %2381 = vmatmul.f32.gmra.mxu0 %v1153
        %v2382 = vpop.f32.mrf.mxu0
        %v2383 = vadd.f32 %v2270, %v2382
        %2384 = vmatmul.f32.gmra.mxu0 %v1162
        %v2385 = vpop.f32.mrf.mxu0
        %v2386 = vadd.f32 %v2273, %v2385
        %2387 = vmatmul.f32.gmra.mxu0 %v1171
        %v2388 = vpop.f32.mrf.mxu0
        %v2389 = vadd.f32 %v2276, %v2388
        %2390 = vmatmul.f32.gmra.mxu0 %v1180
        %v2391 = vpop.f32.mrf.mxu0
        %v2392 = vadd.f32 %v2279, %v2391
        %2393 = vmatmul.f32.gmra.mxu0 %v1189
        %v2394 = vpop.f32.mrf.mxu0
        %v2395 = vadd.f32 %v2282, %v2394
        %2396 = vmatmul.f32.gmra.mxu0 %v1198
        %v2397 = vpop.f32.mrf.mxu0
        %v2398 = vadd.f32 %v2285, %v2397
        %2399 = vmatmul.f32.gmra.mxu0 %v1207
        %v2400 = vpop.f32.mrf.mxu0
        %v2401 = vadd.f32 %v2288, %v2400
        %2402 = vmatmul.f32.gmra.mxu0 %v1216
        %v2403 = vpop.f32.mrf.mxu0
        %v2404 = vadd.f32 %v2291, %v2403
        %2405 = vmatmul.f32.gmra.mxu0 %v1225
        %v2406 = vpop.f32.mrf.mxu0
        %v2407 = vadd.f32 %v2294, %v2406
        %2408 = vmatmul.f32.gmra.mxu0 %v1234
        %v2409 = vpop.f32.mrf.mxu0
        %v2410 = vadd.f32 %v2297, %v2409
        %2411 = vmatmul.f32.gmra.mxu0 %v1243
        %v2412 = vpop.f32.mrf.mxu0
        %v2413 = vadd.f32 %v2300, %v2412
        %2414 = vmatmul.f32.gmra.mxu0 %v1252
        %v2415 = vpop.f32.mrf.mxu0
        %v2416 = vadd.f32 %v2303, %v2415
        %2417 = vdwg.mxu0
        %v2418 = vmax.f32 %v2323, 0.0
        %v2419 = vmax.f32 %v2326, 0.0
        %v2420 = vmax.f32 %v2329, 0.0
        %v2421 = vmax.f32 %v2332, 0.0
        %v2422 = vmax.f32 %v2335, 0.0
        %v2423 = vmax.f32 %v2338, 0.0
        %v2424 = vmax.f32 %v2341, 0.0
        %v2425 = vmax.f32 %v2344, 0.0
        %v2426 = vmax.f32 %v2347, 0.0
        %v2427 = vmax.f32 %v2350, 0.0
        %v2428 = vmax.f32 %v2353, 0.0
        %v2429 = vmax.f32 %v2356, 0.0
        %v2430 = vmax.f32 %v2359, 0.0
        %v2431 = vmax.f32 %v2362, 0.0
        %v2432 = vmax.f32 %v2365, 0.0
        %v2433 = vmax.f32 %v2368, 0.0
        %v2434 = vmax.f32 %v2371, 0.0
        %v2435 = vmax.f32 %v2374, 0.0
        %v2436 = vmax.f32 %v2377, 0.0
        %v2437 = vmax.f32 %v2380, 0.0
        %v2438 = vmax.f32 %v2383, 0.0
        %v2439 = vmax.f32 %v2386, 0.0
        %v2440 = vmax.f32 %v2389, 0.0
        %v2441 = vmax.f32 %v2392, 0.0
        %v2442 = vmax.f32 %v2395, 0.0
        %v2443 = vmax.f32 %v2398, 0.0
        %v2444 = vmax.f32 %v2401, 0.0
        %v2445 = vmax.f32 %v2404, 0.0
        %v2446 = vmax.f32 %v2407, 0.0
        %v2447 = vmax.f32 %v2410, 0.0
        %v2448 = vmax.f32 %v2413, 0.0
        %v2449 = vmax.f32 %v2416, 0.0
        %2450 = vst [vmem:[%s355 + $0x8] sm:$0xff] %v2418
        %2451 = vst [vmem:[%s355 + $0x10] sm:$0xff] %v2419
        %2452 = vst [vmem:[%s355 + $0x28] sm:$0xff] %v2420
        %2453 = vst [vmem:[%s355 + $0x30] sm:$0xff] %v2421
        %2454 = vst [vmem:[%s355 + $0x48] sm:$0xff] %v2422
        %2455 = vst [vmem:[%s355 + $0x50] sm:$0xff] %v2423
        %2456 = vst [vmem:[%s355 + $0x68] sm:$0xff] %v2424
        %2457 = vst [vmem:[%s355 + $0x70] sm:$0xff] %v2425
        %2458 = vst [vmem:[%s355 + $0x88] sm:$0xff] %v2426
        %2459 = vst [vmem:[%s355 + $0x90] sm:$0xff] %v2427
        %2460 = vst [vmem:[%s355 + $0xa8] sm:$0xff] %v2428
        %2461 = vst [vmem:[%s355 + $0xb0] sm:$0xff] %v2429
        %2462 = vst [vmem:[%s355 + $0xc8] sm:$0xff] %v2430
        %2463 = vst [vmem:[%s355 + $0xd0] sm:$0xff] %v2431
        %2464 = vst [vmem:[%s355 + $0xe8] sm:$0xff] %v2432
        %2465 = vst [vmem:[%s355 + $0xf0] sm:$0xff] %v2433
        %2466 = vst [vmem:[%s355 + $0x108] sm:$0xff] %v2434
        %2467 = vst [vmem:[%s355 + $0x110] sm:$0xff] %v2435
        %2468 = vst [vmem:[%s355 + $0x128] sm:$0xff] %v2436
        %2469 = vst [vmem:[%s355 + $0x130] sm:$0xff] %v2437
        %2470 = vst [vmem:[%s355 + $0x148] sm:$0xff] %v2438
        %2471 = vst [vmem:[%s355 + $0x150] sm:$0xff] %v2439
        %2472 = vst [vmem:[%s355 + $0x168] sm:$0xff] %v2440
        %2473 = vst [vmem:[%s355 + $0x170] sm:$0xff] %v2441
        %2474 = vst [vmem:[%s355 + $0x188] sm:$0xff] %v2442
        %2475 = vst [vmem:[%s355 + $0x190] sm:$0xff] %v2443
        %2476 = vst [vmem:[%s355 + $0x1a8] sm:$0xff] %v2444
        %2477 = vst [vmem:[%s355 + $0x1b0] sm:$0xff] %v2445
        %2478 = vst [vmem:[%s355 + $0x1c8] sm:$0xff] %v2446
        %2479 = vst [vmem:[%s355 + $0x1d0] sm:$0xff] %v2447
        %2480 = vst [vmem:[%s355 + $0x1e8] sm:$0xff] %v2448
        %2481 = vst [vmem:[%s355 + $0x1f0] sm:$0xff] %v2449
        %v2482 = vld [vmem:[#allocation2 + $0x7] sm:$0xff]
        %v2483 = vld [vmem:[#allocation2 + $0xf] sm:$0xff]
        %v2484 = vld [vmem:[#allocation2 + $0x27] sm:$0xff]
        %v2485 = vld [vmem:[#allocation2 + $0x2f] sm:$0xff]
        %v2486 = vld [vmem:[#allocation2 + $0x47] sm:$0xff]
        %v2487 = vld [vmem:[#allocation2 + $0x4f] sm:$0xff]
        %v2488 = vld [vmem:[#allocation2 + $0x67] sm:$0xff]
        %v2489 = vld [vmem:[#allocation2 + $0x6f] sm:$0xff]
        %v2490 = vld [vmem:[#allocation2 + $0x87] sm:$0xff]
        %v2491 = vld [vmem:[#allocation2 + $0x8f] sm:$0xff]
        %v2492 = vld [vmem:[#allocation2 + $0xa7] sm:$0xff]
        %v2493 = vld [vmem:[#allocation2 + $0xaf] sm:$0xff]
        %v2494 = vld [vmem:[#allocation2 + $0xc7] sm:$0xff]
        %v2495 = vld [vmem:[#allocation2 + $0xcf] sm:$0xff]
        %v2496 = vld [vmem:[#allocation2 + $0xe7] sm:$0xff]
        %v2497 = vld [vmem:[#allocation2 + $0xef] sm:$0xff]
        %v2498 = vld [vmem:[#allocation2 + $0x107] sm:$0xff]
        %v2499 = vld [vmem:[#allocation2 + $0x10f] sm:$0xff]
        %v2500 = vld [vmem:[#allocation2 + $0x127] sm:$0xff]
        %v2501 = vld [vmem:[#allocation2 + $0x12f] sm:$0xff]
        %v2502 = vld [vmem:[#allocation2 + $0x147] sm:$0xff]
        %v2503 = vld [vmem:[#allocation2 + $0x14f] sm:$0xff]
        %v2504 = vld [vmem:[#allocation2 + $0x167] sm:$0xff]
        %v2505 = vld [vmem:[#allocation2 + $0x16f] sm:$0xff]
        %v2506 = vld [vmem:[#allocation2 + $0x187] sm:$0xff]
        %v2507 = vld [vmem:[#allocation2 + $0x18f] sm:$0xff]
        %v2508 = vld [vmem:[#allocation2 + $0x1a7] sm:$0xff]
        %v2509 = vld [vmem:[#allocation2 + $0x1af] sm:$0xff]
        %v2510 = vld [vmem:[#allocation2 + $0x1c7] sm:$0xff]
        %v2511 = vld [vmem:[#allocation2 + $0x1cf] sm:$0xff]
        %v2512 = vld [vmem:[#allocation2 + $0x1e7] sm:$0xff]
        %v2513 = vld [vmem:[#allocation2 + $0x1ef] sm:$0xff]
        %2514 = vst [vmem:[#allocation3] sm:$0xff] %v2482
        %2515 = vst [vmem:[#allocation3 + $0x48] sm:$0xff] %v2483
        %2516 = vst [vmem:[#allocation3 + $0x90] sm:$0xff] %v2484
        %2517 = vst [vmem:[#allocation3 + $0xd8] sm:$0xff] %v2485
        %2518 = vst [vmem:[#allocation3 + $0x120] sm:$0xff] %v2486
        %2519 = vst [vmem:[#allocation3 + $0x168] sm:$0xff] %v2487
        %2520 = vst [vmem:[#allocation3 + $0x1b0] sm:$0xff] %v2488
        %2521 = vst [vmem:[#allocation3 + $0x1f8] sm:$0xff] %v2489
        %2522 = vst [vmem:[#allocation3 + $0x240] sm:$0xff] %v2490
        %2523 = vst [vmem:[#allocation3 + $0x288] sm:$0xff] %v2491
        %2524 = vst [vmem:[#allocation3 + $0x2d0] sm:$0xff] %v2492
        %2525 = vst [vmem:[#allocation3 + $0x318] sm:$0xff] %v2493
        %2526 = vst [vmem:[#allocation3 + $0x360] sm:$0xff] %v2494
        %2527 = vst [vmem:[#allocation3 + $0x3a8] sm:$0xff] %v2495
        %2528 = vst [vmem:[#allocation3 + $0x3f0] sm:$0xff] %v2496
        %2529 = vst [vmem:[#allocation3 + $0x438] sm:$0xff] %v2497
        %2530 = vst [vmem:[#allocation3 + $0x480] sm:$0xff] %v2498
        %2531 = vst [vmem:[#allocation3 + $0x4c8] sm:$0xff] %v2499
        %2532 = vst [vmem:[#allocation3 + $0x510] sm:$0xff] %v2500
        %2533 = vst [vmem:[#allocation3 + $0x558] sm:$0xff] %v2501
        %2534 = vst [vmem:[#allocation3 + $0x5a0] sm:$0xff] %v2502
        %2535 = vst [vmem:[#allocation3 + $0x5e8] sm:$0xff] %v2503
        %2536 = vst [vmem:[#allocation3 + $0x630] sm:$0xff] %v2504
        %2537 = vst [vmem:[#allocation3 + $0x678] sm:$0xff] %v2505
        %2538 = vst [vmem:[#allocation3 + $0x6c0] sm:$0xff] %v2506
        %2539 = vst [vmem:[#allocation3 + $0x708] sm:$0xff] %v2507
        %2540 = vst [vmem:[#allocation3 + $0x750] sm:$0xff] %v2508
        %2541 = vst [vmem:[#allocation3 + $0x798] sm:$0xff] %v2509
        %2542 = vst [vmem:[#allocation3 + $0x7e0] sm:$0xff] %v2510
        %2543 = vst [vmem:[#allocation3 + $0x828] sm:$0xff] %v2511
        %2544 = vst [vmem:[#allocation3 + $0x870] sm:$0xff] %v2512
        %2545 = vst [vmem:[#allocation3 + $0x8b8] sm:$0xff] %v2513
        %v2546 = vld [vmem:[#allocation2 + $0x8] sm:$0xff]
        %v2547 = vld [vmem:[#allocation2 + $0x10] sm:$0xff]
        %v2548 = vld [vmem:[#allocation2 + $0x28] sm:$0xff]
        %v2549 = vld [vmem:[#allocation2 + $0x30] sm:$0xff]
        %v2550 = vld [vmem:[#allocation2 + $0x48] sm:$0xff]
        %v2551 = vld [vmem:[#allocation2 + $0x50] sm:$0xff]
        %v2552 = vld [vmem:[#allocation2 + $0x68] sm:$0xff]
        %v2553 = vld [vmem:[#allocation2 + $0x70] sm:$0xff]
        %v2554 = vld [vmem:[#allocation2 + $0x88] sm:$0xff]
        %v2555 = vld [vmem:[#allocation2 + $0x90] sm:$0xff]
        %v2556 = vld [vmem:[#allocation2 + $0xa8] sm:$0xff]
        %v2557 = vld [vmem:[#allocation2 + $0xb0] sm:$0xff]
        %v2558 = vld [vmem:[#allocation2 + $0xc8] sm:$0xff]
        %v2559 = vld [vmem:[#allocation2 + $0xd0] sm:$0xff]
        %v2560 = vld [vmem:[#allocation2 + $0xe8] sm:$0xff]
        %v2561 = vld [vmem:[#allocation2 + $0xf0] sm:$0xff]
        %v2562 = vld [vmem:[#allocation2 + $0x108] sm:$0xff]
        %v2563 = vld [vmem:[#allocation2 + $0x110] sm:$0xff]
        %v2564 = vld [vmem:[#allocation2 + $0x128] sm:$0xff]
        %v2565 = vld [vmem:[#allocation2 + $0x130] sm:$0xff]
        %v2566 = vld [vmem:[#allocation2 + $0x148] sm:$0xff]
        %v2567 = vld [vmem:[#allocation2 + $0x150] sm:$0xff]
        %v2568 = vld [vmem:[#allocation2 + $0x168] sm:$0xff]
        %v2569 = vld [vmem:[#allocation2 + $0x170] sm:$0xff]
        %v2570 = vld [vmem:[#allocation2 + $0x188] sm:$0xff]
        %v2571 = vld [vmem:[#allocation2 + $0x190] sm:$0xff]
        %v2572 = vld [vmem:[#allocation2 + $0x1a8] sm:$0xff]
        %v2573 = vld [vmem:[#allocation2 + $0x1b0] sm:$0xff]
        %v2574 = vld [vmem:[#allocation2 + $0x1c8] sm:$0xff]
        %v2575 = vld [vmem:[#allocation2 + $0x1d0] sm:$0xff]
        %v2576 = vld [vmem:[#allocation2 + $0x1e8] sm:$0xff]
        %v2577 = vld [vmem:[#allocation2 + $0x1f0] sm:$0xff]
        %2578 = vst [vmem:[#allocation3 + $0x8] sm:$0xff] %v2546
        %2579 = vst [vmem:[#allocation3 + $0x50] sm:$0xff] %v2547
        %2580 = vst [vmem:[#allocation3 + $0x98] sm:$0xff] %v2548
        %2581 = vst [vmem:[#allocation3 + $0xe0] sm:$0xff] %v2549
        %2582 = vst [vmem:[#allocation3 + $0x128] sm:$0xff] %v2550
        %2583 = vst [vmem:[#allocation3 + $0x170] sm:$0xff] %v2551
        %2584 = vst [vmem:[#allocation3 + $0x1b8] sm:$0xff] %v2552
        %2585 = vst [vmem:[#allocation3 + $0x200] sm:$0xff] %v2553
        %2586 = vst [vmem:[#allocation3 + $0x248] sm:$0xff] %v2554
        %2587 = vst [vmem:[#allocation3 + $0x290] sm:$0xff] %v2555
        %2588 = vst [vmem:[#allocation3 + $0x2d8] sm:$0xff] %v2556
        %2589 = vst [vmem:[#allocation3 + $0x320] sm:$0xff] %v2557
        %2590 = vst [vmem:[#allocation3 + $0x368] sm:$0xff] %v2558
        %2591 = vst [vmem:[#allocation3 + $0x3b0] sm:$0xff] %v2559
        %2592 = vst [vmem:[#allocation3 + $0x3f8] sm:$0xff] %v2560
        %2593 = vst [vmem:[#allocation3 + $0x440] sm:$0xff] %v2561
        %2594 = vst [vmem:[#allocation3 + $0x488] sm:$0xff] %v2562
        %2595 = vst [vmem:[#allocation3 + $0x4d0] sm:$0xff] %v2563
        %2596 = vst [vmem:[#allocation3 + $0x518] sm:$0xff] %v2564
        %2597 = vst [vmem:[#allocation3 + $0x560] sm:$0xff] %v2565
        %2598 = vst [vmem:[#allocation3 + $0x5a8] sm:$0xff] %v2566
        %2599 = vst [vmem:[#allocation3 + $0x5f0] sm:$0xff] %v2567
        %2600 = vst [vmem:[#allocation3 + $0x638] sm:$0xff] %v2568
        %2601 = vst [vmem:[#allocation3 + $0x680] sm:$0xff] %v2569
        %2602 = vst [vmem:[#allocation3 + $0x6c8] sm:$0xff] %v2570
        %2603 = vst [vmem:[#allocation3 + $0x710] sm:$0xff] %v2571
        %2604 = vst [vmem:[#allocation3 + $0x758] sm:$0xff] %v2572
        %2605 = vst [vmem:[#allocation3 + $0x7a0] sm:$0xff] %v2573
        %2606 = vst [vmem:[#allocation3 + $0x7e8] sm:$0xff] %v2574
        %2607 = vst [vmem:[#allocation3 + $0x830] sm:$0xff] %v2575
        %2608 = vst [vmem:[#allocation3 + $0x878] sm:$0xff] %v2576
        %2609 = vst [vmem:[#allocation3 + $0x8c0] sm:$0xff] %v2577
        %v2610 = vld [vmem:[#allocation2 + $0x9] sm:$0xff]
        %v2611 = vld [vmem:[#allocation2 + $0x11] sm:$0xff]
        %v2612 = vld [vmem:[#allocation2 + $0x29] sm:$0xff]
        %v2613 = vld [vmem:[#allocation2 + $0x31] sm:$0xff]
        %v2614 = vld [vmem:[#allocation2 + $0x49] sm:$0xff]
        %v2615 = vld [vmem:[#allocation2 + $0x51] sm:$0xff]
        %v2616 = vld [vmem:[#allocation2 + $0x69] sm:$0xff]
        %v2617 = vld [vmem:[#allocation2 + $0x71] sm:$0xff]
        %v2618 = vld [vmem:[#allocation2 + $0x89] sm:$0xff]
        %v2619 = vld [vmem:[#allocation2 + $0x91] sm:$0xff]
        %v2620 = vld [vmem:[#allocation2 + $0xa9] sm:$0xff]
        %v2621 = vld [vmem:[#allocation2 + $0xb1] sm:$0xff]
        %v2622 = vld [vmem:[#allocation2 + $0xc9] sm:$0xff]
        %v2623 = vld [vmem:[#allocation2 + $0xd1] sm:$0xff]
        %v2624 = vld [vmem:[#allocation2 + $0xe9] sm:$0xff]
        %v2625 = vld [vmem:[#allocation2 + $0xf1] sm:$0xff]
        %v2626 = vld [vmem:[#allocation2 + $0x109] sm:$0xff]
        %v2627 = vld [vmem:[#allocation2 + $0x111] sm:$0xff]
        %v2628 = vld [vmem:[#allocation2 + $0x129] sm:$0xff]
        %v2629 = vld [vmem:[#allocation2 + $0x131] sm:$0xff]
        %v2630 = vld [vmem:[#allocation2 + $0x149] sm:$0xff]
        %v2631 = vld [vmem:[#allocation2 + $0x151] sm:$0xff]
        %v2632 = vld [vmem:[#allocation2 + $0x169] sm:$0xff]
        %v2633 = vld [vmem:[#allocation2 + $0x171] sm:$0xff]
        %v2634 = vld [vmem:[#allocation2 + $0x189] sm:$0xff]
        %v2635 = vld [vmem:[#allocation2 + $0x191] sm:$0xff]
        %v2636 = vld [vmem:[#allocation2 + $0x1a9] sm:$0xff]
        %v2637 = vld [vmem:[#allocation2 + $0x1b1] sm:$0xff]
        %v2638 = vld [vmem:[#allocation2 + $0x1c9] sm:$0xff]
        %v2639 = vld [vmem:[#allocation2 + $0x1d1] sm:$0xff]
        %v2640 = vld [vmem:[#allocation2 + $0x1e9] sm:$0xff]
        %v2641 = vld [vmem:[#allocation2 + $0x1f1] sm:$0xff]
        %2642 = vst [vmem:[#allocation3 + $0x10] sm:$0xff] %v2610
        %2643 = vst [vmem:[#allocation3 + $0x58] sm:$0xff] %v2611
        %2644 = vst [vmem:[#allocation3 + $0xa0] sm:$0xff] %v2612
        %2645 = vst [vmem:[#allocation3 + $0xe8] sm:$0xff] %v2613
        %2646 = vst [vmem:[#allocation3 + $0x130] sm:$0xff] %v2614
        %2647 = vst [vmem:[#allocation3 + $0x178] sm:$0xff] %v2615
        %2648 = vst [vmem:[#allocation3 + $0x1c0] sm:$0xff] %v2616
        %2649 = vst [vmem:[#allocation3 + $0x208] sm:$0xff] %v2617
        %2650 = vst [vmem:[#allocation3 + $0x250] sm:$0xff] %v2618
        %2651 = vst [vmem:[#allocation3 + $0x298] sm:$0xff] %v2619
        %2652 = vst [vmem:[#allocation3 + $0x2e0] sm:$0xff] %v2620
        %2653 = vst [vmem:[#allocation3 + $0x328] sm:$0xff] %v2621
        %2654 = vst [vmem:[#allocation3 + $0x370] sm:$0xff] %v2622
        %2655 = vst [vmem:[#allocation3 + $0x3b8] sm:$0xff] %v2623
        %2656 = vst [vmem:[#allocation3 + $0x400] sm:$0xff] %v2624
        %2657 = vst [vmem:[#allocation3 + $0x448] sm:$0xff] %v2625
        %2658 = vst [vmem:[#allocation3 + $0x490] sm:$0xff] %v2626
        %2659 = vst [vmem:[#allocation3 + $0x4d8] sm:$0xff] %v2627
        %2660 = vst [vmem:[#allocation3 + $0x520] sm:$0xff] %v2628
        %2661 = vst [vmem:[#allocation3 + $0x568] sm:$0xff] %v2629
        %2662 = vst [vmem:[#allocation3 + $0x5b0] sm:$0xff] %v2630
        %2663 = vst [vmem:[#allocation3 + $0x5f8] sm:$0xff] %v2631
        %2664 = vst [vmem:[#allocation3 + $0x640] sm:$0xff] %v2632
        %2665 = vst [vmem:[#allocation3 + $0x688] sm:$0xff] %v2633
        %2666 = vst [vmem:[#allocation3 + $0x6d0] sm:$0xff] %v2634
        %2667 = vst [vmem:[#allocation3 + $0x718] sm:$0xff] %v2635
        %2668 = vst [vmem:[#allocation3 + $0x760] sm:$0xff] %v2636
        %2669 = vst [vmem:[#allocation3 + $0x7a8] sm:$0xff] %v2637
        %2670 = vst [vmem:[#allocation3 + $0x7f0] sm:$0xff] %v2638
        %2671 = vst [vmem:[#allocation3 + $0x838] sm:$0xff] %v2639
        %2672 = vst [vmem:[#allocation3 + $0x880] sm:$0xff] %v2640
        %2673 = vst [vmem:[#allocation3 + $0x8c8] sm:$0xff] %v2641
        %v2674 = vld [vmem:[%s355 + $0x7] sm:$0xff]
        %v2675 = vld [vmem:[%s355 + $0xf] sm:$0xff]
        %v2676 = vld [vmem:[%s355 + $0x27] sm:$0xff]
        %v2677 = vld [vmem:[%s355 + $0x2f] sm:$0xff]
        %v2678 = vld [vmem:[%s355 + $0x47] sm:$0xff]
        %v2679 = vld [vmem:[%s355 + $0x4f] sm:$0xff]
        %v2680 = vld [vmem:[%s355 + $0x67] sm:$0xff]
        %v2681 = vld [vmem:[%s355 + $0x6f] sm:$0xff]
        %v2682 = vld [vmem:[%s355 + $0x87] sm:$0xff]
        %v2683 = vld [vmem:[%s355 + $0x8f] sm:$0xff]
        %v2684 = vld [vmem:[%s355 + $0xa7] sm:$0xff]
        %v2685 = vld [vmem:[%s355 + $0xaf] sm:$0xff]
        %v2686 = vld [vmem:[%s355 + $0xc7] sm:$0xff]
        %v2687 = vld [vmem:[%s355 + $0xcf] sm:$0xff]
        %v2688 = vld [vmem:[%s355 + $0xe7] sm:$0xff]
        %v2689 = vld [vmem:[%s355 + $0xef] sm:$0xff]
        %v2690 = vld [vmem:[%s355 + $0x107] sm:$0xff]
        %v2691 = vld [vmem:[%s355 + $0x10f] sm:$0xff]
        %v2692 = vld [vmem:[%s355 + $0x127] sm:$0xff]
        %v2693 = vld [vmem:[%s355 + $0x12f] sm:$0xff]
        %v2694 = vld [vmem:[%s355 + $0x147] sm:$0xff]
        %v2695 = vld [vmem:[%s355 + $0x14f] sm:$0xff]
        %v2696 = vld [vmem:[%s355 + $0x167] sm:$0xff]
        %v2697 = vld [vmem:[%s355 + $0x16f] sm:$0xff]
        %v2698 = vld [vmem:[%s355 + $0x187] sm:$0xff]
        %v2699 = vld [vmem:[%s355 + $0x18f] sm:$0xff]
        %v2700 = vld [vmem:[%s355 + $0x1a7] sm:$0xff]
        %v2701 = vld [vmem:[%s355 + $0x1af] sm:$0xff]
        %v2702 = vld [vmem:[%s355 + $0x1c7] sm:$0xff]
        %v2703 = vld [vmem:[%s355 + $0x1cf] sm:$0xff]
        %v2704 = vld [vmem:[%s355 + $0x1e7] sm:$0xff]
        %v2705 = vld [vmem:[%s355 + $0x1ef] sm:$0xff]
        %2706 = vst [vmem:[#allocation3 + $0x18] sm:$0xff] %v2674
        %2707 = vst [vmem:[#allocation3 + $0x60] sm:$0xff] %v2675
        %2708 = vst [vmem:[#allocation3 + $0xa8] sm:$0xff] %v2676
        %2709 = vst [vmem:[#allocation3 + $0xf0] sm:$0xff] %v2677
        %2710 = vst [vmem:[#allocation3 + $0x138] sm:$0xff] %v2678
        %2711 = vst [vmem:[#allocation3 + $0x180] sm:$0xff] %v2679
        %2712 = vst [vmem:[#allocation3 + $0x1c8] sm:$0xff] %v2680
        %2713 = vst [vmem:[#allocation3 + $0x210] sm:$0xff] %v2681
        %2714 = vst [vmem:[#allocation3 + $0x258] sm:$0xff] %v2682
        %2715 = vst [vmem:[#allocation3 + $0x2a0] sm:$0xff] %v2683
        %2716 = vst [vmem:[#allocation3 + $0x2e8] sm:$0xff] %v2684
        %2717 = vst [vmem:[#allocation3 + $0x330] sm:$0xff] %v2685
        %2718 = vst [vmem:[#allocation3 + $0x378] sm:$0xff] %v2686
        %2719 = vst [vmem:[#allocation3 + $0x3c0] sm:$0xff] %v2687
        %2720 = vst [vmem:[#allocation3 + $0x408] sm:$0xff] %v2688
        %2721 = vst [vmem:[#allocation3 + $0x450] sm:$0xff] %v2689
        %2722 = vst [vmem:[#allocation3 + $0x498] sm:$0xff] %v2690
        %2723 = vst [vmem:[#allocation3 + $0x4e0] sm:$0xff] %v2691
        %2724 = vst [vmem:[#allocation3 + $0x528] sm:$0xff] %v2692
        %2725 = vst [vmem:[#allocation3 + $0x570] sm:$0xff] %v2693
        %2726 = vst [vmem:[#allocation3 + $0x5b8] sm:$0xff] %v2694
        %2727 = vst [vmem:[#allocation3 + $0x600] sm:$0xff] %v2695
        %2728 = vst [vmem:[#allocation3 + $0x648] sm:$0xff] %v2696
        %2729 = vst [vmem:[#allocation3 + $0x690] sm:$0xff] %v2697
        %2730 = vst [vmem:[#allocation3 + $0x6d8] sm:$0xff] %v2698
        %2731 = vst [vmem:[#allocation3 + $0x720] sm:$0xff] %v2699
        %2732 = vst [vmem:[#allocation3 + $0x768] sm:$0xff] %v2700
        %2733 = vst [vmem:[#allocation3 + $0x7b0] sm:$0xff] %v2701
        %2734 = vst [vmem:[#allocation3 + $0x7f8] sm:$0xff] %v2702
        %2735 = vst [vmem:[#allocation3 + $0x840] sm:$0xff] %v2703
        %2736 = vst [vmem:[#allocation3 + $0x888] sm:$0xff] %v2704
        %2737 = vst [vmem:[#allocation3 + $0x8d0] sm:$0xff] %v2705
        %v2738 = vld [vmem:[%s355 + $0x8] sm:$0xff]
        %v2739 = vld [vmem:[%s355 + $0x10] sm:$0xff]
        %v2740 = vld [vmem:[%s355 + $0x28] sm:$0xff]
        %v2741 = vld [vmem:[%s355 + $0x30] sm:$0xff]
        %v2742 = vld [vmem:[%s355 + $0x48] sm:$0xff]
        %v2743 = vld [vmem:[%s355 + $0x50] sm:$0xff]
        %v2744 = vld [vmem:[%s355 + $0x68] sm:$0xff]
        %v2745 = vld [vmem:[%s355 + $0x70] sm:$0xff]
        %v2746 = vld [vmem:[%s355 + $0x88] sm:$0xff]
        %v2747 = vld [vmem:[%s355 + $0x90] sm:$0xff]
        %v2748 = vld [vmem:[%s355 + $0xa8] sm:$0xff]
        %v2749 = vld [vmem:[%s355 + $0xb0] sm:$0xff]
        %v2750 = vld [vmem:[%s355 + $0xc8] sm:$0xff]
        %v2751 = vld [vmem:[%s355 + $0xd0] sm:$0xff]
        %v2752 = vld [vmem:[%s355 + $0xe8] sm:$0xff]
        %v2753 = vld [vmem:[%s355 + $0xf0] sm:$0xff]
        %v2754 = vld [vmem:[%s355 + $0x108] sm:$0xff]
        %v2755 = vld [vmem:[%s355 + $0x110] sm:$0xff]
        %v2756 = vld [vmem:[%s355 + $0x128] sm:$0xff]
        %v2757 = vld [vmem:[%s355 + $0x130] sm:$0xff]
        %v2758 = vld [vmem:[%s355 + $0x148] sm:$0xff]
        %v2759 = vld [vmem:[%s355 + $0x150] sm:$0xff]
        %v2760 = vld [vmem:[%s355 + $0x168] sm:$0xff]
        %v2761 = vld [vmem:[%s355 + $0x170] sm:$0xff]
        %v2762 = vld [vmem:[%s355 + $0x188] sm:$0xff]
        %v2763 = vld [vmem:[%s355 + $0x190] sm:$0xff]
        %v2764 = vld [vmem:[%s355 + $0x1a8] sm:$0xff]
        %v2765 = vld [vmem:[%s355 + $0x1b0] sm:$0xff]
        %v2766 = vld [vmem:[%s355 + $0x1c8] sm:$0xff]
        %v2767 = vld [vmem:[%s355 + $0x1d0] sm:$0xff]
        %v2768 = vld [vmem:[%s355 + $0x1e8] sm:$0xff]
        %v2769 = vld [vmem:[%s355 + $0x1f0] sm:$0xff]
        %2770 = vst [vmem:[#allocation3 + $0x20] sm:$0xff] %v2738
        %2771 = vst [vmem:[#allocation3 + $0x68] sm:$0xff] %v2739
        %2772 = vst [vmem:[#allocation3 + $0xb0] sm:$0xff] %v2740
        %2773 = vst [vmem:[#allocation3 + $0xf8] sm:$0xff] %v2741
        %2774 = vst [vmem:[#allocation3 + $0x140] sm:$0xff] %v2742
        %2775 = vst [vmem:[#allocation3 + $0x188] sm:$0xff] %v2743
        %2776 = vst [vmem:[#allocation3 + $0x1d0] sm:$0xff] %v2744
        %2777 = vst [vmem:[#allocation3 + $0x218] sm:$0xff] %v2745
        %2778 = vst [vmem:[#allocation3 + $0x260] sm:$0xff] %v2746
        %2779 = vst [vmem:[#allocation3 + $0x2a8] sm:$0xff] %v2747
        %2780 = vst [vmem:[#allocation3 + $0x2f0] sm:$0xff] %v2748
        %2781 = vst [vmem:[#allocation3 + $0x338] sm:$0xff] %v2749
        %2782 = vst [vmem:[#allocation3 + $0x380] sm:$0xff] %v2750
        %2783 = vst [vmem:[#allocation3 + $0x3c8] sm:$0xff] %v2751
        %2784 = vst [vmem:[#allocation3 + $0x410] sm:$0xff] %v2752
        %2785 = vst [vmem:[#allocation3 + $0x458] sm:$0xff] %v2753
        %2786 = vst [vmem:[#allocation3 + $0x4a0] sm:$0xff] %v2754
        %2787 = vst [vmem:[#allocation3 + $0x4e8] sm:$0xff] %v2755
        %2788 = vst [vmem:[#allocation3 + $0x530] sm:$0xff] %v2756
        %2789 = vst [vmem:[#allocation3 + $0x578] sm:$0xff] %v2757
        %2790 = vst [vmem:[#allocation3 + $0x5c0] sm:$0xff] %v2758
        %2791 = vst [vmem:[#allocation3 + $0x608] sm:$0xff] %v2759
        %2792 = vst [vmem:[#allocation3 + $0x650] sm:$0xff] %v2760
        %2793 = vst [vmem:[#allocation3 + $0x698] sm:$0xff] %v2761
        %2794 = vst [vmem:[#allocation3 + $0x6e0] sm:$0xff] %v2762
        %2795 = vst [vmem:[#allocation3 + $0x728] sm:$0xff] %v2763
        %2796 = vst [vmem:[#allocation3 + $0x770] sm:$0xff] %v2764
        %2797 = vst [vmem:[#allocation3 + $0x7b8] sm:$0xff] %v2765
        %2798 = vst [vmem:[#allocation3 + $0x800] sm:$0xff] %v2766
        %2799 = vst [vmem:[#allocation3 + $0x848] sm:$0xff] %v2767
        %2800 = vst [vmem:[#allocation3 + $0x890] sm:$0xff] %v2768
        %2801 = vst [vmem:[#allocation3 + $0x8d8] sm:$0xff] %v2769
        %v2802 = vld [vmem:[%s355 + $0x9] sm:$0xff]
        %v2803 = vld [vmem:[%s355 + $0x11] sm:$0xff]
        %v2804 = vld [vmem:[%s355 + $0x29] sm:$0xff]
        %v2805 = vld [vmem:[%s355 + $0x31] sm:$0xff]
        %v2806 = vld [vmem:[%s355 + $0x49] sm:$0xff]
        %v2807 = vld [vmem:[%s355 + $0x51] sm:$0xff]
        %v2808 = vld [vmem:[%s355 + $0x69] sm:$0xff]
        %v2809 = vld [vmem:[%s355 + $0x71] sm:$0xff]
        %v2810 = vld [vmem:[%s355 + $0x89] sm:$0xff]
        %v2811 = vld [vmem:[%s355 + $0x91] sm:$0xff]
        %v2812 = vld [vmem:[%s355 + $0xa9] sm:$0xff]
        %v2813 = vld [vmem:[%s355 + $0xb1] sm:$0xff]
        %v2814 = vld [vmem:[%s355 + $0xc9] sm:$0xff]
        %v2815 = vld [vmem:[%s355 + $0xd1] sm:$0xff]
        %v2816 = vld [vmem:[%s355 + $0xe9] sm:$0xff]
        %v2817 = vld [vmem:[%s355 + $0xf1] sm:$0xff]
        %v2818 = vld [vmem:[%s355 + $0x109] sm:$0xff]
        %v2819 = vld [vmem:[%s355 + $0x111] sm:$0xff]
        %v2820 = vld [vmem:[%s355 + $0x129] sm:$0xff]
        %v2821 = vld [vmem:[%s355 + $0x131] sm:$0xff]
        %v2822 = vld [vmem:[%s355 + $0x149] sm:$0xff]
        %v2823 = vld [vmem:[%s355 + $0x151] sm:$0xff]
        %v2824 = vld [vmem:[%s355 + $0x169] sm:$0xff]
        %v2825 = vld [vmem:[%s355 + $0x171] sm:$0xff]
        %v2826 = vld [vmem:[%s355 + $0x189] sm:$0xff]
        %v2827 = vld [vmem:[%s355 + $0x191] sm:$0xff]
        %v2828 = vld [vmem:[%s355 + $0x1a9] sm:$0xff]
        %v2829 = vld [vmem:[%s355 + $0x1b1] sm:$0xff]
        %v2830 = vld [vmem:[%s355 + $0x1c9] sm:$0xff]
        %v2831 = vld [vmem:[%s355 + $0x1d1] sm:$0xff]
        %v2832 = vld [vmem:[%s355 + $0x1e9] sm:$0xff]
        %v2833 = vld [vmem:[%s355 + $0x1f1] sm:$0xff]
        %2834 = vst [vmem:[#allocation3 + $0x28] sm:$0xff] %v2802
        %2835 = vst [vmem:[#allocation3 + $0x70] sm:$0xff] %v2803
        %2836 = vst [vmem:[#allocation3 + $0xb8] sm:$0xff] %v2804
        %2837 = vst [vmem:[#allocation3 + $0x100] sm:$0xff] %v2805
        %2838 = vst [vmem:[#allocation3 + $0x148] sm:$0xff] %v2806
        %2839 = vst [vmem:[#allocation3 + $0x190] sm:$0xff] %v2807
        %2840 = vst [vmem:[#allocation3 + $0x1d8] sm:$0xff] %v2808
        %2841 = vst [vmem:[#allocation3 + $0x220] sm:$0xff] %v2809
        %2842 = vst [vmem:[#allocation3 + $0x268] sm:$0xff] %v2810
        %2843 = vst [vmem:[#allocation3 + $0x2b0] sm:$0xff] %v2811
        %2844 = vst [vmem:[#allocation3 + $0x2f8] sm:$0xff] %v2812
        %2845 = vst [vmem:[#allocation3 + $0x340] sm:$0xff] %v2813
        %2846 = vst [vmem:[#allocation3 + $0x388] sm:$0xff] %v2814
        %2847 = vst [vmem:[#allocation3 + $0x3d0] sm:$0xff] %v2815
        %2848 = vst [vmem:[#allocation3 + $0x418] sm:$0xff] %v2816
        %2849 = vst [vmem:[#allocation3 + $0x460] sm:$0xff] %v2817
        %2850 = vst [vmem:[#allocation3 + $0x4a8] sm:$0xff] %v2818
        %2851 = vst [vmem:[#allocation3 + $0x4f0] sm:$0xff] %v2819
        %2852 = vst [vmem:[#allocation3 + $0x538] sm:$0xff] %v2820
        %2853 = vst [vmem:[#allocation3 + $0x580] sm:$0xff] %v2821
        %2854 = vst [vmem:[#allocation3 + $0x5c8] sm:$0xff] %v2822
        %2855 = vst [vmem:[#allocation3 + $0x610] sm:$0xff] %v2823
        %2856 = vst [vmem:[#allocation3 + $0x658] sm:$0xff] %v2824
        %2857 = vst [vmem:[#allocation3 + $0x6a0] sm:$0xff] %v2825
        %2858 = vst [vmem:[#allocation3 + $0x6e8] sm:$0xff] %v2826
        %2859 = vst [vmem:[#allocation3 + $0x730] sm:$0xff] %v2827
        %2860 = vst [vmem:[#allocation3 + $0x778] sm:$0xff] %v2828
        %2861 = vst [vmem:[#allocation3 + $0x7c0] sm:$0xff] %v2829
        %2862 = vst [vmem:[#allocation3 + $0x808] sm:$0xff] %v2830
        %2863 = vst [vmem:[#allocation3 + $0x850] sm:$0xff] %v2831
        %2864 = vst [vmem:[#allocation3 + $0x898] sm:$0xff] %v2832
        %2865 = vst [vmem:[#allocation3 + $0x8e0] sm:$0xff] %v2833
        %v2866 = vld [vmem:[%s772 + $0x7] sm:$0xff]
        %v2867 = vld [vmem:[%s772 + $0xf] sm:$0xff]
        %v2868 = vld [vmem:[%s772 + $0x27] sm:$0xff]
        %v2869 = vld [vmem:[%s772 + $0x2f] sm:$0xff]
        %v2870 = vld [vmem:[%s772 + $0x47] sm:$0xff]
        %v2871 = vld [vmem:[%s772 + $0x4f] sm:$0xff]
        %v2872 = vld [vmem:[%s772 + $0x67] sm:$0xff]
        %v2873 = vld [vmem:[%s772 + $0x6f] sm:$0xff]
        %v2874 = vld [vmem:[%s772 + $0x87] sm:$0xff]
        %v2875 = vld [vmem:[%s772 + $0x8f] sm:$0xff]
        %v2876 = vld [vmem:[%s772 + $0xa7] sm:$0xff]
        %v2877 = vld [vmem:[%s772 + $0xaf] sm:$0xff]
        %v2878 = vld [vmem:[%s772 + $0xc7] sm:$0xff]
        %v2879 = vld [vmem:[%s772 + $0xcf] sm:$0xff]
        %v2880 = vld [vmem:[%s772 + $0xe7] sm:$0xff]
        %v2881 = vld [vmem:[%s772 + $0xef] sm:$0xff]
        %v2882 = vld [vmem:[%s772 + $0x107] sm:$0xff]
        %v2883 = vld [vmem:[%s772 + $0x10f] sm:$0xff]
        %v2884 = vld [vmem:[%s772 + $0x127] sm:$0xff]
        %v2885 = vld [vmem:[%s772 + $0x12f] sm:$0xff]
        %v2886 = vld [vmem:[%s772 + $0x147] sm:$0xff]
        %v2887 = vld [vmem:[%s772 + $0x14f] sm:$0xff]
        %v2888 = vld [vmem:[%s772 + $0x167] sm:$0xff]
        %v2889 = vld [vmem:[%s772 + $0x16f] sm:$0xff]
        %v2890 = vld [vmem:[%s772 + $0x187] sm:$0xff]
        %v2891 = vld [vmem:[%s772 + $0x18f] sm:$0xff]
        %v2892 = vld [vmem:[%s772 + $0x1a7] sm:$0xff]
        %v2893 = vld [vmem:[%s772 + $0x1af] sm:$0xff]
        %v2894 = vld [vmem:[%s772 + $0x1c7] sm:$0xff]
        %v2895 = vld [vmem:[%s772 + $0x1cf] sm:$0xff]
        %v2896 = vld [vmem:[%s772 + $0x1e7] sm:$0xff]
        %v2897 = vld [vmem:[%s772 + $0x1ef] sm:$0xff]
        %2898 = vst [vmem:[#allocation3 + $0x30] sm:$0xff] %v2866
        %2899 = vst [vmem:[#allocation3 + $0x78] sm:$0xff] %v2867
        %2900 = vst [vmem:[#allocation3 + $0xc0] sm:$0xff] %v2868
        %2901 = vst [vmem:[#allocation3 + $0x108] sm:$0xff] %v2869
        %2902 = vst [vmem:[#allocation3 + $0x150] sm:$0xff] %v2870
        %2903 = vst [vmem:[#allocation3 + $0x198] sm:$0xff] %v2871
        %2904 = vst [vmem:[#allocation3 + $0x1e0] sm:$0xff] %v2872
        %2905 = vst [vmem:[#allocation3 + $0x228] sm:$0xff] %v2873
        %2906 = vst [vmem:[#allocation3 + $0x270] sm:$0xff] %v2874
        %2907 = vst [vmem:[#allocation3 + $0x2b8] sm:$0xff] %v2875
        %2908 = vst [vmem:[#allocation3 + $0x300] sm:$0xff] %v2876
        %2909 = vst [vmem:[#allocation3 + $0x348] sm:$0xff] %v2877
        %2910 = vst [vmem:[#allocation3 + $0x390] sm:$0xff] %v2878
        %2911 = vst [vmem:[#allocation3 + $0x3d8] sm:$0xff] %v2879
        %2912 = vst [vmem:[#allocation3 + $0x420] sm:$0xff] %v2880
        %2913 = vst [vmem:[#allocation3 + $0x468] sm:$0xff] %v2881
        %2914 = vst [vmem:[#allocation3 + $0x4b0] sm:$0xff] %v2882
        %2915 = vst [vmem:[#allocation3 + $0x4f8] sm:$0xff] %v2883
        %2916 = vst [vmem:[#allocation3 + $0x540] sm:$0xff] %v2884
        %2917 = vst [vmem:[#allocation3 + $0x588] sm:$0xff] %v2885
        %2918 = vst [vmem:[#allocation3 + $0x5d0] sm:$0xff] %v2886
        %2919 = vst [vmem:[#allocation3 + $0x618] sm:$0xff] %v2887
        %2920 = vst [vmem:[#allocation3 + $0x660] sm:$0xff] %v2888
        %2921 = vst [vmem:[#allocation3 + $0x6a8] sm:$0xff] %v2889
        %2922 = vst [vmem:[#allocation3 + $0x6f0] sm:$0xff] %v2890
        %2923 = vst [vmem:[#allocation3 + $0x738] sm:$0xff] %v2891
        %2924 = vst [vmem:[#allocation3 + $0x780] sm:$0xff] %v2892
        %2925 = vst [vmem:[#allocation3 + $0x7c8] sm:$0xff] %v2893
        %2926 = vst [vmem:[#allocation3 + $0x810] sm:$0xff] %v2894
        %2927 = vst [vmem:[#allocation3 + $0x858] sm:$0xff] %v2895
        %2928 = vst [vmem:[#allocation3 + $0x8a0] sm:$0xff] %v2896
        %2929 = vst [vmem:[#allocation3 + $0x8e8] sm:$0xff] %v2897
        %v2930 = vld [vmem:[%s772 + $0x8] sm:$0xff]
        %v2931 = vld [vmem:[%s772 + $0x10] sm:$0xff]
        %v2932 = vld [vmem:[%s772 + $0x28] sm:$0xff]
        %v2933 = vld [vmem:[%s772 + $0x30] sm:$0xff]
        %v2934 = vld [vmem:[%s772 + $0x48] sm:$0xff]
        %v2935 = vld [vmem:[%s772 + $0x50] sm:$0xff]
        %v2936 = vld [vmem:[%s772 + $0x68] sm:$0xff]
        %v2937 = vld [vmem:[%s772 + $0x70] sm:$0xff]
        %v2938 = vld [vmem:[%s772 + $0x88] sm:$0xff]
        %v2939 = vld [vmem:[%s772 + $0x90] sm:$0xff]
        %v2940 = vld [vmem:[%s772 + $0xa8] sm:$0xff]
        %v2941 = vld [vmem:[%s772 + $0xb0] sm:$0xff]
        %v2942 = vld [vmem:[%s772 + $0xc8] sm:$0xff]
        %v2943 = vld [vmem:[%s772 + $0xd0] sm:$0xff]
        %v2944 = vld [vmem:[%s772 + $0xe8] sm:$0xff]
        %v2945 = vld [vmem:[%s772 + $0xf0] sm:$0xff]
        %v2946 = vld [vmem:[%s772 + $0x108] sm:$0xff]
        %v2947 = vld [vmem:[%s772 + $0x110] sm:$0xff]
        %v2948 = vld [vmem:[%s772 + $0x128] sm:$0xff]
        %v2949 = vld [vmem:[%s772 + $0x130] sm:$0xff]
        %v2950 = vld [vmem:[%s772 + $0x148] sm:$0xff]
        %v2951 = vld [vmem:[%s772 + $0x150] sm:$0xff]
        %v2952 = vld [vmem:[%s772 + $0x168] sm:$0xff]
        %v2953 = vld [vmem:[%s772 + $0x170] sm:$0xff]
        %v2954 = vld [vmem:[%s772 + $0x188] sm:$0xff]
        %v2955 = vld [vmem:[%s772 + $0x190] sm:$0xff]
        %v2956 = vld [vmem:[%s772 + $0x1a8] sm:$0xff]
        %v2957 = vld [vmem:[%s772 + $0x1b0] sm:$0xff]
        %v2958 = vld [vmem:[%s772 + $0x1c8] sm:$0xff]
        %v2959 = vld [vmem:[%s772 + $0x1d0] sm:$0xff]
        %v2960 = vld [vmem:[%s772 + $0x1e8] sm:$0xff]
        %v2961 = vld [vmem:[%s772 + $0x1f0] sm:$0xff]
        %2962 = vst [vmem:[#allocation3 + $0x38] sm:$0xff] %v2930
        %2963 = vst [vmem:[#allocation3 + $0x80] sm:$0xff] %v2931
        %2964 = vst [vmem:[#allocation3 + $0xc8] sm:$0xff] %v2932
        %2965 = vst [vmem:[#allocation3 + $0x110] sm:$0xff] %v2933
        %2966 = vst [vmem:[#allocation3 + $0x158] sm:$0xff] %v2934
        %2967 = vst [vmem:[#allocation3 + $0x1a0] sm:$0xff] %v2935
        %2968 = vst [vmem:[#allocation3 + $0x1e8] sm:$0xff] %v2936
        %2969 = vst [vmem:[#allocation3 + $0x230] sm:$0xff] %v2937
        %2970 = vst [vmem:[#allocation3 + $0x278] sm:$0xff] %v2938
        %2971 = vst [vmem:[#allocation3 + $0x2c0] sm:$0xff] %v2939
        %2972 = vst [vmem:[#allocation3 + $0x308] sm:$0xff] %v2940
        %2973 = vst [vmem:[#allocation3 + $0x350] sm:$0xff] %v2941
        %2974 = vst [vmem:[#allocation3 + $0x398] sm:$0xff] %v2942
        %2975 = vst [vmem:[#allocation3 + $0x3e0] sm:$0xff] %v2943
        %2976 = vst [vmem:[#allocation3 + $0x428] sm:$0xff] %v2944
        %2977 = vst [vmem:[#allocation3 + $0x470] sm:$0xff] %v2945
        %2978 = vst [vmem:[#allocation3 + $0x4b8] sm:$0xff] %v2946
        %2979 = vst [vmem:[#allocation3 + $0x500] sm:$0xff] %v2947
        %2980 = vst [vmem:[#allocation3 + $0x548] sm:$0xff] %v2948
        %2981 = vst [vmem:[#allocation3 + $0x590] sm:$0xff] %v2949
        %2982 = vst [vmem:[#allocation3 + $0x5d8] sm:$0xff] %v2950
        %2983 = vst [vmem:[#allocation3 + $0x620] sm:$0xff] %v2951
        %2984 = vst [vmem:[#allocation3 + $0x668] sm:$0xff] %v2952
        %2985 = vst [vmem:[#allocation3 + $0x6b0] sm:$0xff] %v2953
        %2986 = vst [vmem:[#allocation3 + $0x6f8] sm:$0xff] %v2954
        %2987 = vst [vmem:[#allocation3 + $0x740] sm:$0xff] %v2955
        %2988 = vst [vmem:[#allocation3 + $0x788] sm:$0xff] %v2956
        %2989 = vst [vmem:[#allocation3 + $0x7d0] sm:$0xff] %v2957
        %2990 = vst [vmem:[#allocation3 + $0x818] sm:$0xff] %v2958
        %2991 = vst [vmem:[#allocation3 + $0x860] sm:$0xff] %v2959
        %2992 = vst [vmem:[#allocation3 + $0x8a8] sm:$0xff] %v2960
        %2993 = vst [vmem:[#allocation3 + $0x8f0] sm:$0xff] %v2961
        %v2994 = vld [vmem:[%s772 + $0x9] sm:$0xff]
        %v2995 = vld [vmem:[%s772 + $0x11] sm:$0xff]
        %v2996 = vld [vmem:[%s772 + $0x29] sm:$0xff]
        %v2997 = vld [vmem:[%s772 + $0x31] sm:$0xff]
        %v2998 = vld [vmem:[%s772 + $0x49] sm:$0xff]
        %v2999 = vld [vmem:[%s772 + $0x51] sm:$0xff]
        %v3000 = vld [vmem:[%s772 + $0x69] sm:$0xff]
        %v3001 = vld [vmem:[%s772 + $0x71] sm:$0xff]
        %v3002 = vld [vmem:[%s772 + $0x89] sm:$0xff]
        %v3003 = vld [vmem:[%s772 + $0x91] sm:$0xff]
        %v3004 = vld [vmem:[%s772 + $0xa9] sm:$0xff]
        %v3005 = vld [vmem:[%s772 + $0xb1] sm:$0xff]
        %v3006 = vld [vmem:[%s772 + $0xc9] sm:$0xff]
        %v3007 = vld [vmem:[%s772 + $0xd1] sm:$0xff]
        %v3008 = vld [vmem:[%s772 + $0xe9] sm:$0xff]
        %v3009 = vld [vmem:[%s772 + $0xf1] sm:$0xff]
        %v3010 = vld [vmem:[%s772 + $0x109] sm:$0xff]
        %v3011 = vld [vmem:[%s772 + $0x111] sm:$0xff]
        %v3012 = vld [vmem:[%s772 + $0x129] sm:$0xff]
        %v3013 = vld [vmem:[%s772 + $0x131] sm:$0xff]
        %v3014 = vld [vmem:[%s772 + $0x149] sm:$0xff]
        %v3015 = vld [vmem:[%s772 + $0x151] sm:$0xff]
        %v3016 = vld [vmem:[%s772 + $0x169] sm:$0xff]
        %v3017 = vld [vmem:[%s772 + $0x171] sm:$0xff]
        %v3018 = vld [vmem:[%s772 + $0x189] sm:$0xff]
        %v3019 = vld [vmem:[%s772 + $0x191] sm:$0xff]
        %v3020 = vld [vmem:[%s772 + $0x1a9] sm:$0xff]
        %v3021 = vld [vmem:[%s772 + $0x1b1] sm:$0xff]
        %v3022 = vld [vmem:[%s772 + $0x1c9] sm:$0xff]
        %v3023 = vld [vmem:[%s772 + $0x1d1] sm:$0xff]
        %v3024 = vld [vmem:[%s772 + $0x1e9] sm:$0xff]
        %v3025 = vld [vmem:[%s772 + $0x1f1] sm:$0xff]
        %3026 = vst [vmem:[#allocation3 + $0x40] sm:$0xff] %v2994
        %3027 = vst [vmem:[#allocation3 + $0x88] sm:$0xff] %v2995
        %3028 = vst [vmem:[#allocation3 + $0xd0] sm:$0xff] %v2996
        %3029 = vst [vmem:[#allocation3 + $0x118] sm:$0xff] %v2997
        %3030 = vst [vmem:[#allocation3 + $0x160] sm:$0xff] %v2998
        %3031 = vst [vmem:[#allocation3 + $0x1a8] sm:$0xff] %v2999
        %3032 = vst [vmem:[#allocation3 + $0x1f0] sm:$0xff] %v3000
        %3033 = vst [vmem:[#allocation3 + $0x238] sm:$0xff] %v3001
        %3034 = vst [vmem:[#allocation3 + $0x280] sm:$0xff] %v3002
        %3035 = vst [vmem:[#allocation3 + $0x2c8] sm:$0xff] %v3003
        %3036 = vst [vmem:[#allocation3 + $0x310] sm:$0xff] %v3004
        %3037 = vst [vmem:[#allocation3 + $0x358] sm:$0xff] %v3005
        %3038 = vst [vmem:[#allocation3 + $0x3a0] sm:$0xff] %v3006
        %3039 = vst [vmem:[#allocation3 + $0x3e8] sm:$0xff] %v3007
        %3040 = vst [vmem:[#allocation3 + $0x430] sm:$0xff] %v3008
        %3041 = vst [vmem:[#allocation3 + $0x478] sm:$0xff] %v3009
        %3042 = vst [vmem:[#allocation3 + $0x4c0] sm:$0xff] %v3010
        %3043 = vst [vmem:[#allocation3 + $0x508] sm:$0xff] %v3011
        %3044 = vst [vmem:[#allocation3 + $0x550] sm:$0xff] %v3012
        %3045 = vst [vmem:[#allocation3 + $0x598] sm:$0xff] %v3013
        %3046 = vst [vmem:[#allocation3 + $0x5e0] sm:$0xff] %v3014
        %3047 = vst [vmem:[#allocation3 + $0x628] sm:$0xff] %v3015
        %3048 = vst [vmem:[#allocation3 + $0x670] sm:$0xff] %v3016
        %3049 = vst [vmem:[#allocation3 + $0x6b8] sm:$0xff] %v3017
        %3050 = vst [vmem:[#allocation3 + $0x700] sm:$0xff] %v3018
        %3051 = vst [vmem:[#allocation3 + $0x748] sm:$0xff] %v3019
        %3052 = vst [vmem:[#allocation3 + $0x790] sm:$0xff] %v3020
        %3053 = vst [vmem:[#allocation3 + $0x7d8] sm:$0xff] %v3021
        %3054 = vst [vmem:[#allocation3 + $0x820] sm:$0xff] %v3022
        %3055 = vst [vmem:[#allocation3 + $0x868] sm:$0xff] %v3023
        %3056 = vst [vmem:[#allocation3 + $0x8b0] sm:$0xff] %v3024
        %3057 = vst [vmem:[#allocation3 + $0x8f8] sm:$0xff] %v3025
        %v3058 = vld [vmem:[#allocation3] sm:$0xff]
        %v3059 = vld [vmem:[#allocation3 + $0x8] sm:$0xff]
        %v3060 = vld [vmem:[#allocation3 + $0x10] sm:$0xff]
        %v3061 = vld [vmem:[#allocation3 + $0x18] sm:$0xff]
        %v3062 = vld [vmem:[#allocation3 + $0x20] sm:$0xff]
        %v3063 = vld [vmem:[#allocation3 + $0x28] sm:$0xff]
        %v3064 = vld [vmem:[#allocation3 + $0x30] sm:$0xff]
        %v3065 = vld [vmem:[#allocation3 + $0x38] sm:$0xff]
        %v3066 = vld [vmem:[#allocation3 + $0x40] sm:$0xff]
        %v3067 = vld [vmem:[#allocation3 + $0x48] sm:$0xff]
        %v3068 = vld [vmem:[#allocation3 + $0x50] sm:$0xff]
        %v3069 = vld [vmem:[#allocation3 + $0x58] sm:$0xff]
        %v3070 = vld [vmem:[#allocation3 + $0x60] sm:$0xff]
        %v3071 = vld [vmem:[#allocation3 + $0x68] sm:$0xff]
        %v3072 = vld [vmem:[#allocation3 + $0x70] sm:$0xff]
        %v3073 = vld [vmem:[#allocation3 + $0x78] sm:$0xff]
        %v3074 = vld [vmem:[#allocation3 + $0x80] sm:$0xff]
        %v3075 = vld [vmem:[#allocation3 + $0x88] sm:$0xff]
        %v3076 = vld [vmem:[#allocation3 + $0x90] sm:$0xff]
        %v3077 = vld [vmem:[#allocation3 + $0x98] sm:$0xff]
        %v3078 = vld [vmem:[#allocation3 + $0xa0] sm:$0xff]
        %v3079 = vld [vmem:[#allocation3 + $0xa8] sm:$0xff]
        %v3080 = vld [vmem:[#allocation3 + $0xb0] sm:$0xff]
        %v3081 = vld [vmem:[#allocation3 + $0xb8] sm:$0xff]
        %v3082 = vld [vmem:[#allocation3 + $0xc0] sm:$0xff]
        %v3083 = vld [vmem:[#allocation3 + $0xc8] sm:$0xff]
        %v3084 = vld [vmem:[#allocation3 + $0xd0] sm:$0xff]
        %v3085 = vld [vmem:[#allocation3 + $0xd8] sm:$0xff]
        %v3086 = vld [vmem:[#allocation3 + $0xe0] sm:$0xff]
        %v3087 = vld [vmem:[#allocation3 + $0xe8] sm:$0xff]
        %v3088 = vld [vmem:[#allocation3 + $0xf0] sm:$0xff]
        %v3089 = vld [vmem:[#allocation3 + $0xf8] sm:$0xff]
        %v3090 = vld [vmem:[#allocation3 + $0x100] sm:$0xff]
        %v3091 = vld [vmem:[#allocation3 + $0x108] sm:$0xff]
        %v3092 = vld [vmem:[#allocation3 + $0x110] sm:$0xff]
        %v3093 = vld [vmem:[#allocation3 + $0x118] sm:$0xff]
        %v3094 = vld [vmem:[#allocation3 + $0x120] sm:$0xff]
        %v3095 = vld [vmem:[#allocation3 + $0x128] sm:$0xff]
        %v3096 = vld [vmem:[#allocation3 + $0x130] sm:$0xff]
        %v3097 = vld [vmem:[#allocation3 + $0x138] sm:$0xff]
        %v3098 = vld [vmem:[#allocation3 + $0x140] sm:$0xff]
        %v3099 = vld [vmem:[#allocation3 + $0x148] sm:$0xff]
        %v3100 = vld [vmem:[#allocation3 + $0x150] sm:$0xff]
        %v3101 = vld [vmem:[#allocation3 + $0x158] sm:$0xff]
        %v3102 = vld [vmem:[#allocation3 + $0x160] sm:$0xff]
        %v3103 = vld [vmem:[#allocation3 + $0x168] sm:$0xff]
        %v3104 = vld [vmem:[#allocation3 + $0x170] sm:$0xff]
        %v3105 = vld [vmem:[#allocation3 + $0x178] sm:$0xff]
        %v3106 = vld [vmem:[#allocation3 + $0x180] sm:$0xff]
        %v3107 = vld [vmem:[#allocation3 + $0x188] sm:$0xff]
        %v3108 = vld [vmem:[#allocation3 + $0x190] sm:$0xff]
        %v3109 = vld [vmem:[#allocation3 + $0x198] sm:$0xff]
        %v3110 = vld [vmem:[#allocation3 + $0x1a0] sm:$0xff]
        %v3111 = vld [vmem:[#allocation3 + $0x1a8] sm:$0xff]
        %v3112 = vld [vmem:[#allocation3 + $0x1b0] sm:$0xff]
        %v3113 = vld [vmem:[#allocation3 + $0x1b8] sm:$0xff]
        %v3114 = vld [vmem:[#allocation3 + $0x1c0] sm:$0xff]
        %v3115 = vld [vmem:[#allocation3 + $0x1c8] sm:$0xff]
        %v3116 = vld [vmem:[#allocation3 + $0x1d0] sm:$0xff]
        %v3117 = vld [vmem:[#allocation3 + $0x1d8] sm:$0xff]
        %v3118 = vld [vmem:[#allocation3 + $0x1e0] sm:$0xff]
        %v3119 = vld [vmem:[#allocation3 + $0x1e8] sm:$0xff]
        %v3120 = vld [vmem:[#allocation3 + $0x1f0] sm:$0xff]
        %v3121 = vld [vmem:[#allocation3 + $0x1f8] sm:$0xff]
        %v3122 = vld [vmem:[#allocation3 + $0x200] sm:$0xff]
        %v3123 = vld [vmem:[#allocation3 + $0x208] sm:$0xff]
        %v3124 = vld [vmem:[#allocation3 + $0x210] sm:$0xff]
        %v3125 = vld [vmem:[#allocation3 + $0x218] sm:$0xff]
        %v3126 = vld [vmem:[#allocation3 + $0x220] sm:$0xff]
        %v3127 = vld [vmem:[#allocation3 + $0x228] sm:$0xff]
        %v3128 = vld [vmem:[#allocation3 + $0x230] sm:$0xff]
        %v3129 = vld [vmem:[#allocation3 + $0x238] sm:$0xff]
        %v3130 = vld [vmem:[#allocation3 + $0x240] sm:$0xff]
        %v3131 = vld [vmem:[#allocation3 + $0x248] sm:$0xff]
        %v3132 = vld [vmem:[#allocation3 + $0x250] sm:$0xff]
        %v3133 = vld [vmem:[#allocation3 + $0x258] sm:$0xff]
        %v3134 = vld [vmem:[#allocation3 + $0x260] sm:$0xff]
        %v3135 = vld [vmem:[#allocation3 + $0x268] sm:$0xff]
        %v3136 = vld [vmem:[#allocation3 + $0x270] sm:$0xff]
        %v3137 = vld [vmem:[#allocation3 + $0x278] sm:$0xff]
        %v3138 = vld [vmem:[#allocation3 + $0x280] sm:$0xff]
        %v3139 = vld [vmem:[#allocation3 + $0x288] sm:$0xff]
        %v3140 = vld [vmem:[#allocation3 + $0x290] sm:$0xff]
        %v3141 = vld [vmem:[#allocation3 + $0x298] sm:$0xff]
        %v3142 = vld [vmem:[#allocation3 + $0x2a0] sm:$0xff]
        %v3143 = vld [vmem:[#allocation3 + $0x2a8] sm:$0xff]
        %v3144 = vld [vmem:[#allocation3 + $0x2b0] sm:$0xff]
        %v3145 = vld [vmem:[#allocation3 + $0x2b8] sm:$0xff]
        %v3146 = vld [vmem:[#allocation3 + $0x2c0] sm:$0xff]
        %v3147 = vld [vmem:[#allocation3 + $0x2c8] sm:$0xff]
        %v3148 = vld [vmem:[#allocation3 + $0x2d0] sm:$0xff]
        %v3149 = vld [vmem:[#allocation3 + $0x2d8] sm:$0xff]
        %v3150 = vld [vmem:[#allocation3 + $0x2e0] sm:$0xff]
        %v3151 = vld [vmem:[#allocation3 + $0x2e8] sm:$0xff]
        %v3152 = vld [vmem:[#allocation3 + $0x2f0] sm:$0xff]
        %v3153 = vld [vmem:[#allocation3 + $0x2f8] sm:$0xff]
        %v3154 = vld [vmem:[#allocation3 + $0x300] sm:$0xff]
        %v3155 = vld [vmem:[#allocation3 + $0x308] sm:$0xff]
        %v3156 = vld [vmem:[#allocation3 + $0x310] sm:$0xff]
        %v3157 = vld [vmem:[#allocation3 + $0x318] sm:$0xff]
        %v3158 = vld [vmem:[#allocation3 + $0x320] sm:$0xff]
        %v3159 = vld [vmem:[#allocation3 + $0x328] sm:$0xff]
        %v3160 = vld [vmem:[#allocation3 + $0x330] sm:$0xff]
        %v3161 = vld [vmem:[#allocation3 + $0x338] sm:$0xff]
        %v3162 = vld [vmem:[#allocation3 + $0x340] sm:$0xff]
        %v3163 = vld [vmem:[#allocation3 + $0x348] sm:$0xff]
        %v3164 = vld [vmem:[#allocation3 + $0x350] sm:$0xff]
        %v3165 = vld [vmem:[#allocation3 + $0x358] sm:$0xff]
        %v3166 = vld [vmem:[#allocation3 + $0x360] sm:$0xff]
        %v3167 = vld [vmem:[#allocation3 + $0x368] sm:$0xff]
        %v3168 = vld [vmem:[#allocation3 + $0x370] sm:$0xff]
        %v3169 = vld [vmem:[#allocation3 + $0x378] sm:$0xff]
        %v3170 = vld [vmem:[#allocation3 + $0x380] sm:$0xff]
        %v3171 = vld [vmem:[#allocation3 + $0x388] sm:$0xff]
        %v3172 = vld [vmem:[#allocation3 + $0x390] sm:$0xff]
        %v3173 = vld [vmem:[#allocation3 + $0x398] sm:$0xff]
        %v3174 = vld [vmem:[#allocation3 + $0x3a0] sm:$0xff]
        %v3175 = vld [vmem:[#allocation3 + $0x3a8] sm:$0xff]
        %v3176 = vld [vmem:[#allocation3 + $0x3b0] sm:$0xff]
        %v3177 = vld [vmem:[#allocation3 + $0x3b8] sm:$0xff]
        %v3178 = vld [vmem:[#allocation3 + $0x3c0] sm:$0xff]
        %v3179 = vld [vmem:[#allocation3 + $0x3c8] sm:$0xff]
        %v3180 = vld [vmem:[#allocation3 + $0x3d0] sm:$0xff]
        %v3181 = vld [vmem:[#allocation3 + $0x3d8] sm:$0xff]
        %v3182 = vld [vmem:[#allocation3 + $0x3e0] sm:$0xff]
        %v3183 = vld [vmem:[#allocation3 + $0x3e8] sm:$0xff]
        %v3184 = vld [vmem:[#allocation3 + $0x3f0] sm:$0xff]
        %v3185 = vld [vmem:[#allocation3 + $0x3f8] sm:$0xff]
        %v3186 = vld [vmem:[#allocation3 + $0x400] sm:$0xff]
        %v3187 = vld [vmem:[#allocation3 + $0x408] sm:$0xff]
        %v3188 = vld [vmem:[#allocation3 + $0x410] sm:$0xff]
        %v3189 = vld [vmem:[#allocation3 + $0x418] sm:$0xff]
        %v3190 = vld [vmem:[#allocation3 + $0x420] sm:$0xff]
        %v3191 = vld [vmem:[#allocation3 + $0x428] sm:$0xff]
        %v3192 = vld [vmem:[#allocation3 + $0x430] sm:$0xff]
        %v3193 = vld [vmem:[#allocation3 + $0x438] sm:$0xff]
        %v3194 = vld [vmem:[#allocation3 + $0x440] sm:$0xff]
        %v3195 = vld [vmem:[#allocation3 + $0x448] sm:$0xff]
        %v3196 = vld [vmem:[#allocation3 + $0x450] sm:$0xff]
        %v3197 = vld [vmem:[#allocation3 + $0x458] sm:$0xff]
        %v3198 = vld [vmem:[#allocation3 + $0x460] sm:$0xff]
        %v3199 = vld [vmem:[#allocation3 + $0x468] sm:$0xff]
        %v3200 = vld [vmem:[#allocation3 + $0x470] sm:$0xff]
        %v3201 = vld [vmem:[#allocation3 + $0x478] sm:$0xff]
        %v3202 = vld [vmem:[#allocation3 + $0x480] sm:$0xff]
        %v3203 = vld [vmem:[#allocation3 + $0x488] sm:$0xff]
        %v3204 = vld [vmem:[#allocation3 + $0x490] sm:$0xff]
        %v3205 = vld [vmem:[#allocation3 + $0x498] sm:$0xff]
        %v3206 = vld [vmem:[#allocation3 + $0x4a0] sm:$0xff]
        %v3207 = vld [vmem:[#allocation3 + $0x4a8] sm:$0xff]
        %v3208 = vld [vmem:[#allocation3 + $0x4b0] sm:$0xff]
        %v3209 = vld [vmem:[#allocation3 + $0x4b8] sm:$0xff]
        %v3210 = vld [vmem:[#allocation3 + $0x4c0] sm:$0xff]
        %v3211 = vld [vmem:[#allocation3 + $0x4c8] sm:$0xff]
        %v3212 = vld [vmem:[#allocation3 + $0x4d0] sm:$0xff]
        %v3213 = vld [vmem:[#allocation3 + $0x4d8] sm:$0xff]
        %v3214 = vld [vmem:[#allocation3 + $0x4e0] sm:$0xff]
        %v3215 = vld [vmem:[#allocation3 + $0x4e8] sm:$0xff]
        %v3216 = vld [vmem:[#allocation3 + $0x4f0] sm:$0xff]
        %v3217 = vld [vmem:[#allocation3 + $0x4f8] sm:$0xff]
        %v3218 = vld [vmem:[#allocation3 + $0x500] sm:$0xff]
        %v3219 = vld [vmem:[#allocation3 + $0x508] sm:$0xff]
        %v3220 = vld [vmem:[#allocation3 + $0x510] sm:$0xff]
        %v3221 = vld [vmem:[#allocation3 + $0x518] sm:$0xff]
        %v3222 = vld [vmem:[#allocation3 + $0x520] sm:$0xff]
        %v3223 = vld [vmem:[#allocation3 + $0x528] sm:$0xff]
        %v3224 = vld [vmem:[#allocation3 + $0x530] sm:$0xff]
        %v3225 = vld [vmem:[#allocation3 + $0x538] sm:$0xff]
        %v3226 = vld [vmem:[#allocation3 + $0x540] sm:$0xff]
        %v3227 = vld [vmem:[#allocation3 + $0x548] sm:$0xff]
        %v3228 = vld [vmem:[#allocation3 + $0x550] sm:$0xff]
        %v3229 = vld [vmem:[#allocation3 + $0x558] sm:$0xff]
        %v3230 = vld [vmem:[#allocation3 + $0x560] sm:$0xff]
        %v3231 = vld [vmem:[#allocation3 + $0x568] sm:$0xff]
        %v3232 = vld [vmem:[#allocation3 + $0x570] sm:$0xff]
        %v3233 = vld [vmem:[#allocation3 + $0x578] sm:$0xff]
        %v3234 = vld [vmem:[#allocation3 + $0x580] sm:$0xff]
        %v3235 = vld [vmem:[#allocation3 + $0x588] sm:$0xff]
        %v3236 = vld [vmem:[#allocation3 + $0x590] sm:$0xff]
        %v3237 = vld [vmem:[#allocation3 + $0x598] sm:$0xff]
        %v3238 = vld [vmem:[#allocation3 + $0x5a0] sm:$0xff]
        %v3239 = vld [vmem:[#allocation3 + $0x5a8] sm:$0xff]
        %v3240 = vld [vmem:[#allocation3 + $0x5b0] sm:$0xff]
        %v3241 = vld [vmem:[#allocation3 + $0x5b8] sm:$0xff]
        %v3242 = vld [vmem:[#allocation3 + $0x5c0] sm:$0xff]
        %v3243 = vld [vmem:[#allocation3 + $0x5c8] sm:$0xff]
        %v3244 = vld [vmem:[#allocation3 + $0x5d0] sm:$0xff]
        %v3245 = vld [vmem:[#allocation3 + $0x5d8] sm:$0xff]
        %v3246 = vld [vmem:[#allocation3 + $0x5e0] sm:$0xff]
        %v3247 = vld [vmem:[#allocation3 + $0x5e8] sm:$0xff]
        %v3248 = vld [vmem:[#allocation3 + $0x5f0] sm:$0xff]
        %v3249 = vld [vmem:[#allocation3 + $0x5f8] sm:$0xff]
        %v3250 = vld [vmem:[#allocation3 + $0x600] sm:$0xff]
        %v3251 = vld [vmem:[#allocation3 + $0x608] sm:$0xff]
        %v3252 = vld [vmem:[#allocation3 + $0x610] sm:$0xff]
        %v3253 = vld [vmem:[#allocation3 + $0x618] sm:$0xff]
        %v3254 = vld [vmem:[#allocation3 + $0x620] sm:$0xff]
        %v3255 = vld [vmem:[#allocation3 + $0x628] sm:$0xff]
        %v3256 = vld [vmem:[#allocation3 + $0x630] sm:$0xff]
        %v3257 = vld [vmem:[#allocation3 + $0x638] sm:$0xff]
        %v3258 = vld [vmem:[#allocation3 + $0x640] sm:$0xff]
        %v3259 = vld [vmem:[#allocation3 + $0x648] sm:$0xff]
        %v3260 = vld [vmem:[#allocation3 + $0x650] sm:$0xff]
        %v3261 = vld [vmem:[#allocation3 + $0x658] sm:$0xff]
        %v3262 = vld [vmem:[#allocation3 + $0x660] sm:$0xff]
        %v3263 = vld [vmem:[#allocation3 + $0x668] sm:$0xff]
        %v3264 = vld [vmem:[#allocation3 + $0x670] sm:$0xff]
        %v3265 = vld [vmem:[#allocation3 + $0x678] sm:$0xff]
        %v3266 = vld [vmem:[#allocation3 + $0x680] sm:$0xff]
        %v3267 = vld [vmem:[#allocation3 + $0x688] sm:$0xff]
        %v3268 = vld [vmem:[#allocation3 + $0x690] sm:$0xff]
        %v3269 = vld [vmem:[#allocation3 + $0x698] sm:$0xff]
        %v3270 = vld [vmem:[#allocation3 + $0x6a0] sm:$0xff]
        %v3271 = vld [vmem:[#allocation3 + $0x6a8] sm:$0xff]
        %v3272 = vld [vmem:[#allocation3 + $0x6b0] sm:$0xff]
        %v3273 = vld [vmem:[#allocation3 + $0x6b8] sm:$0xff]
        %v3274 = vld [vmem:[#allocation3 + $0x6c0] sm:$0xff]
        %v3275 = vld [vmem:[#allocation3 + $0x6c8] sm:$0xff]
        %v3276 = vld [vmem:[#allocation3 + $0x6d0] sm:$0xff]
        %v3277 = vld [vmem:[#allocation3 + $0x6d8] sm:$0xff]
        %v3278 = vld [vmem:[#allocation3 + $0x6e0] sm:$0xff]
        %v3279 = vld [vmem:[#allocation3 + $0x6e8] sm:$0xff]
        %v3280 = vld [vmem:[#allocation3 + $0x6f0] sm:$0xff]
        %v3281 = vld [vmem:[#allocation3 + $0x6f8] sm:$0xff]
        %v3282 = vld [vmem:[#allocation3 + $0x700] sm:$0xff]
        %v3283 = vld [vmem:[#allocation3 + $0x708] sm:$0xff]
        %v3284 = vld [vmem:[#allocation3 + $0x710] sm:$0xff]
        %v3285 = vld [vmem:[#allocation3 + $0x718] sm:$0xff]
        %v3286 = vld [vmem:[#allocation3 + $0x720] sm:$0xff]
        %v3287 = vld [vmem:[#allocation3 + $0x728] sm:$0xff]
        %v3288 = vld [vmem:[#allocation3 + $0x730] sm:$0xff]
        %v3289 = vld [vmem:[#allocation3 + $0x738] sm:$0xff]
        %v3290 = vld [vmem:[#allocation3 + $0x740] sm:$0xff]
        %v3291 = vld [vmem:[#allocation3 + $0x748] sm:$0xff]
        %v3292 = vld [vmem:[#allocation3 + $0x750] sm:$0xff]
        %v3293 = vld [vmem:[#allocation3 + $0x758] sm:$0xff]
        %v3294 = vld [vmem:[#allocation3 + $0x760] sm:$0xff]
        %v3295 = vld [vmem:[#allocation3 + $0x768] sm:$0xff]
        %v3296 = vld [vmem:[#allocation3 + $0x770] sm:$0xff]
        %v3297 = vld [vmem:[#allocation3 + $0x778] sm:$0xff]
        %v3298 = vld [vmem:[#allocation3 + $0x780] sm:$0xff]
        %v3299 = vld [vmem:[#allocation3 + $0x788] sm:$0xff]
        %v3300 = vld [vmem:[#allocation3 + $0x790] sm:$0xff]
        %v3301 = vld [vmem:[#allocation3 + $0x798] sm:$0xff]
        %v3302 = vld [vmem:[#allocation3 + $0x7a0] sm:$0xff]
        %v3303 = vld [vmem:[#allocation3 + $0x7a8] sm:$0xff]
        %v3304 = vld [vmem:[#allocation3 + $0x7b0] sm:$0xff]
        %v3305 = vld [vmem:[#allocation3 + $0x7b8] sm:$0xff]
        %v3306 = vld [vmem:[#allocation3 + $0x7c0] sm:$0xff]
        %v3307 = vld [vmem:[#allocation3 + $0x7c8] sm:$0xff]
        %v3308 = vld [vmem:[#allocation3 + $0x7d0] sm:$0xff]
        %v3309 = vld [vmem:[#allocation3 + $0x7d8] sm:$0xff]
        %v3310 = vld [vmem:[#allocation3 + $0x7e0] sm:$0xff]
        %v3311 = vld [vmem:[#allocation3 + $0x7e8] sm:$0xff]
        %v3312 = vld [vmem:[#allocation3 + $0x7f0] sm:$0xff]
        %v3313 = vld [vmem:[#allocation3 + $0x7f8] sm:$0xff]
        %v3314 = vld [vmem:[#allocation3 + $0x800] sm:$0xff]
        %v3315 = vld [vmem:[#allocation3 + $0x808] sm:$0xff]
        %v3316 = vld [vmem:[#allocation3 + $0x810] sm:$0xff]
        %v3317 = vld [vmem:[#allocation3 + $0x818] sm:$0xff]
        %v3318 = vld [vmem:[#allocation3 + $0x820] sm:$0xff]
        %v3319 = vld [vmem:[#allocation3 + $0x828] sm:$0xff]
        %v3320 = vld [vmem:[#allocation3 + $0x830] sm:$0xff]
        %v3321 = vld [vmem:[#allocation3 + $0x838] sm:$0xff]
        %v3322 = vld [vmem:[#allocation3 + $0x840] sm:$0xff]
        %v3323 = vld [vmem:[#allocation3 + $0x848] sm:$0xff]
        %v3324 = vld [vmem:[#allocation3 + $0x850] sm:$0xff]
        %v3325 = vld [vmem:[#allocation3 + $0x858] sm:$0xff]
        %v3326 = vld [vmem:[#allocation3 + $0x860] sm:$0xff]
        %v3327 = vld [vmem:[#allocation3 + $0x868] sm:$0xff]
        %v3328 = vld [vmem:[#allocation3 + $0x870] sm:$0xff]
        %v3329 = vld [vmem:[#allocation3 + $0x878] sm:$0xff]
        %v3330 = vld [vmem:[#allocation3 + $0x880] sm:$0xff]
        %v3331 = vld [vmem:[#allocation3 + $0x888] sm:$0xff]
        %v3332 = vld [vmem:[#allocation3 + $0x890] sm:$0xff]
        %v3333 = vld [vmem:[#allocation3 + $0x898] sm:$0xff]
        %v3334 = vld [vmem:[#allocation3 + $0x8a0] sm:$0xff]
        %v3335 = vld [vmem:[#allocation3 + $0x8a8] sm:$0xff]
        %v3336 = vld [vmem:[#allocation3 + $0x8b0] sm:$0xff]
        %v3337 = vld [vmem:[#allocation3 + $0x8b8] sm:$0xff]
        %v3338 = vld [vmem:[#allocation3 + $0x8c0] sm:$0xff]
        %v3339 = vld [vmem:[#allocation3 + $0x8c8] sm:$0xff]
        %v3340 = vld [vmem:[#allocation3 + $0x8d0] sm:$0xff]
        %v3341 = vld [vmem:[#allocation3 + $0x8d8] sm:$0xff]
        %v3342 = vld [vmem:[#allocation3 + $0x8e0] sm:$0xff]
        %v3343 = vld [vmem:[#allocation3 + $0x8e8] sm:$0xff]
        %v3344 = vld [vmem:[#allocation3 + $0x8f0] sm:$0xff]
        %v3345 = vld [vmem:[#allocation3 + $0x8f8] sm:$0xff]
        %v3346 = vld [vmem:[#allocation9] sm:$0xff]
        %v3347 = vld [vmem:[#allocation9 + $0x8] sm:$0xff]
        %v3348 = vld [vmem:[#allocation9 + $0x10] sm:$0xff]
        %v3349 = vld [vmem:[#allocation9 + $0x18] sm:$0xff]
        %v3350 = vld [vmem:[#allocation9 + $0x20] sm:$0xff]
        %v3351 = vld [vmem:[#allocation9 + $0x28] sm:$0xff]
        %v3352 = vld [vmem:[#allocation9 + $0x30] sm:$0xff]
        %v3353 = vld [vmem:[#allocation9 + $0x38] sm:$0xff]
        %v3354 = vld [vmem:[#allocation9 + $0x40] sm:$0xff]
        %v3355 = vld [vmem:[#allocation9 + $0x48] sm:$0xff]
        %v3356 = vld [vmem:[#allocation9 + $0x50] sm:$0xff]
        %v3357 = vld [vmem:[#allocation9 + $0x58] sm:$0xff]
        %v3358 = vld [vmem:[#allocation9 + $0x60] sm:$0xff]
        %v3359 = vld [vmem:[#allocation9 + $0x68] sm:$0xff]
        %v3360 = vld [vmem:[#allocation9 + $0x70] sm:$0xff]
        %v3361 = vld [vmem:[#allocation9 + $0x78] sm:$0xff]
        %v3362 = vld [vmem:[#allocation9 + $0x80] sm:$0xff]
        %v3363 = vld [vmem:[#allocation9 + $0x88] sm:$0xff]
        %v3364 = vld [vmem:[#allocation9 + $0x90] sm:$0xff]
        %v3365 = vld [vmem:[#allocation9 + $0x98] sm:$0xff]
        %v3366 = vld [vmem:[#allocation9 + $0xa0] sm:$0xff]
        %v3367 = vld [vmem:[#allocation9 + $0xa8] sm:$0xff]
        %v3368 = vld [vmem:[#allocation9 + $0xb0] sm:$0xff]
        %v3369 = vld [vmem:[#allocation9 + $0xb8] sm:$0xff]
        %v3370 = vld [vmem:[#allocation9 + $0xc0] sm:$0xff]
        %v3371 = vld [vmem:[#allocation9 + $0xc8] sm:$0xff]
        %v3372 = vld [vmem:[#allocation9 + $0xd0] sm:$0xff]
        %v3373 = vld [vmem:[#allocation9 + $0xd8] sm:$0xff]
        %v3374 = vld [vmem:[#allocation9 + $0xe0] sm:$0xff]
        %v3375 = vld [vmem:[#allocation9 + $0xe8] sm:$0xff]
        %v3376 = vld [vmem:[#allocation9 + $0xf0] sm:$0xff]
        %v3377 = vld [vmem:[#allocation9 + $0xf8] sm:$0xff]
        %v3378 = vld [vmem:[#allocation9 + $0x100] sm:$0xff]
        %v3379 = vld [vmem:[#allocation9 + $0x108] sm:$0xff]
        %v3380 = vld [vmem:[#allocation9 + $0x110] sm:$0xff]
        %v3381 = vld [vmem:[#allocation9 + $0x118] sm:$0xff]
        %v3382 = vld [vmem:[#allocation9 + $0x120] sm:$0xff]
        %v3383 = vld [vmem:[#allocation9 + $0x128] sm:$0xff]
        %v3384 = vld [vmem:[#allocation9 + $0x130] sm:$0xff]
        %v3385 = vld [vmem:[#allocation9 + $0x138] sm:$0xff]
        %v3386 = vld [vmem:[#allocation9 + $0x140] sm:$0xff]
        %v3387 = vld [vmem:[#allocation9 + $0x148] sm:$0xff]
        %v3388 = vld [vmem:[#allocation9 + $0x150] sm:$0xff]
        %v3389 = vld [vmem:[#allocation9 + $0x158] sm:$0xff]
        %v3390 = vld [vmem:[#allocation9 + $0x160] sm:$0xff]
        %v3391 = vld [vmem:[#allocation9 + $0x168] sm:$0xff]
        %v3392 = vld [vmem:[#allocation9 + $0x170] sm:$0xff]
        %v3393 = vld [vmem:[#allocation9 + $0x178] sm:$0xff]
        %v3394 = vld [vmem:[#allocation9 + $0x180] sm:$0xff]
        %v3395 = vld [vmem:[#allocation9 + $0x188] sm:$0xff]
        %v3396 = vld [vmem:[#allocation9 + $0x190] sm:$0xff]
        %v3397 = vld [vmem:[#allocation9 + $0x198] sm:$0xff]
        %v3398 = vld [vmem:[#allocation9 + $0x1a0] sm:$0xff]
        %v3399 = vld [vmem:[#allocation9 + $0x1a8] sm:$0xff]
        %v3400 = vld [vmem:[#allocation9 + $0x1b0] sm:$0xff]
        %v3401 = vld [vmem:[#allocation9 + $0x1b8] sm:$0xff]
        %v3402 = vld [vmem:[#allocation9 + $0x1c0] sm:$0xff]
        %v3403 = vld [vmem:[#allocation9 + $0x1c8] sm:$0xff]
        %v3404 = vld [vmem:[#allocation9 + $0x1d0] sm:$0xff]
        %v3405 = vld [vmem:[#allocation9 + $0x1d8] sm:$0xff]
        %v3406 = vld [vmem:[#allocation9 + $0x1e0] sm:$0xff]
        %v3407 = vld [vmem:[#allocation9 + $0x1e8] sm:$0xff]
        %v3408 = vld [vmem:[#allocation9 + $0x1f0] sm:$0xff]
        %v3409 = vld [vmem:[#allocation9 + $0x1f8] sm:$0xff]
        %v3410 = vld [vmem:[#allocation9 + $0x200] sm:$0xff]
        %v3411 = vld [vmem:[#allocation9 + $0x208] sm:$0xff]
        %v3412 = vld [vmem:[#allocation9 + $0x210] sm:$0xff]
        %v3413 = vld [vmem:[#allocation9 + $0x218] sm:$0xff]
        %v3414 = vld [vmem:[#allocation9 + $0x220] sm:$0xff]
        %v3415 = vld [vmem:[#allocation9 + $0x228] sm:$0xff]
        %v3416 = vld [vmem:[#allocation9 + $0x230] sm:$0xff]
        %v3417 = vld [vmem:[#allocation9 + $0x238] sm:$0xff]
        %v3418 = vld [vmem:[#allocation9 + $0x240] sm:$0xff]
        %v3419 = vld [vmem:[#allocation9 + $0x248] sm:$0xff]
        %v3420 = vld [vmem:[#allocation9 + $0x250] sm:$0xff]
        %v3421 = vld [vmem:[#allocation9 + $0x258] sm:$0xff]
        %v3422 = vld [vmem:[#allocation9 + $0x260] sm:$0xff]
        %v3423 = vld [vmem:[#allocation9 + $0x268] sm:$0xff]
        %v3424 = vld [vmem:[#allocation9 + $0x270] sm:$0xff]
        %v3425 = vld [vmem:[#allocation9 + $0x278] sm:$0xff]
        %v3426 = vld [vmem:[#allocation9 + $0x280] sm:$0xff]
        %v3427 = vld [vmem:[#allocation9 + $0x288] sm:$0xff]
        %v3428 = vld [vmem:[#allocation9 + $0x290] sm:$0xff]
        %v3429 = vld [vmem:[#allocation9 + $0x298] sm:$0xff]
        %v3430 = vld [vmem:[#allocation9 + $0x2a0] sm:$0xff]
        %v3431 = vld [vmem:[#allocation9 + $0x2a8] sm:$0xff]
        %v3432 = vld [vmem:[#allocation9 + $0x2b0] sm:$0xff]
        %v3433 = vld [vmem:[#allocation9 + $0x2b8] sm:$0xff]
        %v3434 = vld [vmem:[#allocation9 + $0x2c0] sm:$0xff]
        %v3435 = vld [vmem:[#allocation9 + $0x2c8] sm:$0xff]
        %v3436 = vld [vmem:[#allocation9 + $0x2d0] sm:$0xff]
        %v3437 = vld [vmem:[#allocation9 + $0x2d8] sm:$0xff]
        %v3438 = vld [vmem:[#allocation9 + $0x2e0] sm:$0xff]
        %v3439 = vld [vmem:[#allocation9 + $0x2e8] sm:$0xff]
        %v3440 = vld [vmem:[#allocation9 + $0x2f0] sm:$0xff]
        %v3441 = vld [vmem:[#allocation9 + $0x2f8] sm:$0xff]
        %v3442 = vld [vmem:[#allocation9 + $0x300] sm:$0xff]
        %v3443 = vld [vmem:[#allocation9 + $0x308] sm:$0xff]
        %v3444 = vld [vmem:[#allocation9 + $0x310] sm:$0xff]
        %v3445 = vld [vmem:[#allocation9 + $0x318] sm:$0xff]
        %v3446 = vld [vmem:[#allocation9 + $0x320] sm:$0xff]
        %v3447 = vld [vmem:[#allocation9 + $0x328] sm:$0xff]
        %v3448 = vld [vmem:[#allocation9 + $0x330] sm:$0xff]
        %v3449 = vld [vmem:[#allocation9 + $0x338] sm:$0xff]
        %v3450 = vld [vmem:[#allocation9 + $0x340] sm:$0xff]
        %v3451 = vld [vmem:[#allocation9 + $0x348] sm:$0xff]
        %v3452 = vld [vmem:[#allocation9 + $0x350] sm:$0xff]
        %v3453 = vld [vmem:[#allocation9 + $0x358] sm:$0xff]
        %v3454 = vld [vmem:[#allocation9 + $0x360] sm:$0xff]
        %v3455 = vld [vmem:[#allocation9 + $0x368] sm:$0xff]
        %v3456 = vld [vmem:[#allocation9 + $0x370] sm:$0xff]
        %v3457 = vld [vmem:[#allocation9 + $0x378] sm:$0xff]
        %v3458 = vld [vmem:[#allocation9 + $0x380] sm:$0xff]
        %v3459 = vld [vmem:[#allocation9 + $0x388] sm:$0xff]
        %v3460 = vld [vmem:[#allocation9 + $0x390] sm:$0xff]
        %v3461 = vld [vmem:[#allocation9 + $0x398] sm:$0xff]
        %v3462 = vld [vmem:[#allocation9 + $0x3a0] sm:$0xff]
        %v3463 = vld [vmem:[#allocation9 + $0x3a8] sm:$0xff]
        %v3464 = vld [vmem:[#allocation9 + $0x3b0] sm:$0xff]
        %v3465 = vld [vmem:[#allocation9 + $0x3b8] sm:$0xff]
        %v3466 = vld [vmem:[#allocation9 + $0x3c0] sm:$0xff]
        %v3467 = vld [vmem:[#allocation9 + $0x3c8] sm:$0xff]
        %v3468 = vld [vmem:[#allocation9 + $0x3d0] sm:$0xff]
        %v3469 = vld [vmem:[#allocation9 + $0x3d8] sm:$0xff]
        %v3470 = vld [vmem:[#allocation9 + $0x3e0] sm:$0xff]
        %v3471 = vld [vmem:[#allocation9 + $0x3e8] sm:$0xff]
        %v3472 = vld [vmem:[#allocation9 + $0x3f0] sm:$0xff]
        %v3473 = vld [vmem:[#allocation9 + $0x3f8] sm:$0xff]
        %v3474 = vld [vmem:[#allocation9 + $0x400] sm:$0xff]
        %v3475 = vld [vmem:[#allocation9 + $0x408] sm:$0xff]
        %v3476 = vld [vmem:[#allocation9 + $0x410] sm:$0xff]
        %v3477 = vld [vmem:[#allocation9 + $0x418] sm:$0xff]
        %v3478 = vld [vmem:[#allocation9 + $0x420] sm:$0xff]
        %v3479 = vld [vmem:[#allocation9 + $0x428] sm:$0xff]
        %v3480 = vld [vmem:[#allocation9 + $0x430] sm:$0xff]
        %v3481 = vld [vmem:[#allocation9 + $0x438] sm:$0xff]
        %v3482 = vld [vmem:[#allocation9 + $0x440] sm:$0xff]
        %v3483 = vld [vmem:[#allocation9 + $0x448] sm:$0xff]
        %v3484 = vld [vmem:[#allocation9 + $0x450] sm:$0xff]
        %v3485 = vld [vmem:[#allocation9 + $0x458] sm:$0xff]
        %v3486 = vld [vmem:[#allocation9 + $0x460] sm:$0xff]
        %v3487 = vld [vmem:[#allocation9 + $0x468] sm:$0xff]
        %v3488 = vld [vmem:[#allocation9 + $0x470] sm:$0xff]
        %v3489 = vld [vmem:[#allocation9 + $0x478] sm:$0xff]
        %v3490 = vld [vmem:[%s4] sm:$0x1]
        %v3492 = vperm.slane %v3490, 0
        %3494 = vmatpush.msra.mxu0 %v3361
        %3495 = vmatpush.msra.mxu0 %v3360
        %3496 = vmatpush.msra.mxu0 %v3359
        %3497 = vmatpush.msra.mxu0 %v3358
        %3498 = vmatpush.msra.mxu0 %v3357
        %3499 = vmatpush.msra.mxu0 %v3356
        %3500 = vmatpush.msra.mxu0 %v3355
        %3501 = vmatpush.msra.mxu0 %v3354
        %3502 = vmatpush.msra.mxu0 %v3353
        %3503 = vmatpush.msra.mxu0 %v3352
        %3504 = vmatpush.msra.mxu0 %v3351
        %3505 = vmatpush.msra.mxu0 %v3350
        %3506 = vmatpush.msra.mxu0 %v3349
        %3507 = vmatpush.msra.mxu0 %v3348
        %3508 = vmatpush.msra.mxu0 %v3347
        %3509 = vmatpush.msra.mxu0 %v3346
        %3510 = vmatmul.f32.gmra.mxu0 %v3058
        %v3511 = vpop.f32.mrf.mxu0
        %v3512 = vadd.f32 %v3492, %v3511
        %3513 = vmatmul.f32.gmra.mxu0 %v3067
        %v3514 = vpop.f32.mrf.mxu0
        %v3515 = vadd.f32 %v3492, %v3514
        %3516 = vmatmul.f32.gmra.mxu0 %v3076
        %v3517 = vpop.f32.mrf.mxu0
        %v3518 = vadd.f32 %v3492, %v3517
        %3519 = vmatmul.f32.gmra.mxu0 %v3085
        %v3520 = vpop.f32.mrf.mxu0
        %v3521 = vadd.f32 %v3492, %v3520
        %3522 = vmatmul.f32.gmra.mxu0 %v3094
        %v3523 = vpop.f32.mrf.mxu0
        %v3524 = vadd.f32 %v3492, %v3523
        %3525 = vmatmul.f32.gmra.mxu0 %v3103
        %v3526 = vpop.f32.mrf.mxu0
        %v3527 = vadd.f32 %v3492, %v3526
        %3528 = vmatmul.f32.gmra.mxu0 %v3112
        %v3529 = vpop.f32.mrf.mxu0
        %v3530 = vadd.f32 %v3492, %v3529
        %3531 = vmatmul.f32.gmra.mxu0 %v3121
        %v3532 = vpop.f32.mrf.mxu0
        %v3533 = vadd.f32 %v3492, %v3532
        %3534 = vmatmul.f32.gmra.mxu0 %v3130
        %v3535 = vpop.f32.mrf.mxu0
        %v3536 = vadd.f32 %v3492, %v3535
        %3537 = vmatmul.f32.gmra.mxu0 %v3139
        %v3538 = vpop.f32.mrf.mxu0
        %v3539 = vadd.f32 %v3492, %v3538
        %3540 = vmatmul.f32.gmra.mxu0 %v3148
        %v3541 = vpop.f32.mrf.mxu0
        %v3542 = vadd.f32 %v3492, %v3541
        %3543 = vmatmul.f32.gmra.mxu0 %v3157
        %v3544 = vpop.f32.mrf.mxu0
        %v3545 = vadd.f32 %v3492, %v3544
        %3546 = vmatmul.f32.gmra.mxu0 %v3166
        %v3547 = vpop.f32.mrf.mxu0
        %v3548 = vadd.f32 %v3492, %v3547
        %3549 = vmatmul.f32.gmra.mxu0 %v3175
        %v3550 = vpop.f32.mrf.mxu0
        %v3551 = vadd.f32 %v3492, %v3550
        %3552 = vmatmul.f32.gmra.mxu0 %v3184
        %v3553 = vpop.f32.mrf.mxu0
        %v3554 = vadd.f32 %v3492, %v3553
        %3555 = vmatmul.f32.gmra.mxu0 %v3193
        %v3556 = vpop.f32.mrf.mxu0
        %v3557 = vadd.f32 %v3492, %v3556
        %3558 = vmatmul.f32.gmra.mxu0 %v3202
        %v3559 = vpop.f32.mrf.mxu0
        %v3560 = vadd.f32 %v3492, %v3559
        %3561 = vmatmul.f32.gmra.mxu0 %v3211
        %v3562 = vpop.f32.mrf.mxu0
        %v3563 = vadd.f32 %v3492, %v3562
        %3564 = vmatmul.f32.gmra.mxu0 %v3220
        %v3565 = vpop.f32.mrf.mxu0
        %v3566 = vadd.f32 %v3492, %v3565
        %3567 = vmatmul.f32.gmra.mxu0 %v3229
        %v3568 = vpop.f32.mrf.mxu0
        %v3569 = vadd.f32 %v3492, %v3568
        %3570 = vmatmul.f32.gmra.mxu0 %v3238
        %v3571 = vpop.f32.mrf.mxu0
        %v3572 = vadd.f32 %v3492, %v3571
        %3573 = vmatmul.f32.gmra.mxu0 %v3247
        %v3574 = vpop.f32.mrf.mxu0
        %v3575 = vadd.f32 %v3492, %v3574
        %3576 = vmatmul.f32.gmra.mxu0 %v3256
        %v3577 = vpop.f32.mrf.mxu0
        %v3578 = vadd.f32 %v3492, %v3577
        %3579 = vmatmul.f32.gmra.mxu0 %v3265
        %v3580 = vpop.f32.mrf.mxu0
        %v3581 = vadd.f32 %v3492, %v3580
        %3582 = vmatmul.f32.gmra.mxu0 %v3274
        %v3583 = vpop.f32.mrf.mxu0
        %v3584 = vadd.f32 %v3492, %v3583
        %3585 = vmatmul.f32.gmra.mxu0 %v3283
        %v3586 = vpop.f32.mrf.mxu0
        %v3587 = vadd.f32 %v3492, %v3586
        %3588 = vmatmul.f32.gmra.mxu0 %v3292
        %v3589 = vpop.f32.mrf.mxu0
        %v3590 = vadd.f32 %v3492, %v3589
        %3591 = vmatmul.f32.gmra.mxu0 %v3301
        %v3592 = vpop.f32.mrf.mxu0
        %v3593 = vadd.f32 %v3492, %v3592
        %3594 = vmatmul.f32.gmra.mxu0 %v3310
        %v3595 = vpop.f32.mrf.mxu0
        %v3596 = vadd.f32 %v3492, %v3595
        %3597 = vmatmul.f32.gmra.mxu0 %v3319
        %v3598 = vpop.f32.mrf.mxu0
        %v3599 = vadd.f32 %v3492, %v3598
        %3600 = vmatmul.f32.gmra.mxu0 %v3328
        %v3601 = vpop.f32.mrf.mxu0
        %v3602 = vadd.f32 %v3492, %v3601
        %3603 = vmatmul.f32.gmra.mxu0 %v3337
        %v3604 = vpop.f32.mrf.mxu0
        %v3605 = vadd.f32 %v3492, %v3604
        %3606 = vdwg.mxu0
        %3607 = vmatpush.msra.mxu0 %v3377
        %3608 = vmatpush.msra.mxu0 %v3376
        %3609 = vmatpush.msra.mxu0 %v3375
        %3610 = vmatpush.msra.mxu0 %v3374
        %3611 = vmatpush.msra.mxu0 %v3373
        %3612 = vmatpush.msra.mxu0 %v3372
        %3613 = vmatpush.msra.mxu0 %v3371
        %3614 = vmatpush.msra.mxu0 %v3370
        %3615 = vmatpush.msra.mxu0 %v3369
        %3616 = vmatpush.msra.mxu0 %v3368
        %3617 = vmatpush.msra.mxu0 %v3367
        %3618 = vmatpush.msra.mxu0 %v3366
        %3619 = vmatpush.msra.mxu0 %v3365
        %3620 = vmatpush.msra.mxu0 %v3364
        %3621 = vmatpush.msra.mxu0 %v3363
        %3622 = vmatpush.msra.mxu0 %v3362
        %3623 = vmatmul.f32.gmra.mxu0 %v3059
        %v3624 = vpop.f32.mrf.mxu0
        %v3625 = vadd.f32 %v3512, %v3624
        %3626 = vmatmul.f32.gmra.mxu0 %v3068
        %v3627 = vpop.f32.mrf.mxu0
        %v3628 = vadd.f32 %v3515, %v3627
        %3629 = vmatmul.f32.gmra.mxu0 %v3077
        %v3630 = vpop.f32.mrf.mxu0
        %v3631 = vadd.f32 %v3518, %v3630
        %3632 = vmatmul.f32.gmra.mxu0 %v3086
        %v3633 = vpop.f32.mrf.mxu0
        %v3634 = vadd.f32 %v3521, %v3633
        %3635 = vmatmul.f32.gmra.mxu0 %v3095
        %v3636 = vpop.f32.mrf.mxu0
        %v3637 = vadd.f32 %v3524, %v3636
        %3638 = vmatmul.f32.gmra.mxu0 %v3104
        %v3639 = vpop.f32.mrf.mxu0
        %v3640 = vadd.f32 %v3527, %v3639
        %3641 = vmatmul.f32.gmra.mxu0 %v3113
        %v3642 = vpop.f32.mrf.mxu0
        %v3643 = vadd.f32 %v3530, %v3642
        %3644 = vmatmul.f32.gmra.mxu0 %v3122
        %v3645 = vpop.f32.mrf.mxu0
        %v3646 = vadd.f32 %v3533, %v3645
        %3647 = vmatmul.f32.gmra.mxu0 %v3131
        %v3648 = vpop.f32.mrf.mxu0
        %v3649 = vadd.f32 %v3536, %v3648
        %3650 = vmatmul.f32.gmra.mxu0 %v3140
        %v3651 = vpop.f32.mrf.mxu0
        %v3652 = vadd.f32 %v3539, %v3651
        %3653 = vmatmul.f32.gmra.mxu0 %v3149
        %v3654 = vpop.f32.mrf.mxu0
        %v3655 = vadd.f32 %v3542, %v3654
        %3656 = vmatmul.f32.gmra.mxu0 %v3158
        %v3657 = vpop.f32.mrf.mxu0
        %v3658 = vadd.f32 %v3545, %v3657
        %3659 = vmatmul.f32.gmra.mxu0 %v3167
        %v3660 = vpop.f32.mrf.mxu0
        %v3661 = vadd.f32 %v3548, %v3660
        %3662 = vmatmul.f32.gmra.mxu0 %v3176
        %v3663 = vpop.f32.mrf.mxu0
        %v3664 = vadd.f32 %v3551, %v3663
        %3665 = vmatmul.f32.gmra.mxu0 %v3185
        %v3666 = vpop.f32.mrf.mxu0
        %v3667 = vadd.f32 %v3554, %v3666
        %3668 = vmatmul.f32.gmra.mxu0 %v3194
        %v3669 = vpop.f32.mrf.mxu0
        %v3670 = vadd.f32 %v3557, %v3669
        %3671 = vmatmul.f32.gmra.mxu0 %v3203
        %v3672 = vpop.f32.mrf.mxu0
        %v3673 = vadd.f32 %v3560, %v3672
        %3674 = vmatmul.f32.gmra.mxu0 %v3212
        %v3675 = vpop.f32.mrf.mxu0
        %v3676 = vadd.f32 %v3563, %v3675
        %3677 = vmatmul.f32.gmra.mxu0 %v3221
        %v3678 = vpop.f32.mrf.mxu0
        %v3679 = vadd.f32 %v3566, %v3678
        %3680 = vmatmul.f32.gmra.mxu0 %v3230
        %v3681 = vpop.f32.mrf.mxu0
        %v3682 = vadd.f32 %v3569, %v3681
        %3683 = vmatmul.f32.gmra.mxu0 %v3239
        %v3684 = vpop.f32.mrf.mxu0
        %v3685 = vadd.f32 %v3572, %v3684
        %3686 = vmatmul.f32.gmra.mxu0 %v3248
        %v3687 = vpop.f32.mrf.mxu0
        %v3688 = vadd.f32 %v3575, %v3687
        %3689 = vmatmul.f32.gmra.mxu0 %v3257
        %v3690 = vpop.f32.mrf.mxu0
        %v3691 = vadd.f32 %v3578, %v3690
        %3692 = vmatmul.f32.gmra.mxu0 %v3266
        %v3693 = vpop.f32.mrf.mxu0
        %v3694 = vadd.f32 %v3581, %v3693
        %3695 = vmatmul.f32.gmra.mxu0 %v3275
        %v3696 = vpop.f32.mrf.mxu0
        %v3697 = vadd.f32 %v3584, %v3696
        %3698 = vmatmul.f32.gmra.mxu0 %v3284
        %v3699 = vpop.f32.mrf.mxu0
        %v3700 = vadd.f32 %v3587, %v3699
        %3701 = vmatmul.f32.gmra.mxu0 %v3293
        %v3702 = vpop.f32.mrf.mxu0
        %v3703 = vadd.f32 %v3590, %v3702
        %3704 = vmatmul.f32.gmra.mxu0 %v3302
        %v3705 = vpop.f32.mrf.mxu0
        %v3706 = vadd.f32 %v3593, %v3705
        %3707 = vmatmul.f32.gmra.mxu0 %v3311
        %v3708 = vpop.f32.mrf.mxu0
        %v3709 = vadd.f32 %v3596, %v3708
        %3710 = vmatmul.f32.gmra.mxu0 %v3320
        %v3711 = vpop.f32.mrf.mxu0
        %v3712 = vadd.f32 %v3599, %v3711
        %3713 = vmatmul.f32.gmra.mxu0 %v3329
        %v3714 = vpop.f32.mrf.mxu0
        %v3715 = vadd.f32 %v3602, %v3714
        %3716 = vmatmul.f32.gmra.mxu0 %v3338
        %v3717 = vpop.f32.mrf.mxu0
        %v3718 = vadd.f32 %v3605, %v3717
        %3719 = vdwg.mxu0
        %3720 = vmatpush.msra.mxu0 %v3393
        %3721 = vmatpush.msra.mxu0 %v3392
        %3722 = vmatpush.msra.mxu0 %v3391
        %3723 = vmatpush.msra.mxu0 %v3390
        %3724 = vmatpush.msra.mxu0 %v3389
        %3725 = vmatpush.msra.mxu0 %v3388
        %3726 = vmatpush.msra.mxu0 %v3387
        %3727 = vmatpush.msra.mxu0 %v3386
        %3728 = vmatpush.msra.mxu0 %v3385
        %3729 = vmatpush.msra.mxu0 %v3384
        %3730 = vmatpush.msra.mxu0 %v3383
        %3731 = vmatpush.msra.mxu0 %v3382
        %3732 = vmatpush.msra.mxu0 %v3381
        %3733 = vmatpush.msra.mxu0 %v3380
        %3734 = vmatpush.msra.mxu0 %v3379
        %3735 = vmatpush.msra.mxu0 %v3378
        %3736 = vmatmul.f32.gmra.mxu0 %v3060
        %v3737 = vpop.f32.mrf.mxu0
        %v3738 = vadd.f32 %v3625, %v3737
        %3739 = vmatmul.f32.gmra.mxu0 %v3069
        %v3740 = vpop.f32.mrf.mxu0
        %v3741 = vadd.f32 %v3628, %v3740
        %3742 = vmatmul.f32.gmra.mxu0 %v3078
        %v3743 = vpop.f32.mrf.mxu0
        %v3744 = vadd.f32 %v3631, %v3743
        %3745 = vmatmul.f32.gmra.mxu0 %v3087
        %v3746 = vpop.f32.mrf.mxu0
        %v3747 = vadd.f32 %v3634, %v3746
        %3748 = vmatmul.f32.gmra.mxu0 %v3096
        %v3749 = vpop.f32.mrf.mxu0
        %v3750 = vadd.f32 %v3637, %v3749
        %3751 = vmatmul.f32.gmra.mxu0 %v3105
        %v3752 = vpop.f32.mrf.mxu0
        %v3753 = vadd.f32 %v3640, %v3752
        %3754 = vmatmul.f32.gmra.mxu0 %v3114
        %v3755 = vpop.f32.mrf.mxu0
        %v3756 = vadd.f32 %v3643, %v3755
        %3757 = vmatmul.f32.gmra.mxu0 %v3123
        %v3758 = vpop.f32.mrf.mxu0
        %v3759 = vadd.f32 %v3646, %v3758
        %3760 = vmatmul.f32.gmra.mxu0 %v3132
        %v3761 = vpop.f32.mrf.mxu0
        %v3762 = vadd.f32 %v3649, %v3761
        %3763 = vmatmul.f32.gmra.mxu0 %v3141
        %v3764 = vpop.f32.mrf.mxu0
        %v3765 = vadd.f32 %v3652, %v3764
        %3766 = vmatmul.f32.gmra.mxu0 %v3150
        %v3767 = vpop.f32.mrf.mxu0
        %v3768 = vadd.f32 %v3655, %v3767
        %3769 = vmatmul.f32.gmra.mxu0 %v3159
        %v3770 = vpop.f32.mrf.mxu0
        %v3771 = vadd.f32 %v3658, %v3770
        %3772 = vmatmul.f32.gmra.mxu0 %v3168
        %v3773 = vpop.f32.mrf.mxu0
        %v3774 = vadd.f32 %v3661, %v3773
        %3775 = vmatmul.f32.gmra.mxu0 %v3177
        %v3776 = vpop.f32.mrf.mxu0
        %v3777 = vadd.f32 %v3664, %v3776
        %3778 = vmatmul.f32.gmra.mxu0 %v3186
        %v3779 = vpop.f32.mrf.mxu0
        %v3780 = vadd.f32 %v3667, %v3779
        %3781 = vmatmul.f32.gmra.mxu0 %v3195
        %v3782 = vpop.f32.mrf.mxu0
        %v3783 = vadd.f32 %v3670, %v3782
        %3784 = vmatmul.f32.gmra.mxu0 %v3204
        %v3785 = vpop.f32.mrf.mxu0
        %v3786 = vadd.f32 %v3673, %v3785
        %3787 = vmatmul.f32.gmra.mxu0 %v3213
        %v3788 = vpop.f32.mrf.mxu0
        %v3789 = vadd.f32 %v3676, %v3788
        %3790 = vmatmul.f32.gmra.mxu0 %v3222
        %v3791 = vpop.f32.mrf.mxu0
        %v3792 = vadd.f32 %v3679, %v3791
        %3793 = vmatmul.f32.gmra.mxu0 %v3231
        %v3794 = vpop.f32.mrf.mxu0
        %v3795 = vadd.f32 %v3682, %v3794
        %3796 = vmatmul.f32.gmra.mxu0 %v3240
        %v3797 = vpop.f32.mrf.mxu0
        %v3798 = vadd.f32 %v3685, %v3797
        %3799 = vmatmul.f32.gmra.mxu0 %v3249
        %v3800 = vpop.f32.mrf.mxu0
        %v3801 = vadd.f32 %v3688, %v3800
        %3802 = vmatmul.f32.gmra.mxu0 %v3258
        %v3803 = vpop.f32.mrf.mxu0
        %v3804 = vadd.f32 %v3691, %v3803
        %3805 = vmatmul.f32.gmra.mxu0 %v3267
        %v3806 = vpop.f32.mrf.mxu0
        %v3807 = vadd.f32 %v3694, %v3806
        %3808 = vmatmul.f32.gmra.mxu0 %v3276
        %v3809 = vpop.f32.mrf.mxu0
        %v3810 = vadd.f32 %v3697, %v3809
        %3811 = vmatmul.f32.gmra.mxu0 %v3285
        %v3812 = vpop.f32.mrf.mxu0
        %v3813 = vadd.f32 %v3700, %v3812
        %3814 = vmatmul.f32.gmra.mxu0 %v3294
        %v3815 = vpop.f32.mrf.mxu0
        %v3816 = vadd.f32 %v3703, %v3815
        %3817 = vmatmul.f32.gmra.mxu0 %v3303
        %v3818 = vpop.f32.mrf.mxu0
        %v3819 = vadd.f32 %v3706, %v3818
        %3820 = vmatmul.f32.gmra.mxu0 %v3312
        %v3821 = vpop.f32.mrf.mxu0
        %v3822 = vadd.f32 %v3709, %v3821
        %3823 = vmatmul.f32.gmra.mxu0 %v3321
        %v3824 = vpop.f32.mrf.mxu0
        %v3825 = vadd.f32 %v3712, %v3824
        %3826 = vmatmul.f32.gmra.mxu0 %v3330
        %v3827 = vpop.f32.mrf.mxu0
        %v3828 = vadd.f32 %v3715, %v3827
        %3829 = vmatmul.f32.gmra.mxu0 %v3339
        %v3830 = vpop.f32.mrf.mxu0
        %v3831 = vadd.f32 %v3718, %v3830
        %3832 = vdwg.mxu0
        %3833 = vmatpush.msra.mxu0 %v3409
        %3834 = vmatpush.msra.mxu0 %v3408
        %3835 = vmatpush.msra.mxu0 %v3407
        %3836 = vmatpush.msra.mxu0 %v3406
        %3837 = vmatpush.msra.mxu0 %v3405
        %3838 = vmatpush.msra.mxu0 %v3404
        %3839 = vmatpush.msra.mxu0 %v3403
        %3840 = vmatpush.msra.mxu0 %v3402
        %3841 = vmatpush.msra.mxu0 %v3401
        %3842 = vmatpush.msra.mxu0 %v3400
        %3843 = vmatpush.msra.mxu0 %v3399
        %3844 = vmatpush.msra.mxu0 %v3398
        %3845 = vmatpush.msra.mxu0 %v3397
        %3846 = vmatpush.msra.mxu0 %v3396
        %3847 = vmatpush.msra.mxu0 %v3395
        %3848 = vmatpush.msra.mxu0 %v3394
        %3849 = vmatmul.f32.gmra.mxu0 %v3061
        %v3850 = vpop.f32.mrf.mxu0
        %v3851 = vadd.f32 %v3738, %v3850
        %3852 = vmatmul.f32.gmra.mxu0 %v3070
        %v3853 = vpop.f32.mrf.mxu0
        %v3854 = vadd.f32 %v3741, %v3853
        %3855 = vmatmul.f32.gmra.mxu0 %v3079
        %v3856 = vpop.f32.mrf.mxu0
        %v3857 = vadd.f32 %v3744, %v3856
        %3858 = vmatmul.f32.gmra.mxu0 %v3088
        %v3859 = vpop.f32.mrf.mxu0
        %v3860 = vadd.f32 %v3747, %v3859
        %3861 = vmatmul.f32.gmra.mxu0 %v3097
        %v3862 = vpop.f32.mrf.mxu0
        %v3863 = vadd.f32 %v3750, %v3862
        %3864 = vmatmul.f32.gmra.mxu0 %v3106
        %v3865 = vpop.f32.mrf.mxu0
        %v3866 = vadd.f32 %v3753, %v3865
        %3867 = vmatmul.f32.gmra.mxu0 %v3115
        %v3868 = vpop.f32.mrf.mxu0
        %v3869 = vadd.f32 %v3756, %v3868
        %3870 = vmatmul.f32.gmra.mxu0 %v3124
        %v3871 = vpop.f32.mrf.mxu0
        %v3872 = vadd.f32 %v3759, %v3871
        %3873 = vmatmul.f32.gmra.mxu0 %v3133
        %v3874 = vpop.f32.mrf.mxu0
        %v3875 = vadd.f32 %v3762, %v3874
        %3876 = vmatmul.f32.gmra.mxu0 %v3142
        %v3877 = vpop.f32.mrf.mxu0
        %v3878 = vadd.f32 %v3765, %v3877
        %3879 = vmatmul.f32.gmra.mxu0 %v3151
        %v3880 = vpop.f32.mrf.mxu0
        %v3881 = vadd.f32 %v3768, %v3880
        %3882 = vmatmul.f32.gmra.mxu0 %v3160
        %v3883 = vpop.f32.mrf.mxu0
        %v3884 = vadd.f32 %v3771, %v3883
        %3885 = vmatmul.f32.gmra.mxu0 %v3169
        %v3886 = vpop.f32.mrf.mxu0
        %v3887 = vadd.f32 %v3774, %v3886
        %3888 = vmatmul.f32.gmra.mxu0 %v3178
        %v3889 = vpop.f32.mrf.mxu0
        %v3890 = vadd.f32 %v3777, %v3889
        %3891 = vmatmul.f32.gmra.mxu0 %v3187
        %v3892 = vpop.f32.mrf.mxu0
        %v3893 = vadd.f32 %v3780, %v3892
        %3894 = vmatmul.f32.gmra.mxu0 %v3196
        %v3895 = vpop.f32.mrf.mxu0
        %v3896 = vadd.f32 %v3783, %v3895
        %3897 = vmatmul.f32.gmra.mxu0 %v3205
        %v3898 = vpop.f32.mrf.mxu0
        %v3899 = vadd.f32 %v3786, %v3898
        %3900 = vmatmul.f32.gmra.mxu0 %v3214
        %v3901 = vpop.f32.mrf.mxu0
        %v3902 = vadd.f32 %v3789, %v3901
        %3903 = vmatmul.f32.gmra.mxu0 %v3223
        %v3904 = vpop.f32.mrf.mxu0
        %v3905 = vadd.f32 %v3792, %v3904
        %3906 = vmatmul.f32.gmra.mxu0 %v3232
        %v3907 = vpop.f32.mrf.mxu0
        %v3908 = vadd.f32 %v3795, %v3907
        %3909 = vmatmul.f32.gmra.mxu0 %v3241
        %v3910 = vpop.f32.mrf.mxu0
        %v3911 = vadd.f32 %v3798, %v3910
        %3912 = vmatmul.f32.gmra.mxu0 %v3250
        %v3913 = vpop.f32.mrf.mxu0
        %v3914 = vadd.f32 %v3801, %v3913
        %3915 = vmatmul.f32.gmra.mxu0 %v3259
        %v3916 = vpop.f32.mrf.mxu0
        %v3917 = vadd.f32 %v3804, %v3916
        %3918 = vmatmul.f32.gmra.mxu0 %v3268
        %v3919 = vpop.f32.mrf.mxu0
        %v3920 = vadd.f32 %v3807, %v3919
        %3921 = vmatmul.f32.gmra.mxu0 %v3277
        %v3922 = vpop.f32.mrf.mxu0
        %v3923 = vadd.f32 %v3810, %v3922
        %3924 = vmatmul.f32.gmra.mxu0 %v3286
        %v3925 = vpop.f32.mrf.mxu0
        %v3926 = vadd.f32 %v3813, %v3925
        %3927 = vmatmul.f32.gmra.mxu0 %v3295
        %v3928 = vpop.f32.mrf.mxu0
        %v3929 = vadd.f32 %v3816, %v3928
        %3930 = vmatmul.f32.gmra.mxu0 %v3304
        %v3931 = vpop.f32.mrf.mxu0
        %v3932 = vadd.f32 %v3819, %v3931
        %3933 = vmatmul.f32.gmra.mxu0 %v3313
        %v3934 = vpop.f32.mrf.mxu0
        %v3935 = vadd.f32 %v3822, %v3934
        %3936 = vmatmul.f32.gmra.mxu0 %v3322
        %v3937 = vpop.f32.mrf.mxu0
        %v3938 = vadd.f32 %v3825, %v3937
        %3939 = vmatmul.f32.gmra.mxu0 %v3331
        %v3940 = vpop.f32.mrf.mxu0
        %v3941 = vadd.f32 %v3828, %v3940
        %3942 = vmatmul.f32.gmra.mxu0 %v3340
        %v3943 = vpop.f32.mrf.mxu0
        %v3944 = vadd.f32 %v3831, %v3943
        %3945 = vdwg.mxu0
        %3946 = vmatpush.msra.mxu0 %v3425
        %3947 = vmatpush.msra.mxu0 %v3424
        %3948 = vmatpush.msra.mxu0 %v3423
        %3949 = vmatpush.msra.mxu0 %v3422
        %3950 = vmatpush.msra.mxu0 %v3421
        %3951 = vmatpush.msra.mxu0 %v3420
        %3952 = vmatpush.msra.mxu0 %v3419
        %3953 = vmatpush.msra.mxu0 %v3418
        %3954 = vmatpush.msra.mxu0 %v3417
        %3955 = vmatpush.msra.mxu0 %v3416
        %3956 = vmatpush.msra.mxu0 %v3415
        %3957 = vmatpush.msra.mxu0 %v3414
        %3958 = vmatpush.msra.mxu0 %v3413
        %3959 = vmatpush.msra.mxu0 %v3412
        %3960 = vmatpush.msra.mxu0 %v3411
        %3961 = vmatpush.msra.mxu0 %v3410
        %3962 = vmatmul.f32.gmra.mxu0 %v3062
        %v3963 = vpop.f32.mrf.mxu0
        %v3964 = vadd.f32 %v3851, %v3963
        %3965 = vmatmul.f32.gmra.mxu0 %v3071
        %v3966 = vpop.f32.mrf.mxu0
        %v3967 = vadd.f32 %v3854, %v3966
        %3968 = vmatmul.f32.gmra.mxu0 %v3080
        %v3969 = vpop.f32.mrf.mxu0
        %v3970 = vadd.f32 %v3857, %v3969
        %3971 = vmatmul.f32.gmra.mxu0 %v3089
        %v3972 = vpop.f32.mrf.mxu0
        %v3973 = vadd.f32 %v3860, %v3972
        %3974 = vmatmul.f32.gmra.mxu0 %v3098
        %v3975 = vpop.f32.mrf.mxu0
        %v3976 = vadd.f32 %v3863, %v3975
        %3977 = vmatmul.f32.gmra.mxu0 %v3107
        %v3978 = vpop.f32.mrf.mxu0
        %v3979 = vadd.f32 %v3866, %v3978
        %3980 = vmatmul.f32.gmra.mxu0 %v3116
        %v3981 = vpop.f32.mrf.mxu0
        %v3982 = vadd.f32 %v3869, %v3981
        %3983 = vmatmul.f32.gmra.mxu0 %v3125
        %v3984 = vpop.f32.mrf.mxu0
        %v3985 = vadd.f32 %v3872, %v3984
        %3986 = vmatmul.f32.gmra.mxu0 %v3134
        %v3987 = vpop.f32.mrf.mxu0
        %v3988 = vadd.f32 %v3875, %v3987
        %3989 = vmatmul.f32.gmra.mxu0 %v3143
        %v3990 = vpop.f32.mrf.mxu0
        %v3991 = vadd.f32 %v3878, %v3990
        %3992 = vmatmul.f32.gmra.mxu0 %v3152
        %v3993 = vpop.f32.mrf.mxu0
        %v3994 = vadd.f32 %v3881, %v3993
        %3995 = vmatmul.f32.gmra.mxu0 %v3161
        %v3996 = vpop.f32.mrf.mxu0
        %v3997 = vadd.f32 %v3884, %v3996
        %3998 = vmatmul.f32.gmra.mxu0 %v3170
        %v3999 = vpop.f32.mrf.mxu0
        %v4000 = vadd.f32 %v3887, %v3999
        %4001 = vmatmul.f32.gmra.mxu0 %v3179
        %v4002 = vpop.f32.mrf.mxu0
        %v4003 = vadd.f32 %v3890, %v4002
        %4004 = vmatmul.f32.gmra.mxu0 %v3188
        %v4005 = vpop.f32.mrf.mxu0
        %v4006 = vadd.f32 %v3893, %v4005
        %4007 = vmatmul.f32.gmra.mxu0 %v3197
        %v4008 = vpop.f32.mrf.mxu0
        %v4009 = vadd.f32 %v3896, %v4008
        %4010 = vmatmul.f32.gmra.mxu0 %v3206
        %v4011 = vpop.f32.mrf.mxu0
        %v4012 = vadd.f32 %v3899, %v4011
        %4013 = vmatmul.f32.gmra.mxu0 %v3215
        %v4014 = vpop.f32.mrf.mxu0
        %v4015 = vadd.f32 %v3902, %v4014
        %4016 = vmatmul.f32.gmra.mxu0 %v3224
        %v4017 = vpop.f32.mrf.mxu0
        %v4018 = vadd.f32 %v3905, %v4017
        %4019 = vmatmul.f32.gmra.mxu0 %v3233
        %v4020 = vpop.f32.mrf.mxu0
        %v4021 = vadd.f32 %v3908, %v4020
        %4022 = vmatmul.f32.gmra.mxu0 %v3242
        %v4023 = vpop.f32.mrf.mxu0
        %v4024 = vadd.f32 %v3911, %v4023
        %4025 = vmatmul.f32.gmra.mxu0 %v3251
        %v4026 = vpop.f32.mrf.mxu0
        %v4027 = vadd.f32 %v3914, %v4026
        %4028 = vmatmul.f32.gmra.mxu0 %v3260
        %v4029 = vpop.f32.mrf.mxu0
        %v4030 = vadd.f32 %v3917, %v4029
        %4031 = vmatmul.f32.gmra.mxu0 %v3269
        %v4032 = vpop.f32.mrf.mxu0
        %v4033 = vadd.f32 %v3920, %v4032
        %4034 = vmatmul.f32.gmra.mxu0 %v3278
        %v4035 = vpop.f32.mrf.mxu0
        %v4036 = vadd.f32 %v3923, %v4035
        %4037 = vmatmul.f32.gmra.mxu0 %v3287
        %v4038 = vpop.f32.mrf.mxu0
        %v4039 = vadd.f32 %v3926, %v4038
        %4040 = vmatmul.f32.gmra.mxu0 %v3296
        %v4041 = vpop.f32.mrf.mxu0
        %v4042 = vadd.f32 %v3929, %v4041
        %4043 = vmatmul.f32.gmra.mxu0 %v3305
        %v4044 = vpop.f32.mrf.mxu0
        %v4045 = vadd.f32 %v3932, %v4044
        %4046 = vmatmul.f32.gmra.mxu0 %v3314
        %v4047 = vpop.f32.mrf.mxu0
        %v4048 = vadd.f32 %v3935, %v4047
        %4049 = vmatmul.f32.gmra.mxu0 %v3323
        %v4050 = vpop.f32.mrf.mxu0
        %v4051 = vadd.f32 %v3938, %v4050
        %4052 = vmatmul.f32.gmra.mxu0 %v3332
        %v4053 = vpop.f32.mrf.mxu0
        %v4054 = vadd.f32 %v3941, %v4053
        %4055 = vmatmul.f32.gmra.mxu0 %v3341
        %v4056 = vpop.f32.mrf.mxu0
        %v4057 = vadd.f32 %v3944, %v4056
        %4058 = vdwg.mxu0
        %4059 = vmatpush.msra.mxu0 %v3441
        %4060 = vmatpush.msra.mxu0 %v3440
        %4061 = vmatpush.msra.mxu0 %v3439
        %4062 = vmatpush.msra.mxu0 %v3438
        %4063 = vmatpush.msra.mxu0 %v3437
        %4064 = vmatpush.msra.mxu0 %v3436
        %4065 = vmatpush.msra.mxu0 %v3435
        %4066 = vmatpush.msra.mxu0 %v3434
        %4067 = vmatpush.msra.mxu0 %v3433
        %4068 = vmatpush.msra.mxu0 %v3432
        %4069 = vmatpush.msra.mxu0 %v3431
        %4070 = vmatpush.msra.mxu0 %v3430
        %4071 = vmatpush.msra.mxu0 %v3429
        %4072 = vmatpush.msra.mxu0 %v3428
        %4073 = vmatpush.msra.mxu0 %v3427
        %4074 = vmatpush.msra.mxu0 %v3426
        %4075 = vmatmul.f32.gmra.mxu0 %v3063
        %v4076 = vpop.f32.mrf.mxu0
        %v4077 = vadd.f32 %v3964, %v4076
        %4078 = vmatmul.f32.gmra.mxu0 %v3072
        %v4079 = vpop.f32.mrf.mxu0
        %v4080 = vadd.f32 %v3967, %v4079
        %4081 = vmatmul.f32.gmra.mxu0 %v3081
        %v4082 = vpop.f32.mrf.mxu0
        %v4083 = vadd.f32 %v3970, %v4082
        %4084 = vmatmul.f32.gmra.mxu0 %v3090
        %v4085 = vpop.f32.mrf.mxu0
        %v4086 = vadd.f32 %v3973, %v4085
        %4087 = vmatmul.f32.gmra.mxu0 %v3099
        %v4088 = vpop.f32.mrf.mxu0
        %v4089 = vadd.f32 %v3976, %v4088
        %4090 = vmatmul.f32.gmra.mxu0 %v3108
        %v4091 = vpop.f32.mrf.mxu0
        %v4092 = vadd.f32 %v3979, %v4091
        %4093 = vmatmul.f32.gmra.mxu0 %v3117
        %v4094 = vpop.f32.mrf.mxu0
        %v4095 = vadd.f32 %v3982, %v4094
        %4096 = vmatmul.f32.gmra.mxu0 %v3126
        %v4097 = vpop.f32.mrf.mxu0
        %v4098 = vadd.f32 %v3985, %v4097
        %4099 = vmatmul.f32.gmra.mxu0 %v3135
        %v4100 = vpop.f32.mrf.mxu0
        %v4101 = vadd.f32 %v3988, %v4100
        %4102 = vmatmul.f32.gmra.mxu0 %v3144
        %v4103 = vpop.f32.mrf.mxu0
        %v4104 = vadd.f32 %v3991, %v4103
        %4105 = vmatmul.f32.gmra.mxu0 %v3153
        %v4106 = vpop.f32.mrf.mxu0
        %v4107 = vadd.f32 %v3994, %v4106
        %4108 = vmatmul.f32.gmra.mxu0 %v3162
        %v4109 = vpop.f32.mrf.mxu0
        %v4110 = vadd.f32 %v3997, %v4109
        %4111 = vmatmul.f32.gmra.mxu0 %v3171
        %v4112 = vpop.f32.mrf.mxu0
        %v4113 = vadd.f32 %v4000, %v4112
        %4114 = vmatmul.f32.gmra.mxu0 %v3180
        %v4115 = vpop.f32.mrf.mxu0
        %v4116 = vadd.f32 %v4003, %v4115
        %4117 = vmatmul.f32.gmra.mxu0 %v3189
        %v4118 = vpop.f32.mrf.mxu0
        %v4119 = vadd.f32 %v4006, %v4118
        %4120 = vmatmul.f32.gmra.mxu0 %v3198
        %v4121 = vpop.f32.mrf.mxu0
        %v4122 = vadd.f32 %v4009, %v4121
        %4123 = vmatmul.f32.gmra.mxu0 %v3207
        %v4124 = vpop.f32.mrf.mxu0
        %v4125 = vadd.f32 %v4012, %v4124
        %4126 = vmatmul.f32.gmra.mxu0 %v3216
        %v4127 = vpop.f32.mrf.mxu0
        %v4128 = vadd.f32 %v4015, %v4127
        %4129 = vmatmul.f32.gmra.mxu0 %v3225
        %v4130 = vpop.f32.mrf.mxu0
        %v4131 = vadd.f32 %v4018, %v4130
        %4132 = vmatmul.f32.gmra.mxu0 %v3234
        %v4133 = vpop.f32.mrf.mxu0
        %v4134 = vadd.f32 %v4021, %v4133
        %4135 = vmatmul.f32.gmra.mxu0 %v3243
        %v4136 = vpop.f32.mrf.mxu0
        %v4137 = vadd.f32 %v4024, %v4136
        %4138 = vmatmul.f32.gmra.mxu0 %v3252
        %v4139 = vpop.f32.mrf.mxu0
        %v4140 = vadd.f32 %v4027, %v4139
        %4141 = vmatmul.f32.gmra.mxu0 %v3261
        %v4142 = vpop.f32.mrf.mxu0
        %v4143 = vadd.f32 %v4030, %v4142
        %4144 = vmatmul.f32.gmra.mxu0 %v3270
        %v4145 = vpop.f32.mrf.mxu0
        %v4146 = vadd.f32 %v4033, %v4145
        %4147 = vmatmul.f32.gmra.mxu0 %v3279
        %v4148 = vpop.f32.mrf.mxu0
        %v4149 = vadd.f32 %v4036, %v4148
        %4150 = vmatmul.f32.gmra.mxu0 %v3288
        %v4151 = vpop.f32.mrf.mxu0
        %v4152 = vadd.f32 %v4039, %v4151
        %4153 = vmatmul.f32.gmra.mxu0 %v3297
        %v4154 = vpop.f32.mrf.mxu0
        %v4155 = vadd.f32 %v4042, %v4154
        %4156 = vmatmul.f32.gmra.mxu0 %v3306
        %v4157 = vpop.f32.mrf.mxu0
        %v4158 = vadd.f32 %v4045, %v4157
        %4159 = vmatmul.f32.gmra.mxu0 %v3315
        %v4160 = vpop.f32.mrf.mxu0
        %v4161 = vadd.f32 %v4048, %v4160
        %4162 = vmatmul.f32.gmra.mxu0 %v3324
        %v4163 = vpop.f32.mrf.mxu0
        %v4164 = vadd.f32 %v4051, %v4163
        %4165 = vmatmul.f32.gmra.mxu0 %v3333
        %v4166 = vpop.f32.mrf.mxu0
        %v4167 = vadd.f32 %v4054, %v4166
        %4168 = vmatmul.f32.gmra.mxu0 %v3342
        %v4169 = vpop.f32.mrf.mxu0
        %v4170 = vadd.f32 %v4057, %v4169
        %4171 = vdwg.mxu0
        %4172 = vmatpush.msra.mxu0 %v3457
        %4173 = vmatpush.msra.mxu0 %v3456
        %4174 = vmatpush.msra.mxu0 %v3455
        %4175 = vmatpush.msra.mxu0 %v3454
        %4176 = vmatpush.msra.mxu0 %v3453
        %4177 = vmatpush.msra.mxu0 %v3452
        %4178 = vmatpush.msra.mxu0 %v3451
        %4179 = vmatpush.msra.mxu0 %v3450
        %4180 = vmatpush.msra.mxu0 %v3449
        %4181 = vmatpush.msra.mxu0 %v3448
        %4182 = vmatpush.msra.mxu0 %v3447
        %4183 = vmatpush.msra.mxu0 %v3446
        %4184 = vmatpush.msra.mxu0 %v3445
        %4185 = vmatpush.msra.mxu0 %v3444
        %4186 = vmatpush.msra.mxu0 %v3443
        %4187 = vmatpush.msra.mxu0 %v3442
        %4188 = vmatmul.f32.gmra.mxu0 %v3064
        %v4189 = vpop.f32.mrf.mxu0
        %v4190 = vadd.f32 %v4077, %v4189
        %4191 = vmatmul.f32.gmra.mxu0 %v3073
        %v4192 = vpop.f32.mrf.mxu0
        %v4193 = vadd.f32 %v4080, %v4192
        %4194 = vmatmul.f32.gmra.mxu0 %v3082
        %v4195 = vpop.f32.mrf.mxu0
        %v4196 = vadd.f32 %v4083, %v4195
        %4197 = vmatmul.f32.gmra.mxu0 %v3091
        %v4198 = vpop.f32.mrf.mxu0
        %v4199 = vadd.f32 %v4086, %v4198
        %4200 = vmatmul.f32.gmra.mxu0 %v3100
        %v4201 = vpop.f32.mrf.mxu0
        %v4202 = vadd.f32 %v4089, %v4201
        %4203 = vmatmul.f32.gmra.mxu0 %v3109
        %v4204 = vpop.f32.mrf.mxu0
        %v4205 = vadd.f32 %v4092, %v4204
        %4206 = vmatmul.f32.gmra.mxu0 %v3118
        %v4207 = vpop.f32.mrf.mxu0
        %v4208 = vadd.f32 %v4095, %v4207
        %4209 = vmatmul.f32.gmra.mxu0 %v3127
        %v4210 = vpop.f32.mrf.mxu0
        %v4211 = vadd.f32 %v4098, %v4210
        %4212 = vmatmul.f32.gmra.mxu0 %v3136
        %v4213 = vpop.f32.mrf.mxu0
        %v4214 = vadd.f32 %v4101, %v4213
        %4215 = vmatmul.f32.gmra.mxu0 %v3145
        %v4216 = vpop.f32.mrf.mxu0
        %v4217 = vadd.f32 %v4104, %v4216
        %4218 = vmatmul.f32.gmra.mxu0 %v3154
        %v4219 = vpop.f32.mrf.mxu0
        %v4220 = vadd.f32 %v4107, %v4219
        %4221 = vmatmul.f32.gmra.mxu0 %v3163
        %v4222 = vpop.f32.mrf.mxu0
        %v4223 = vadd.f32 %v4110, %v4222
        %4224 = vmatmul.f32.gmra.mxu0 %v3172
        %v4225 = vpop.f32.mrf.mxu0
        %v4226 = vadd.f32 %v4113, %v4225
        %4227 = vmatmul.f32.gmra.mxu0 %v3181
        %v4228 = vpop.f32.mrf.mxu0
        %v4229 = vadd.f32 %v4116, %v4228
        %4230 = vmatmul.f32.gmra.mxu0 %v3190
        %v4231 = vpop.f32.mrf.mxu0
        %v4232 = vadd.f32 %v4119, %v4231
        %4233 = vmatmul.f32.gmra.mxu0 %v3199
        %v4234 = vpop.f32.mrf.mxu0
        %v4235 = vadd.f32 %v4122, %v4234
        %4236 = vmatmul.f32.gmra.mxu0 %v3208
        %v4237 = vpop.f32.mrf.mxu0
        %v4238 = vadd.f32 %v4125, %v4237
        %4239 = vmatmul.f32.gmra.mxu0 %v3217
        %v4240 = vpop.f32.mrf.mxu0
        %v4241 = vadd.f32 %v4128, %v4240
        %4242 = vmatmul.f32.gmra.mxu0 %v3226
        %v4243 = vpop.f32.mrf.mxu0
        %v4244 = vadd.f32 %v4131, %v4243
        %4245 = vmatmul.f32.gmra.mxu0 %v3235
        %v4246 = vpop.f32.mrf.mxu0
        %v4247 = vadd.f32 %v4134, %v4246
        %4248 = vmatmul.f32.gmra.mxu0 %v3244
        %v4249 = vpop.f32.mrf.mxu0
        %v4250 = vadd.f32 %v4137, %v4249
        %4251 = vmatmul.f32.gmra.mxu0 %v3253
        %v4252 = vpop.f32.mrf.mxu0
        %v4253 = vadd.f32 %v4140, %v4252
        %4254 = vmatmul.f32.gmra.mxu0 %v3262
        %v4255 = vpop.f32.mrf.mxu0
        %v4256 = vadd.f32 %v4143, %v4255
        %4257 = vmatmul.f32.gmra.mxu0 %v3271
        %v4258 = vpop.f32.mrf.mxu0
        %v4259 = vadd.f32 %v4146, %v4258
        %4260 = vmatmul.f32.gmra.mxu0 %v3280
        %v4261 = vpop.f32.mrf.mxu0
        %v4262 = vadd.f32 %v4149, %v4261
        %4263 = vmatmul.f32.gmra.mxu0 %v3289
        %v4264 = vpop.f32.mrf.mxu0
        %v4265 = vadd.f32 %v4152, %v4264
        %4266 = vmatmul.f32.gmra.mxu0 %v3298
        %v4267 = vpop.f32.mrf.mxu0
        %v4268 = vadd.f32 %v4155, %v4267
        %4269 = vmatmul.f32.gmra.mxu0 %v3307
        %v4270 = vpop.f32.mrf.mxu0
        %v4271 = vadd.f32 %v4158, %v4270
        %4272 = vmatmul.f32.gmra.mxu0 %v3316
        %v4273 = vpop.f32.mrf.mxu0
        %v4274 = vadd.f32 %v4161, %v4273
        %4275 = vmatmul.f32.gmra.mxu0 %v3325
        %v4276 = vpop.f32.mrf.mxu0
        %v4277 = vadd.f32 %v4164, %v4276
        %4278 = vmatmul.f32.gmra.mxu0 %v3334
        %v4279 = vpop.f32.mrf.mxu0
        %v4280 = vadd.f32 %v4167, %v4279
        %4281 = vmatmul.f32.gmra.mxu0 %v3343
        %v4282 = vpop.f32.mrf.mxu0
        %v4283 = vadd.f32 %v4170, %v4282
        %4284 = vdwg.mxu0
        %4285 = vmatpush.msra.mxu0 %v3473
        %4286 = vmatpush.msra.mxu0 %v3472
        %4287 = vmatpush.msra.mxu0 %v3471
        %4288 = vmatpush.msra.mxu0 %v3470
        %4289 = vmatpush.msra.mxu0 %v3469
        %4290 = vmatpush.msra.mxu0 %v3468
        %4291 = vmatpush.msra.mxu0 %v3467
        %4292 = vmatpush.msra.mxu0 %v3466
        %4293 = vmatpush.msra.mxu0 %v3465
        %4294 = vmatpush.msra.mxu0 %v3464
        %4295 = vmatpush.msra.mxu0 %v3463
        %4296 = vmatpush.msra.mxu0 %v3462
        %4297 = vmatpush.msra.mxu0 %v3461
        %4298 = vmatpush.msra.mxu0 %v3460
        %4299 = vmatpush.msra.mxu0 %v3459
        %4300 = vmatpush.msra.mxu0 %v3458
        %4301 = vmatmul.f32.gmra.mxu0 %v3065
        %v4302 = vpop.f32.mrf.mxu0
        %v4303 = vadd.f32 %v4190, %v4302
        %4304 = vmatmul.f32.gmra.mxu0 %v3074
        %v4305 = vpop.f32.mrf.mxu0
        %v4306 = vadd.f32 %v4193, %v4305
        %4307 = vmatmul.f32.gmra.mxu0 %v3083
        %v4308 = vpop.f32.mrf.mxu0
        %v4309 = vadd.f32 %v4196, %v4308
        %4310 = vmatmul.f32.gmra.mxu0 %v3092
        %v4311 = vpop.f32.mrf.mxu0
        %v4312 = vadd.f32 %v4199, %v4311
        %4313 = vmatmul.f32.gmra.mxu0 %v3101
        %v4314 = vpop.f32.mrf.mxu0
        %v4315 = vadd.f32 %v4202, %v4314
        %4316 = vmatmul.f32.gmra.mxu0 %v3110
        %v4317 = vpop.f32.mrf.mxu0
        %v4318 = vadd.f32 %v4205, %v4317
        %4319 = vmatmul.f32.gmra.mxu0 %v3119
        %v4320 = vpop.f32.mrf.mxu0
        %v4321 = vadd.f32 %v4208, %v4320
        %4322 = vmatmul.f32.gmra.mxu0 %v3128
        %v4323 = vpop.f32.mrf.mxu0
        %v4324 = vadd.f32 %v4211, %v4323
        %4325 = vmatmul.f32.gmra.mxu0 %v3137
        %v4326 = vpop.f32.mrf.mxu0
        %v4327 = vadd.f32 %v4214, %v4326
        %4328 = vmatmul.f32.gmra.mxu0 %v3146
        %v4329 = vpop.f32.mrf.mxu0
        %v4330 = vadd.f32 %v4217, %v4329
        %4331 = vmatmul.f32.gmra.mxu0 %v3155
        %v4332 = vpop.f32.mrf.mxu0
        %v4333 = vadd.f32 %v4220, %v4332
        %4334 = vmatmul.f32.gmra.mxu0 %v3164
        %v4335 = vpop.f32.mrf.mxu0
        %v4336 = vadd.f32 %v4223, %v4335
        %4337 = vmatmul.f32.gmra.mxu0 %v3173
        %v4338 = vpop.f32.mrf.mxu0
        %v4339 = vadd.f32 %v4226, %v4338
        %4340 = vmatmul.f32.gmra.mxu0 %v3182
        %v4341 = vpop.f32.mrf.mxu0
        %v4342 = vadd.f32 %v4229, %v4341
        %4343 = vmatmul.f32.gmra.mxu0 %v3191
        %v4344 = vpop.f32.mrf.mxu0
        %v4345 = vadd.f32 %v4232, %v4344
        %4346 = vmatmul.f32.gmra.mxu0 %v3200
        %v4347 = vpop.f32.mrf.mxu0
        %v4348 = vadd.f32 %v4235, %v4347
        %4349 = vmatmul.f32.gmra.mxu0 %v3209
        %v4350 = vpop.f32.mrf.mxu0
        %v4351 = vadd.f32 %v4238, %v4350
        %4352 = vmatmul.f32.gmra.mxu0 %v3218
        %v4353 = vpop.f32.mrf.mxu0
        %v4354 = vadd.f32 %v4241, %v4353
        %4355 = vmatmul.f32.gmra.mxu0 %v3227
        %v4356 = vpop.f32.mrf.mxu0
        %v4357 = vadd.f32 %v4244, %v4356
        %4358 = vmatmul.f32.gmra.mxu0 %v3236
        %v4359 = vpop.f32.mrf.mxu0
        %v4360 = vadd.f32 %v4247, %v4359
        %4361 = vmatmul.f32.gmra.mxu0 %v3245
        %v4362 = vpop.f32.mrf.mxu0
        %v4363 = vadd.f32 %v4250, %v4362
        %4364 = vmatmul.f32.gmra.mxu0 %v3254
        %v4365 = vpop.f32.mrf.mxu0
        %v4366 = vadd.f32 %v4253, %v4365
        %4367 = vmatmul.f32.gmra.mxu0 %v3263
        %v4368 = vpop.f32.mrf.mxu0
        %v4369 = vadd.f32 %v4256, %v4368
        %4370 = vmatmul.f32.gmra.mxu0 %v3272
        %v4371 = vpop.f32.mrf.mxu0
        %v4372 = vadd.f32 %v4259, %v4371
        %4373 = vmatmul.f32.gmra.mxu0 %v3281
        %v4374 = vpop.f32.mrf.mxu0
        %v4375 = vadd.f32 %v4262, %v4374
        %4376 = vmatmul.f32.gmra.mxu0 %v3290
        %v4377 = vpop.f32.mrf.mxu0
        %v4378 = vadd.f32 %v4265, %v4377
        %4379 = vmatmul.f32.gmra.mxu0 %v3299
        %v4380 = vpop.f32.mrf.mxu0
        %v4381 = vadd.f32 %v4268, %v4380
        %4382 = vmatmul.f32.gmra.mxu0 %v3308
        %v4383 = vpop.f32.mrf.mxu0
        %v4384 = vadd.f32 %v4271, %v4383
        %4385 = vmatmul.f32.gmra.mxu0 %v3317
        %v4386 = vpop.f32.mrf.mxu0
        %v4387 = vadd.f32 %v4274, %v4386
        %4388 = vmatmul.f32.gmra.mxu0 %v3326
        %v4389 = vpop.f32.mrf.mxu0
        %v4390 = vadd.f32 %v4277, %v4389
        %4391 = vmatmul.f32.gmra.mxu0 %v3335
        %v4392 = vpop.f32.mrf.mxu0
        %v4393 = vadd.f32 %v4280, %v4392
        %4394 = vmatmul.f32.gmra.mxu0 %v3344
        %v4395 = vpop.f32.mrf.mxu0
        %v4396 = vadd.f32 %v4283, %v4395
        %4397 = vdwg.mxu0
        %4398 = vmatpush.msra.mxu0 %v3489
        %4399 = vmatpush.msra.mxu0 %v3488
        %4400 = vmatpush.msra.mxu0 %v3487
        %4401 = vmatpush.msra.mxu0 %v3486
        %4402 = vmatpush.msra.mxu0 %v3485
        %4403 = vmatpush.msra.mxu0 %v3484
        %4404 = vmatpush.msra.mxu0 %v3483
        %4405 = vmatpush.msra.mxu0 %v3482
        %4406 = vmatpush.msra.mxu0 %v3481
        %4407 = vmatpush.msra.mxu0 %v3480
        %4408 = vmatpush.msra.mxu0 %v3479
        %4409 = vmatpush.msra.mxu0 %v3478
        %4410 = vmatpush.msra.mxu0 %v3477
        %4411 = vmatpush.msra.mxu0 %v3476
        %4412 = vmatpush.msra.mxu0 %v3475
        %4413 = vmatpush.msra.mxu0 %v3474
        %4414 = vmatmul.f32.gmra.mxu0 %v3066
        %v4415 = vpop.f32.mrf.mxu0
        %v4416 = vadd.f32 %v4303, %v4415
        %4417 = vmatmul.f32.gmra.mxu0 %v3075
        %v4418 = vpop.f32.mrf.mxu0
        %v4419 = vadd.f32 %v4306, %v4418
        %4420 = vmatmul.f32.gmra.mxu0 %v3084
        %v4421 = vpop.f32.mrf.mxu0
        %v4422 = vadd.f32 %v4309, %v4421
        %4423 = vmatmul.f32.gmra.mxu0 %v3093
        %v4424 = vpop.f32.mrf.mxu0
        %v4425 = vadd.f32 %v4312, %v4424
        %4426 = vmatmul.f32.gmra.mxu0 %v3102
        %v4427 = vpop.f32.mrf.mxu0
        %v4428 = vadd.f32 %v4315, %v4427
        %4429 = vmatmul.f32.gmra.mxu0 %v3111
        %v4430 = vpop.f32.mrf.mxu0
        %v4431 = vadd.f32 %v4318, %v4430
        %4432 = vmatmul.f32.gmra.mxu0 %v3120
        %v4433 = vpop.f32.mrf.mxu0
        %v4434 = vadd.f32 %v4321, %v4433
        %4435 = vmatmul.f32.gmra.mxu0 %v3129
        %v4436 = vpop.f32.mrf.mxu0
        %v4437 = vadd.f32 %v4324, %v4436
        %4438 = vmatmul.f32.gmra.mxu0 %v3138
        %v4439 = vpop.f32.mrf.mxu0
        %v4440 = vadd.f32 %v4327, %v4439
        %4441 = vmatmul.f32.gmra.mxu0 %v3147
        %v4442 = vpop.f32.mrf.mxu0
        %v4443 = vadd.f32 %v4330, %v4442
        %4444 = vmatmul.f32.gmra.mxu0 %v3156
        %v4445 = vpop.f32.mrf.mxu0
        %v4446 = vadd.f32 %v4333, %v4445
        %4447 = vmatmul.f32.gmra.mxu0 %v3165
        %v4448 = vpop.f32.mrf.mxu0
        %v4449 = vadd.f32 %v4336, %v4448
        %4450 = vmatmul.f32.gmra.mxu0 %v3174
        %v4451 = vpop.f32.mrf.mxu0
        %v4452 = vadd.f32 %v4339, %v4451
        %4453 = vmatmul.f32.gmra.mxu0 %v3183
        %v4454 = vpop.f32.mrf.mxu0
        %v4455 = vadd.f32 %v4342, %v4454
        %4456 = vmatmul.f32.gmra.mxu0 %v3192
        %v4457 = vpop.f32.mrf.mxu0
        %v4458 = vadd.f32 %v4345, %v4457
        %4459 = vmatmul.f32.gmra.mxu0 %v3201
        %v4460 = vpop.f32.mrf.mxu0
        %v4461 = vadd.f32 %v4348, %v4460
        %4462 = vmatmul.f32.gmra.mxu0 %v3210
        %v4463 = vpop.f32.mrf.mxu0
        %v4464 = vadd.f32 %v4351, %v4463
        %4465 = vmatmul.f32.gmra.mxu0 %v3219
        %v4466 = vpop.f32.mrf.mxu0
        %v4467 = vadd.f32 %v4354, %v4466
        %4468 = vmatmul.f32.gmra.mxu0 %v3228
        %v4469 = vpop.f32.mrf.mxu0
        %v4470 = vadd.f32 %v4357, %v4469
        %4471 = vmatmul.f32.gmra.mxu0 %v3237
        %v4472 = vpop.f32.mrf.mxu0
        %v4473 = vadd.f32 %v4360, %v4472
        %4474 = vmatmul.f32.gmra.mxu0 %v3246
        %v4475 = vpop.f32.mrf.mxu0
        %v4476 = vadd.f32 %v4363, %v4475
        %4477 = vmatmul.f32.gmra.mxu0 %v3255
        %v4478 = vpop.f32.mrf.mxu0
        %v4479 = vadd.f32 %v4366, %v4478
        %4480 = vmatmul.f32.gmra.mxu0 %v3264
        %v4481 = vpop.f32.mrf.mxu0
        %v4482 = vadd.f32 %v4369, %v4481
        %4483 = vmatmul.f32.gmra.mxu0 %v3273
        %v4484 = vpop.f32.mrf.mxu0
        %v4485 = vadd.f32 %v4372, %v4484
        %4486 = vmatmul.f32.gmra.mxu0 %v3282
        %v4487 = vpop.f32.mrf.mxu0
        %v4488 = vadd.f32 %v4375, %v4487
        %4489 = vmatmul.f32.gmra.mxu0 %v3291
        %v4490 = vpop.f32.mrf.mxu0
        %v4491 = vadd.f32 %v4378, %v4490
        %4492 = vmatmul.f32.gmra.mxu0 %v3300
        %v4493 = vpop.f32.mrf.mxu0
        %v4494 = vadd.f32 %v4381, %v4493
        %4495 = vmatmul.f32.gmra.mxu0 %v3309
        %v4496 = vpop.f32.mrf.mxu0
        %v4497 = vadd.f32 %v4384, %v4496
        %4498 = vmatmul.f32.gmra.mxu0 %v3318
        %v4499 = vpop.f32.mrf.mxu0
        %v4500 = vadd.f32 %v4387, %v4499
        %4501 = vmatmul.f32.gmra.mxu0 %v3327
        %v4502 = vpop.f32.mrf.mxu0
        %v4503 = vadd.f32 %v4390, %v4502
        %4504 = vmatmul.f32.gmra.mxu0 %v3336
        %v4505 = vpop.f32.mrf.mxu0
        %v4506 = vadd.f32 %v4393, %v4505
        %4507 = vmatmul.f32.gmra.mxu0 %v3345
        %v4508 = vpop.f32.mrf.mxu0
        %v4509 = vadd.f32 %v4396, %v4508
        %4510 = vdwg.mxu0
        %v4511 = vadd.f32 %v323, %v4416
        %v4512 = vadd.f32 %v324, %v4419
        %v4513 = vadd.f32 %v325, %v4422
        %v4514 = vadd.f32 %v326, %v4425
        %v4515 = vadd.f32 %v327, %v4428
        %v4516 = vadd.f32 %v328, %v4431
        %v4517 = vadd.f32 %v329, %v4434
        %v4518 = vadd.f32 %v330, %v4437
        %v4519 = vadd.f32 %v331, %v4440
        %v4520 = vadd.f32 %v332, %v4443
        %v4521 = vadd.f32 %v333, %v4446
        %v4522 = vadd.f32 %v334, %v4449
        %v4523 = vadd.f32 %v335, %v4452
        %v4524 = vadd.f32 %v336, %v4455
        %v4525 = vadd.f32 %v337, %v4458
        %v4526 = vadd.f32 %v338, %v4461
        %v4527 = vadd.f32 %v339, %v4464
        %v4528 = vadd.f32 %v340, %v4467
        %v4529 = vadd.f32 %v341, %v4470
        %v4530 = vadd.f32 %v342, %v4473
        %v4531 = vadd.f32 %v343, %v4476
        %v4532 = vadd.f32 %v344, %v4479
        %v4533 = vadd.f32 %v345, %v4482
        %v4534 = vadd.f32 %v346, %v4485
        %v4535 = vadd.f32 %v347, %v4488
        %v4536 = vadd.f32 %v348, %v4491
        %v4537 = vadd.f32 %v349, %v4494
        %v4538 = vadd.f32 %v350, %v4497
        %v4539 = vadd.f32 %v351, %v4500
        %v4540 = vadd.f32 %v352, %v4503
        %v4541 = vadd.f32 %v353, %v4506
        %v4542 = vadd.f32 %v354, %v4509
        %4543 = vst [vmem:[%s277] sm:$0xff] %v4511
        %4544 = vst [vmem:[%s277 + $0x8] sm:$0xff] %v4512
        %4545 = vst [vmem:[%s277 + $0x10] sm:$0xff] %v4513
        %4546 = vst [vmem:[%s277 + $0x18] sm:$0xff] %v4514
        %4547 = vst [vmem:[%s277 + $0x20] sm:$0xff] %v4515
        %4548 = vst [vmem:[%s277 + $0x28] sm:$0xff] %v4516
        %4549 = vst [vmem:[%s277 + $0x30] sm:$0xff] %v4517
        %4550 = vst [vmem:[%s277 + $0x38] sm:$0xff] %v4518
        %4551 = vst [vmem:[%s277 + $0x40] sm:$0xff] %v4519
        %4552 = vst [vmem:[%s277 + $0x48] sm:$0xff] %v4520
        %4553 = vst [vmem:[%s277 + $0x50] sm:$0xff] %v4521
        %4554 = vst [vmem:[%s277 + $0x58] sm:$0xff] %v4522
        %4555 = vst [vmem:[%s277 + $0x60] sm:$0xff] %v4523
        %4556 = vst [vmem:[%s277 + $0x68] sm:$0xff] %v4524
        %4557 = vst [vmem:[%s277 + $0x70] sm:$0xff] %v4525
        %4558 = vst [vmem:[%s277 + $0x78] sm:$0xff] %v4526
        %4559 = vst [vmem:[%s277 + $0x80] sm:$0xff] %v4527
        %4560 = vst [vmem:[%s277 + $0x88] sm:$0xff] %v4528
        %4561 = vst [vmem:[%s277 + $0x90] sm:$0xff] %v4529
        %4562 = vst [vmem:[%s277 + $0x98] sm:$0xff] %v4530
        %4563 = vst [vmem:[%s277 + $0xa0] sm:$0xff] %v4531
        %4564 = vst [vmem:[%s277 + $0xa8] sm:$0xff] %v4532
        %4565 = vst [vmem:[%s277 + $0xb0] sm:$0xff] %v4533
        %4566 = vst [vmem:[%s277 + $0xb8] sm:$0xff] %v4534
        %4567 = vst [vmem:[%s277 + $0xc0] sm:$0xff] %v4535
        %4568 = vst [vmem:[%s277 + $0xc8] sm:$0xff] %v4536
        %4569 = vst [vmem:[%s277 + $0xd0] sm:$0xff] %v4537
        %4570 = vst [vmem:[%s277 + $0xd8] sm:$0xff] %v4538
        %4571 = vst [vmem:[%s277 + $0xe0] sm:$0xff] %v4539
        %4572 = vst [vmem:[%s277 + $0xe8] sm:$0xff] %v4540
        %4573 = vst [vmem:[%s277 + $0xf0] sm:$0xff] %v4541
        %4574 = vst [vmem:[%s277 + $0xf8] sm:$0xff] %v4542
        %s4575 = sand.u32 %s141, 1
        %s4576 = scalar_lea.sflag [#allocation6], %s4575
        %s4577 = sand.u32 %s141, 1
        %s4578 = smul.addr %s4577, 256
        %s4579 = scalar_lea.vmem [#allocation10], %s4578
        // Predicated region
        $region53: #{tpu_custom_call.1} parent=39 // pred_check
          %p4580 = pneg %p151
        $region54: #{tpu_custom_call.1} parent=39 // pred_check_branch
          %4582 = sbr.rel (%p4580) target = $region56
        $region55: #{tpu_custom_call.1} parent=39 // pred_region
          %4584 = vsyncadd %s4576, 0
          %s4585 = smul.addr %s23, 32
          %s4586 = smul.addr %s4585, 8
          %s4587 = scalar_lea.hbm %s5, %s4586
          %s4588 = sshll.u32 %s4579, 4
          %s4589 = int_to_ptr.vmem [resolvable:$true] %s4588
          %s4590 = sshll.u32 %s4587, 4
          %s4591 = int_to_ptr.hbm [resolvable:$true] %s4590
          %4596 = dma.vmem_to_hbm [thread:$0]  %s4589, 4096, %s4591, %s4576, 128, 128, 8
        $region56: #{tpu_custom_call.1} parent=39 // pred_fallthru
          _
      $region40: #{tpu_custom_call.1} parent=5 // pred_fallthru
        _
      %p4597 = scmp.le.s32.totalorder 2, %s18
      // Predicated region
      $region57: #{tpu_custom_call.1} parent=5 // pred_check
        %p4598 = pneg %p4597
      $region58: #{tpu_custom_call.1} parent=5 // pred_check_branch
        %4600 = sbr.rel (%p4598) target = $region60
      $region59: #{tpu_custom_call.1} parent=5 // pred_region
        %s4601 = ssub.s32 %s18, 2
        // Predicated region
        $region61: #{tpu_custom_call.1} parent=59 // pred_check
          %p4602 = pneg %p157
        $region62: #{tpu_custom_call.1} parent=59 // pred_check_branch
          %4604 = sbr.rel (%p4602) target = $region64
        $region63: #{tpu_custom_call.1} parent=59 // pred_region
          %s4605 = sand.u32 %s142, 1
          %s4606 = scalar_lea.sflag [#allocation6], %s4605
          %s4607 = sand.u32 %s142, 1
          %s4608 = smul.addr %s4607, 256
          %s4609 = scalar_lea.vmem [#allocation10], %s4608
          %4611 = dma.done %s4606, 4096
        $region64: #{tpu_custom_call.1} parent=59 // pred_fallthru
          _
      $region60: #{tpu_custom_call.1} parent=5 // pred_fallthru
        _
    $region6: #{tpu_custom_call.1} parent=1 // loop_footer
      %s22 = sadd.s32 1, %s18
    $region7: #{tpu_custom_call.1} parent=1 // loop_footer_branch
      %17 = sbr.rel target = $region3
    $region8: #{tpu_custom_call.1} parent=1 // loop_exit
      _
    %4612 = vsyncpa [#allocation5], 1
    %s4613 = scalar_lea.sflag [#allocation5], 1
    %4614 = vsyncpa %s4613, 1
    %4615 = vsyncpa [#allocation8], 1
    %4616 = vsyncpa [#allocation6], 1
    %s4617 = scalar_lea.sflag [#allocation6], 1
    %4618 = vsyncpa %s4617, 1

</llo_original>
